<compile_context>
chip_gen: v7x
topology: tpu7x:2x2x1
jax: 0.10.0
libtpu: 0.0.40
codegen_flags: <defaults>
</compile_context>

<pallas_src>
import math

import jax
import jax.numpy as jnp
from jax.experimental import pallas as pl
from jax.experimental.pallas import tpu as pltpu

# ---------------- small synthetic config (mirrors rwkv_config_1) ----------------
N_EMBD = 128          # n_embd
N_LAYER = 2           # n_layer
VOCAB = 256           # vocab_size
MAX_TIMESTEP = 64     # max_timestep
BLOCK_SIZE = 64       # block_size (>= 3 * step_size)
HIDDEN = 4 * N_EMBD   # ChannelMix hidden
LN_EPS = 1e-5

# indices into the packed per-layer vector-parameter slab (L, NUM_VEC, C)
_LN1_W, _LN1_B, _LN2_W, _LN2_B = 0, 1, 2, 3
_W_DEC, _T_FIRST = 4, 5        # _W_DEC already holds -exp(time_decay)
_TM_K, _TM_V, _TM_R = 6, 7, 8
_CM_K, _CM_R = 9, 10
NUM_VEC = 11


# ---------------- fused kernel (all layers + final norm + lm_head) ----------------
def _build_fused_kernel(B, T, K, C, H, V):
    M = T * B  # rows, time-major: row = t*B + b   (B is already padded to 8k)

    def layernorm(h, w, b):
        mu = jnp.mean(h, axis=-1, keepdims=True)
        var = jnp.mean(jnp.square(h - mu), axis=-1, keepdims=True)
        return (h - mu) * jax.lax.rsqrt(var + LN_EPS) * w + b

    def mm(a, w):
        # weights are stored (in, out) bf16 -> feed the MXU directly, f32 accumulate
        return jnp.dot(a.astype(jnp.bfloat16), w, preferred_element_type=jnp.float32)

    def kernel(x_hbm, vec_ref,
               wk_ref, wv_ref, wr_ref, wo_ref,
               cwk_ref, cwr_ref, cwv_ref,
               nw_ref, nb_ref, hw_hbm,
               out_ref,
               x_s, num_s, den_s, hw_s):
        l = pl.program_id(0)

        # bring the activations into the resident VMEM scratch once (x otherwise
        # stays in HBM; no layer-invariant VMEM input held for the whole grid)
        @pl.when(l == 0)
        def _():
            pltpu.sync_copy(x_hbm, x_s)

        vp = vec_ref[0]                                   # (NUM_VEC, C)
        ln1_w, ln1_b = vp[_LN1_W:_LN1_W + 1], vp[_LN1_B:_LN1_B + 1]
        ln2_w, ln2_b = vp[_LN2_W:_LN2_W + 1], vp[_LN2_B:_LN2_B + 1]
        w_dec = vp[_W_DEC:_W_DEC + 1]                     # precomputed -exp(time_decay)
        u = vp[_T_FIRST:_T_FIRST + 1]
        tm_k, tm_v, tm_r = vp[_TM_K:_TM_K + 1], vp[_TM_V:_TM_V + 1], vp[_TM_R:_TM_R + 1]
        cm_k, cm_r = vp[_CM_K:_CM_K + 1], vp[_CM_R:_CM_R + 1]

        # time-shift row mask: built once per layer, reused by TimeMix + ChannelMix
        first_rows = jax.lax.broadcasted_iota(jnp.int32, (M, C), 0) < B

        def time_shift(h):
            # ZeroPad2d((0,0,1,-1)) per batch: row t*B+b <- row (t-1)*B+b ; t==0 -> 0
            return jnp.where(first_rows, 0.0, pltpu.roll(h, shift=B, axis=0))

        # ---------------- TimeMix ----------------
        h = layernorm(x_s[...], ln1_w, ln1_b)
        hh = time_shift(h)
        d = h - hh                                        # xk = hh + mix*(h - hh)
        k = mm(hh + tm_k * d, wk_ref[0])
        v = mm(hh + tm_v * d, wv_ref[0])
        sr = jax.nn.sigmoid(mm(hh + tm_r * d, wr_ref[0]))

        # WKV recurrence (stabilized wkv_cuda form), vectorized over the padded
        # batch (one full (8,128) tile per step).  Per-step numerator/denominator
        # are flushed to VMEM scratch with aligned tile stores so only the carried
        # state (p, q, o) stays live in vregs; the divide is done in one bulk pass.
        p = jnp.zeros((B, C), jnp.float32)
        q = jnp.zeros((B, C), jnp.float32)
        o = jnp.full((B, C), -1e38, jnp.float32)
        # TODO(synk): for realistic ctx_len, chunk this into
        #             lax.fori_loop(..., unroll=8..16) blocks carrying (p, q, o).
        for t in range(T):                                # T is small & static here
            kt = k[t * B:(t + 1) * B]                     # aligned (8,128) tile
            vt = v[t * B:(t + 1) * B]
            a, b = o, u + kt
            ge = a >= b
            e = jnp.exp(-jnp.abs(a - b))                  # exp(min - max) <= 1
            A = jnp.where(ge, 1.0, e)
            Bc = jnp.where(ge, e, 1.0)
            num_s[pl.ds(t * B, B), :] = A * p + Bc * vt
            den_s[pl.ds(t * B, B), :] = A * q + Bc        # > 0 by construction
            a2, b2 = w_dec + o, kt
            ge2 = a2 >= b2
            e2 = jnp.exp(-jnp.abs(a2 - b2))
            A2 = jnp.where(ge2, 1.0, e2)
            B2 = jnp.where(ge2, e2, 1.0)
            p = A2 * p + B2 * vt
            q = A2 * q + B2
            o = jnp.maximum(a2, b2)

        den = den_s[...]
        inv = pl.reciprocal(den, approx=True)             # one bulk EUP pass
        inv = inv * (2.0 - den * inv)                     # Newton step -> ~exact
        y = num_s[...] * inv                              # (M, C)

        x1 = x_s[...] + mm(sr * y, wo_ref[0])

        # ---------------- ChannelMix ----------------
        h2 = layernorm(x1, ln2_w, ln2_b)
        hh2 = time_shift(h2)
        d2 = h2 - hh2
        kk = mm(hh2 + cm_k * d2, cwk_ref[0])              # (M, H)
        kk = jnp.square(jnp.maximum(kk, 0.0))
        kv = mm(kk, cwv_ref[0])                           # (M, C)
        rr = jax.nn.sigmoid(mm(hh2 + cm_r * d2, cwr_ref[0]))
        x_s[...] = x1 + rr * kv                           # carry to next layer

        # -------- final LayerNorm + lm_head, only on state-token rows --------
        @pl.when(l == pl.num_programs(0) - 1)
        def _():
            pltpu.sync_copy(hw_hbm, hw_s)                 # head fetched only here
            xs = jnp.concatenate(                         # tile-aligned 8-row slices
                [x_s[pl.ds((3 * j + 1) * B, B), :] for j in range(K)], axis=0)
            hn = layernorm(xs, nw_ref[...], nb_ref[...])
            out_ref[...] = jnp.dot(hn.astype(jnp.bfloat16), hw_s[...],
                                   preferred_element_type=jnp.float32)

    return kernel


def _fused_forward(x_tm, params, *, B, T, K):
    M, C = x_tm.shape
    L = params["vecs"].shape[0]
    H = params["cwv_t"].shape[1]
    V = params["head_w_t"].shape[1]
    kernel = _build_fused_kernel(B, T, K, C, H, V)

    lmat = lambda r, c: pl.BlockSpec((1, r, c), lambda l: (l, 0, 0))   # per-layer block
    const = lambda r, c: pl.BlockSpec((r, c), lambda l: (0, 0))        # layer-invariant

    return pl.pallas_call(
        kernel,
        out_shape=jax.ShapeDtypeStruct((K * B, V), jnp.float32),
        grid_spec=pltpu.PrefetchScalarGridSpec(
            num_scalar_prefetch=0,
            grid=(L,),                                     # layers are sequential
            in_specs=[
                pl.BlockSpec(memory_space=pl.ANY),         # x (HBM): DMA'd once at l==0
                pl.BlockSpec((1, NUM_VEC, C), lambda l: (l, 0, 0)),   # packed vec params
                lmat(C, C), lmat(C, C), lmat(C, C), lmat(C, C),       # wk wv wr wo (in,out)
                lmat(C, H), lmat(C, C), lmat(H, C),                   # cwk cwr cwv (in,out)
                const(1, C), const(1, C),                             # final norm w, b
                pl.BlockSpec(memory_space=pl.ANY),         # lm_head (HBM): DMA'd at last step
            ],
            out_specs=pl.BlockSpec((K * B, V), lambda l: (0, 0)),
            scratch_shapes=[
                pltpu.VMEM((M, C), jnp.float32),           # resident activations
                pltpu.VMEM((M, C), jnp.float32),           # WKV numerators
                pltpu.VMEM((M, C), jnp.float32),           # WKV denominators
                pltpu.VMEM((C, V), jnp.bfloat16),          # lm_head staging (last step only)
            ],
        ),
        compiler_params=pltpu.CompilerParams(
            dimension_semantics=("arbitrary",),
            vmem_limit_bytes=32 * 1024 * 1024,             # raise further at scaled C / vocab
        ),
    )(x_tm, params["vecs"],
      params["wk_t"], params["wv_t"], params["wr_t"], params["wo_t"],
      params["cwk_t"], params["cwr_t"], params["cwv_t"],
      params["norm_w"], params["norm_b"], params["head_w_t"])


# ---------------- decisionRWKV.forward ----------------
@jax.jit
def decision_rwkv_forward(params, rtgs_emb, states_emb, actions_emb, timesteps):
    B, K, C = states_emb.shape
    T = 3 * K
    Bp = ((B + 7) // 8) * 8          # pad batch to a multiple of 8 (full sublane tiles)
    # interleave: [:, ::3] = rtgs, [:, 1::3] = states, [:, 2::3] = actions
    token_emb = jnp.stack([rtgs_emb, states_emb, actions_emb], axis=2).reshape(B, T, C)
    pos_global = params["glob_emb"][timesteps[:, 0]][:, None, :]       # (B, 1, C)
    pos_rel = params["ctx_emb"][jnp.arange(T)][None, :, :]             # (1, T, C)
    x = (token_emb + pos_global + pos_rel).astype(jnp.float32)
    # dropout(embd_pdrop): identity (inference / deterministic forward)
    if Bp != B:
        x = jnp.concatenate([x, jnp.zeros((Bp - B, T, C), jnp.float32)], axis=0)
    # time-major flatten (row = t*Bp + b) so each WKV step touches one aligned
    # (8,128) sublane block and matmuls run with M = Bp*T rows.
    x_tm = jnp.transpose(x, (1, 0, 2)).reshape(T * Bp, C)
    logits_kb = _fused_forward(x_tm, params, B=Bp, T=T, K=K)           # (K*Bp, V), row = j*Bp+b
    V = logits_kb.shape[-1]
    logits = jnp.transpose(logits_kb.reshape(K, Bp, V), (1, 0, 2))     # (Bp, K, V)
    return logits[:B]                                                  # == logits[:, 1::3, :]


# ---------------- deterministic parameter init (synthetic) ----------------
def init_params(key):
    keys = jax.random.split(key, 32)
    kit = iter(keys)

    def linear(out_f, in_f):                      # nn.Linear: normal(0, 0.01), (out,in)
        return 0.01 * jax.random.normal(next(kit), (out_f, in_f), jnp.float32)

    def emb(n, d):                                # nn.Embedding: normal(0, 1e-5)
        return 1e-5 * jax.random.normal(next(kit), (n, d), jnp.float32)

    C, H = N_EMBD, HIDDEN
    params = {
        "glob_emb": emb(MAX_TIMESTEP, C),
        "ctx_emb": emb(BLOCK_SIZE, C),
        "norm_w": jnp.ones((1, C), jnp.float32),
        "norm_b": jnp.zeros((1, C), jnp.float32),
        # lm_head pre-transposed to (in, out) and stored bf16 for the MXU
        "head_w_t": linear(VOCAB, C).T.astype(jnp.bfloat16),
    }

    h_idx = jnp.arange(C, dtype=jnp.float32)
    xvec = h_idx / C
    zigzag = ((jnp.arange(C) + 1) % 3 - 1).astype(jnp.float32) * 0.5
    ones = jnp.ones((C,), jnp.float32)
    zeros = jnp.zeros((C,), jnp.float32)

    vecs, wk, wv, wr, wo, cwk, cwr, cwv = ([] for _ in range(8))
    for i in range(N_LAYER):
        # NOTE: the reference module builds block_loop with layer_id=vocab_size,
        # which yields inf/NaN time-mix parameters; we init with the layer index
        # so the synthetic forward stays finite.  Forward math is unchanged.
        r01 = i / (N_LAYER - 1)
        r1a0 = 1.0 - i / N_LAYER
        decay = -5.0 + 8.0 * (h_idx / (C - 1)) ** (0.7 + 1.3 * r01)
        w_dec = -jnp.exp(decay)                            # precompute -exp(time_decay)
        tfirst = jnp.full((C,), math.log(0.3), jnp.float32) + zigzag
        tm = xvec ** r1a0
        vecs.append(jnp.stack(
            [ones, zeros, ones, zeros,                     # ln1_w ln1_b ln2_w ln2_b
             w_dec, tfirst,                                # -exp(time_decay), time_first
             tm, tm + 0.3 * r01, xvec ** (0.5 * r1a0),     # tm_k tm_v tm_r
             tm, tm],                                      # cm_k cm_r
            axis=0))
        wk.append(linear(C, C).T)
        wv.append(linear(C, C).T)
        wr.append(linear(C, C).T)
        wo.append(linear(C, C).T)
        cwk.append(linear(H, C).T)   # (C, H)
        cwr.append(linear(C, C).T)   # (C, C)
        cwv.append(linear(C, H).T)   # (H, C)

    params["vecs"] = jnp.stack(vecs).astype(jnp.float32)   # (L, NUM_VEC, C)
    bf = lambda lst: jnp.stack(lst).astype(jnp.bfloat16)
    params["wk_t"], params["wv_t"] = bf(wk), bf(wv)
    params["wr_t"], params["wo_t"] = bf(wr), bf(wo)
    params["cwk_t"], params["cwr_t"], params["cwv_t"] = bf(cwk), bf(cwr), bf(cwv)
    return params


if __name__ == "__main__":
    key = jax.random.PRNGKey(0)
    kp, k1, k2, k3, k4 = jax.random.split(key, 5)
    params = init_params(kp)

    B, K = 2, 4
    rtgs_emb = jax.random.normal(k1, (B, K, N_EMBD), jnp.float32)
    states_emb = jax.random.normal(k2, (B, K, N_EMBD), jnp.float32)
    actions_emb = jax.random.normal(k3, (B, K, N_EMBD), jnp.float32)
    timesteps = jax.random.randint(k4, (B, K), 0, MAX_TIMESTEP)

    logits = decision_rwkv_forward(params, rtgs_emb, states_emb, actions_emb, timesteps)
    logits = jax.block_until_ready(logits)
    assert logits.shape == (B, K, VOCAB), logits.shape
    assert bool(jnp.all(jnp.isfinite(logits)))
    print("KERNEL_OK")
</pallas_src>

<mosaic_0001>
module attributes {stable_mosaic.version = 11 : i64} {
  func.func @kernel(%arg0: i32, %arg1: memref<96x128xf32, #tpu.memory_space<any>>, %arg2: memref<1x11x128xf32, #tpu.memory_space<vmem>>, %arg3: memref<1x128x128xbf16, #tpu.memory_space<vmem>>, %arg4: memref<1x128x128xbf16, #tpu.memory_space<vmem>>, %arg5: memref<1x128x128xbf16, #tpu.memory_space<vmem>>, %arg6: memref<1x128x128xbf16, #tpu.memory_space<vmem>>, %arg7: memref<1x128x512xbf16, #tpu.memory_space<vmem>>, %arg8: memref<1x128x128xbf16, #tpu.memory_space<vmem>>, %arg9: memref<1x512x128xbf16, #tpu.memory_space<vmem>>, %arg10: memref<1x128xf32, #tpu.memory_space<vmem>>, %arg11: memref<1x128xf32, #tpu.memory_space<vmem>>, %arg12: memref<128x256xbf16, #tpu.memory_space<any>>, %arg13: memref<32x256xf32, #tpu.memory_space<vmem>>, %arg14: memref<96x128xf32, #tpu.memory_space<vmem>>, %arg15: memref<96x128xf32, #tpu.memory_space<vmem>>, %arg16: memref<96x128xf32, #tpu.memory_space<vmem>>, %arg17: memref<128x256xbf16, #tpu.memory_space<vmem>>) attributes {dimension_semantics = [#tpu.dimension_semantics<arbitrary>], iteration_bounds = array<i64: 2>, scalar_prefetch = 0 : i64, scratch_operands = 4 : i64, tpu.core_type = #tpu.core_type<tc>, window_params = [{}, {transform_indices = @transform_1, window_bounds = array<i64: 1, 11, 128>}, {transform_indices = @transform_2, window_bounds = array<i64: 1, 128, 128>}, {transform_indices = @transform_3, window_bounds = array<i64: 1, 128, 128>}, {transform_indices = @transform_4, window_bounds = array<i64: 1, 128, 128>}, {transform_indices = @transform_5, window_bounds = array<i64: 1, 128, 128>}, {transform_indices = @transform_6, window_bounds = array<i64: 1, 128, 512>}, {transform_indices = @transform_7, window_bounds = array<i64: 1, 128, 128>}, {transform_indices = @transform_8, window_bounds = array<i64: 1, 512, 128>}, {pipeline_mode = #tpu.pipeline_mode<synchronous>, transform_indices = @transform_9, window_bounds = array<i64: 1, 128>}, {pipeline_mode = #tpu.pipeline_mode<synchronous>, transform_indices = @transform_10, window_bounds = array<i64: 1, 128>}, {}, {pipeline_mode = #tpu.pipeline_mode<synchronous>, transform_indices = @transform_12, window_bounds = array<i64: 32, 256>}]} {
    %c0_i32 = arith.constant 0 : i32
    %0 = arith.cmpi eq, %arg0, %c0_i32 : i32
    %1 = arith.extui %0 : i1 to i32
    %c0_i32_0 = arith.constant 0 : i32
    %2 = arith.cmpi ne, %1, %c0_i32_0 : i32
    scf.if %2 {
      "tpu.region"() ({
        %598 = tpu.sem_alloc : memref<!tpu.dma_semaphore, #tpu.memory_space<semaphore_mem>>
        tpu.enqueue_dma source(%arg1 : memref<96x128xf32, #tpu.memory_space<any>>) target(%arg14 : memref<96x128xf32, #tpu.memory_space<vmem>>) target_semaphore(%598 : memref<!tpu.dma_semaphore, #tpu.memory_space<semaphore_mem>>)
        tpu.wait_dma2 semaphore(%598 : memref<!tpu.dma_semaphore, #tpu.memory_space<semaphore_mem>>) src(%arg1 : memref<96x128xf32, #tpu.memory_space<any>>) dst(%arg14 : memref<96x128xf32, #tpu.memory_space<vmem>>)
        tpu.yield
      }) : () -> ()
    } else {
    }
    %c0 = arith.constant 0 : index
    %c0_1 = arith.constant 0 : index
    %c0_2 = arith.constant 0 : index
    %3 = vector.load %arg2[%c0, %c0_1, %c0_2] : memref<1x11x128xf32, #tpu.memory_space<vmem>>, vector<1x11x128xf32>
    %4 = vector.shape_cast %3 : vector<1x11x128xf32> to vector<11x128xf32>
    %5 = vector.extract_strided_slice %4 {offsets = [0, 0], sizes = [1, 128], strides = [1, 1]} : vector<11x128xf32> to vector<1x128xf32>
    %6 = vector.extract_strided_slice %4 {offsets = [1, 0], sizes = [1, 128], strides = [1, 1]} : vector<11x128xf32> to vector<1x128xf32>
    %7 = vector.extract_strided_slice %4 {offsets = [2, 0], sizes = [1, 128], strides = [1, 1]} : vector<11x128xf32> to vector<1x128xf32>
    %8 = vector.extract_strided_slice %4 {offsets = [3, 0], sizes = [1, 128], strides = [1, 1]} : vector<11x128xf32> to vector<1x128xf32>
    %9 = vector.extract_strided_slice %4 {offsets = [4, 0], sizes = [1, 128], strides = [1, 1]} : vector<11x128xf32> to vector<1x128xf32>
    %10 = vector.extract_strided_slice %4 {offsets = [5, 0], sizes = [1, 128], strides = [1, 1]} : vector<11x128xf32> to vector<1x128xf32>
    %11 = vector.extract_strided_slice %4 {offsets = [6, 0], sizes = [1, 128], strides = [1, 1]} : vector<11x128xf32> to vector<1x128xf32>
    %12 = vector.extract_strided_slice %4 {offsets = [7, 0], sizes = [1, 128], strides = [1, 1]} : vector<11x128xf32> to vector<1x128xf32>
    %13 = vector.extract_strided_slice %4 {offsets = [8, 0], sizes = [1, 128], strides = [1, 1]} : vector<11x128xf32> to vector<1x128xf32>
    %14 = vector.extract_strided_slice %4 {offsets = [9, 0], sizes = [1, 128], strides = [1, 1]} : vector<11x128xf32> to vector<1x128xf32>
    %15 = vector.extract_strided_slice %4 {offsets = [10, 0], sizes = [1, 128], strides = [1, 1]} : vector<11x128xf32> to vector<1x128xf32>
    %16 = tpu.iota {dimensions = array<i32: 0>} : vector<96x128xi32>
    %c8_i32 = arith.constant 8 : i32
    %17 = vector.broadcast %c8_i32 : i32 to vector<96x128xi32>
    %18 = arith.cmpi slt, %16, %17 : vector<96x128xi32>
    %c0_3 = arith.constant 0 : index
    %c0_4 = arith.constant 0 : index
    %19 = vector.load %arg14[%c0_3, %c0_4] : memref<96x128xf32, #tpu.memory_space<vmem>>, vector<96x128xf32>
    %cst = arith.constant dense<0.000000e+00> : vector<96xf32>
    %20 = vector.multi_reduction <add>, %19, %cst [1] : vector<96x128xf32> to vector<96xf32>
    %21 = vector.shape_cast %20 : vector<96xf32> to vector<96x1xf32>
    %cst_5 = arith.constant 1.280000e+02 : f32
    %22 = vector.broadcast %cst_5 : f32 to vector<96x1xf32>
    %23 = arith.divf %21, %22 : vector<96x1xf32>
    %24 = vector.broadcast %23 : vector<96x1xf32> to vector<96x128xf32>
    %25 = arith.subf %19, %24 : vector<96x128xf32>
    %26 = arith.mulf %25, %25 : vector<96x128xf32>
    %cst_6 = arith.constant dense<0.000000e+00> : vector<96xf32>
    %27 = vector.multi_reduction <add>, %26, %cst_6 [1] : vector<96x128xf32> to vector<96xf32>
    %28 = vector.shape_cast %27 : vector<96xf32> to vector<96x1xf32>
    %cst_7 = arith.constant 1.280000e+02 : f32
    %29 = vector.broadcast %cst_7 : f32 to vector<96x1xf32>
    %30 = arith.divf %28, %29 : vector<96x1xf32>
    %31 = vector.broadcast %23 : vector<96x1xf32> to vector<96x128xf32>
    %32 = arith.subf %19, %31 : vector<96x128xf32>
    %cst_8 = arith.constant 9.99999974E-6 : f32
    %33 = vector.broadcast %cst_8 : f32 to vector<96x1xf32>
    %34 = arith.addf %30, %33 : vector<96x1xf32>
    %35 = math.rsqrt %34 : vector<96x1xf32>
    %36 = vector.broadcast %35 : vector<96x1xf32> to vector<96x128xf32>
    %37 = arith.mulf %32, %36 : vector<96x128xf32>
    %38 = vector.broadcast %5 : vector<1x128xf32> to vector<96x128xf32>
    %39 = arith.mulf %37, %38 : vector<96x128xf32>
    %40 = vector.broadcast %6 : vector<1x128xf32> to vector<96x128xf32>
    %41 = arith.addf %39, %40 : vector<96x128xf32>
    %c8_i32_9 = arith.constant 8 : i32
    %42 = tpu.dynamic_rotate %41 by %c8_i32_9 dim 0 : vector<96x128xf32>, i32 -> vector<96x128xf32>
    %cst_10 = arith.constant 0.000000e+00 : f32
    %43 = vector.broadcast %cst_10 : f32 to vector<96x128xf32>
    %44 = arith.select %18, %43, %42 : vector<96x128xi1>, vector<96x128xf32>
    %45 = arith.subf %41, %44 : vector<96x128xf32>
    %46 = vector.broadcast %11 : vector<1x128xf32> to vector<96x128xf32>
    %47 = arith.mulf %46, %45 : vector<96x128xf32>
    %48 = arith.addf %44, %47 : vector<96x128xf32>
    %c0_11 = arith.constant 0 : index
    %c0_12 = arith.constant 0 : index
    %c0_13 = arith.constant 0 : index
    %49 = vector.load %arg3[%c0_11, %c0_12, %c0_13] : memref<1x128x128xbf16, #tpu.memory_space<vmem>>, vector<1x128x128xbf16>
    %50 = vector.shape_cast %49 : vector<1x128x128xbf16> to vector<128x128xbf16>
    %51 = arith.truncf %48 : vector<96x128xf32> to vector<96x128xbf16>
    %cst_14 = arith.constant dense<0.000000e+00> : vector<96x128xf32>
    %52 = tpu.matmul %51, %50, %cst_14 {dimension_numbers = #tpu.dot_dimension_numbers<[1], [0], [0], [1], [0, 0, 1, 1], [], []>} : vector<96x128xbf16>, vector<128x128xbf16>, vector<96x128xf32> -> vector<96x128xf32>
    %53 = vector.broadcast %12 : vector<1x128xf32> to vector<96x128xf32>
    %54 = arith.mulf %53, %45 : vector<96x128xf32>
    %55 = arith.addf %44, %54 : vector<96x128xf32>
    %c0_15 = arith.constant 0 : index
    %c0_16 = arith.constant 0 : index
    %c0_17 = arith.constant 0 : index
    %56 = vector.load %arg4[%c0_15, %c0_16, %c0_17] : memref<1x128x128xbf16, #tpu.memory_space<vmem>>, vector<1x128x128xbf16>
    %57 = vector.shape_cast %56 : vector<1x128x128xbf16> to vector<128x128xbf16>
    %58 = arith.truncf %55 : vector<96x128xf32> to vector<96x128xbf16>
    %cst_18 = arith.constant dense<0.000000e+00> : vector<96x128xf32>
    %59 = tpu.matmul %58, %57, %cst_18 {dimension_numbers = #tpu.dot_dimension_numbers<[1], [0], [0], [1], [0, 0, 1, 1], [], []>} : vector<96x128xbf16>, vector<128x128xbf16>, vector<96x128xf32> -> vector<96x128xf32>
    %60 = vector.broadcast %13 : vector<1x128xf32> to vector<96x128xf32>
    %61 = arith.mulf %60, %45 : vector<96x128xf32>
    %62 = arith.addf %44, %61 : vector<96x128xf32>
    %c0_19 = arith.constant 0 : index
    %c0_20 = arith.constant 0 : index
    %c0_21 = arith.constant 0 : index
    %63 = vector.load %arg5[%c0_19, %c0_20, %c0_21] : memref<1x128x128xbf16, #tpu.memory_space<vmem>>, vector<1x128x128xbf16>
    %64 = vector.shape_cast %63 : vector<1x128x128xbf16> to vector<128x128xbf16>
    %65 = arith.truncf %62 : vector<96x128xf32> to vector<96x128xbf16>
    %cst_22 = arith.constant dense<0.000000e+00> : vector<96x128xf32>
    %66 = tpu.matmul %65, %64, %cst_22 {dimension_numbers = #tpu.dot_dimension_numbers<[1], [0], [0], [1], [0, 0, 1, 1], [], []>} : vector<96x128xbf16>, vector<128x128xbf16>, vector<96x128xf32> -> vector<96x128xf32>
    %67 = arith.negf %66 : vector<96x128xf32>
    %68 = math.exp %67 : vector<96x128xf32>
    %cst_23 = arith.constant 1.000000e+00 : f32
    %69 = vector.broadcast %cst_23 : f32 to vector<96x128xf32>
    %70 = arith.addf %69, %68 : vector<96x128xf32>
    %71 = arith.divf %69, %70 : vector<96x128xf32>
    %cst_24 = arith.constant 0.000000e+00 : f32
    %72 = vector.broadcast %cst_24 : f32 to vector<8x128xf32>
    %cst_25 = arith.constant 0.000000e+00 : f32
    %73 = vector.broadcast %cst_25 : f32 to vector<8x128xf32>
    %cst_26 = arith.constant -9.99999968E+37 : f32
    %74 = vector.broadcast %cst_26 : f32 to vector<8x128xf32>
    %75 = vector.extract_strided_slice %52 {offsets = [0, 0], sizes = [8, 128], strides = [1, 1]} : vector<96x128xf32> to vector<8x128xf32>
    %76 = vector.extract_strided_slice %59 {offsets = [0, 0], sizes = [8, 128], strides = [1, 1]} : vector<96x128xf32> to vector<8x128xf32>
    %77 = vector.broadcast %10 : vector<1x128xf32> to vector<8x128xf32>
    %78 = arith.addf %77, %75 : vector<8x128xf32>
    %79 = arith.cmpf oge, %74, %78 : vector<8x128xf32>
    %80 = arith.subf %74, %78 : vector<8x128xf32>
    %81 = math.absf %80 : vector<8x128xf32>
    %cst_27 = arith.constant 0.000000e+00 : f32
    %82 = vector.broadcast %cst_27 : f32 to vector<8x128xf32>
    %83 = arith.subf %82, %81 : vector<8x128xf32>
    %84 = math.exp %83 : vector<8x128xf32>
    %cst_28 = arith.constant 1.000000e+00 : f32
    %85 = vector.broadcast %cst_28 : f32 to vector<8x128xf32>
    %86 = arith.select %79, %85, %84 : vector<8x128xi1>, vector<8x128xf32>
    %cst_29 = arith.constant 1.000000e+00 : f32
    %87 = vector.broadcast %cst_29 : f32 to vector<8x128xf32>
    %88 = arith.select %79, %84, %87 : vector<8x128xi1>, vector<8x128xf32>
    %89 = arith.mulf %86, %72 : vector<8x128xf32>
    %90 = arith.mulf %88, %76 : vector<8x128xf32>
    %91 = arith.addf %89, %90 : vector<8x128xf32>
    %c0_30 = arith.constant 0 : index
    %c0_31 = arith.constant 0 : index
    %92 = vector.load %arg15[%c0_30, %c0_31] : memref<96x128xf32, #tpu.memory_space<vmem>>, vector<8x128xf32>
    tpu.vector_store %arg15[%c0_30, %c0_31], %91 {strides = array<i32>} : memref<96x128xf32, #tpu.memory_space<vmem>>, vector<8x128xf32>,
    %93 = arith.mulf %86, %73 : vector<8x128xf32>
    %94 = arith.addf %93, %88 : vector<8x128xf32>
    %c0_32 = arith.constant 0 : index
    %c0_33 = arith.constant 0 : index
    %95 = vector.load %arg16[%c0_32, %c0_33] : memref<96x128xf32, #tpu.memory_space<vmem>>, vector<8x128xf32>
    tpu.vector_store %arg16[%c0_32, %c0_33], %94 {strides = array<i32>} : memref<96x128xf32, #tpu.memory_space<vmem>>, vector<8x128xf32>,
    %96 = vector.broadcast %9 : vector<1x128xf32> to vector<8x128xf32>
    %97 = arith.addf %96, %74 : vector<8x128xf32>
    %98 = arith.cmpf oge, %97, %75 : vector<8x128xf32>
    %99 = arith.subf %97, %75 : vector<8x128xf32>
    %100 = math.absf %99 : vector<8x128xf32>
    %cst_34 = arith.constant 0.000000e+00 : f32
    %101 = vector.broadcast %cst_34 : f32 to vector<8x128xf32>
    %102 = arith.subf %101, %100 : vector<8x128xf32>
    %103 = math.exp %102 : vector<8x128xf32>
    %cst_35 = arith.constant 1.000000e+00 : f32
    %104 = vector.broadcast %cst_35 : f32 to vector<8x128xf32>
    %105 = arith.select %98, %104, %103 : vector<8x128xi1>, vector<8x128xf32>
    %cst_36 = arith.constant 1.000000e+00 : f32
    %106 = vector.broadcast %cst_36 : f32 to vector<8x128xf32>
    %107 = arith.select %98, %103, %106 : vector<8x128xi1>, vector<8x128xf32>
    %108 = arith.mulf %105, %72 : vector<8x128xf32>
    %109 = arith.mulf %107, %76 : vector<8x128xf32>
    %110 = arith.addf %108, %109 : vector<8x128xf32>
    %111 = arith.mulf %105, %73 : vector<8x128xf32>
    %112 = arith.addf %111, %107 : vector<8x128xf32>
    %113 = arith.maximumf %97, %75 : vector<8x128xf32>
    %114 = vector.extract_strided_slice %52 {offsets = [8, 0], sizes = [8, 128], strides = [1, 1]} : vector<96x128xf32> to vector<8x128xf32>
    %115 = vector.extract_strided_slice %59 {offsets = [8, 0], sizes = [8, 128], strides = [1, 1]} : vector<96x128xf32> to vector<8x128xf32>
    %116 = vector.broadcast %10 : vector<1x128xf32> to vector<8x128xf32>
    %117 = arith.addf %116, %114 : vector<8x128xf32>
    %118 = arith.cmpf oge, %113, %117 : vector<8x128xf32>
    %119 = arith.subf %113, %117 : vector<8x128xf32>
    %120 = math.absf %119 : vector<8x128xf32>
    %cst_37 = arith.constant 0.000000e+00 : f32
    %121 = vector.broadcast %cst_37 : f32 to vector<8x128xf32>
    %122 = arith.subf %121, %120 : vector<8x128xf32>
    %123 = math.exp %122 : vector<8x128xf32>
    %cst_38 = arith.constant 1.000000e+00 : f32
    %124 = vector.broadcast %cst_38 : f32 to vector<8x128xf32>
    %125 = arith.select %118, %124, %123 : vector<8x128xi1>, vector<8x128xf32>
    %cst_39 = arith.constant 1.000000e+00 : f32
    %126 = vector.broadcast %cst_39 : f32 to vector<8x128xf32>
    %127 = arith.select %118, %123, %126 : vector<8x128xi1>, vector<8x128xf32>
    %128 = arith.mulf %125, %110 : vector<8x128xf32>
    %129 = arith.mulf %127, %115 : vector<8x128xf32>
    %130 = arith.addf %128, %129 : vector<8x128xf32>
    %c8 = arith.constant 8 : index
    %c0_40 = arith.constant 0 : index
    %131 = vector.load %arg15[%c8, %c0_40] : memref<96x128xf32, #tpu.memory_space<vmem>>, vector<8x128xf32>
    tpu.vector_store %arg15[%c8, %c0_40], %130 {strides = array<i32>} : memref<96x128xf32, #tpu.memory_space<vmem>>, vector<8x128xf32>,
    %132 = arith.mulf %125, %112 : vector<8x128xf32>
    %133 = arith.addf %132, %127 : vector<8x128xf32>
    %c8_41 = arith.constant 8 : index
    %c0_42 = arith.constant 0 : index
    %134 = vector.load %arg16[%c8_41, %c0_42] : memref<96x128xf32, #tpu.memory_space<vmem>>, vector<8x128xf32>
    tpu.vector_store %arg16[%c8_41, %c0_42], %133 {strides = array<i32>} : memref<96x128xf32, #tpu.memory_space<vmem>>, vector<8x128xf32>,
    %135 = vector.broadcast %9 : vector<1x128xf32> to vector<8x128xf32>
    %136 = arith.addf %135, %113 : vector<8x128xf32>
    %137 = arith.cmpf oge, %136, %114 : vector<8x128xf32>
    %138 = arith.subf %136, %114 : vector<8x128xf32>
    %139 = math.absf %138 : vector<8x128xf32>
    %cst_43 = arith.constant 0.000000e+00 : f32
    %140 = vector.broadcast %cst_43 : f32 to vector<8x128xf32>
    %141 = arith.subf %140, %139 : vector<8x128xf32>
    %142 = math.exp %141 : vector<8x128xf32>
    %cst_44 = arith.constant 1.000000e+00 : f32
    %143 = vector.broadcast %cst_44 : f32 to vector<8x128xf32>
    %144 = arith.select %137, %143, %142 : vector<8x128xi1>, vector<8x128xf32>
    %cst_45 = arith.constant 1.000000e+00 : f32
    %145 = vector.broadcast %cst_45 : f32 to vector<8x128xf32>
    %146 = arith.select %137, %142, %145 : vector<8x128xi1>, vector<8x128xf32>
    %147 = arith.mulf %144, %110 : vector<8x128xf32>
    %148 = arith.mulf %146, %115 : vector<8x128xf32>
    %149 = arith.addf %147, %148 : vector<8x128xf32>
    %150 = arith.mulf %144, %112 : vector<8x128xf32>
    %151 = arith.addf %150, %146 : vector<8x128xf32>
    %152 = arith.maximumf %136, %114 : vector<8x128xf32>
    %153 = vector.extract_strided_slice %52 {offsets = [16, 0], sizes = [8, 128], strides = [1, 1]} : vector<96x128xf32> to vector<8x128xf32>
    %154 = vector.extract_strided_slice %59 {offsets = [16, 0], sizes = [8, 128], strides = [1, 1]} : vector<96x128xf32> to vector<8x128xf32>
    %155 = vector.broadcast %10 : vector<1x128xf32> to vector<8x128xf32>
    %156 = arith.addf %155, %153 : vector<8x128xf32>
    %157 = arith.cmpf oge, %152, %156 : vector<8x128xf32>
    %158 = arith.subf %152, %156 : vector<8x128xf32>
    %159 = math.absf %158 : vector<8x128xf32>
    %cst_46 = arith.constant 0.000000e+00 : f32
    %160 = vector.broadcast %cst_46 : f32 to vector<8x128xf32>
    %161 = arith.subf %160, %159 : vector<8x128xf32>
    %162 = math.exp %161 : vector<8x128xf32>
    %cst_47 = arith.constant 1.000000e+00 : f32
    %163 = vector.broadcast %cst_47 : f32 to vector<8x128xf32>
    %164 = arith.select %157, %163, %162 : vector<8x128xi1>, vector<8x128xf32>
    %cst_48 = arith.constant 1.000000e+00 : f32
    %165 = vector.broadcast %cst_48 : f32 to vector<8x128xf32>
    %166 = arith.select %157, %162, %165 : vector<8x128xi1>, vector<8x128xf32>
    %167 = arith.mulf %164, %149 : vector<8x128xf32>
    %168 = arith.mulf %166, %154 : vector<8x128xf32>
    %169 = arith.addf %167, %168 : vector<8x128xf32>
    %c16 = arith.constant 16 : index
    %c0_49 = arith.constant 0 : index
    %170 = vector.load %arg15[%c16, %c0_49] : memref<96x128xf32, #tpu.memory_space<vmem>>, vector<8x128xf32>
    tpu.vector_store %arg15[%c16, %c0_49], %169 {strides = array<i32>} : memref<96x128xf32, #tpu.memory_space<vmem>>, vector<8x128xf32>,
    %171 = arith.mulf %164, %151 : vector<8x128xf32>
    %172 = arith.addf %171, %166 : vector<8x128xf32>
    %c16_50 = arith.constant 16 : index
    %c0_51 = arith.constant 0 : index
    %173 = vector.load %arg16[%c16_50, %c0_51] : memref<96x128xf32, #tpu.memory_space<vmem>>, vector<8x128xf32>
    tpu.vector_store %arg16[%c16_50, %c0_51], %172 {strides = array<i32>} : memref<96x128xf32, #tpu.memory_space<vmem>>, vector<8x128xf32>,
    %174 = vector.broadcast %9 : vector<1x128xf32> to vector<8x128xf32>
    %175 = arith.addf %174, %152 : vector<8x128xf32>
    %176 = arith.cmpf oge, %175, %153 : vector<8x128xf32>
    %177 = arith.subf %175, %153 : vector<8x128xf32>
    %178 = math.absf %177 : vector<8x128xf32>
    %cst_52 = arith.constant 0.000000e+00 : f32
    %179 = vector.broadcast %cst_52 : f32 to vector<8x128xf32>
    %180 = arith.subf %179, %178 : vector<8x128xf32>
    %181 = math.exp %180 : vector<8x128xf32>
    %cst_53 = arith.constant 1.000000e+00 : f32
    %182 = vector.broadcast %cst_53 : f32 to vector<8x128xf32>
    %183 = arith.select %176, %182, %181 : vector<8x128xi1>, vector<8x128xf32>
    %cst_54 = arith.constant 1.000000e+00 : f32
    %184 = vector.broadcast %cst_54 : f32 to vector<8x128xf32>
    %185 = arith.select %176, %181, %184 : vector<8x128xi1>, vector<8x128xf32>
    %186 = arith.mulf %183, %149 : vector<8x128xf32>
    %187 = arith.mulf %185, %154 : vector<8x128xf32>
    %188 = arith.addf %186, %187 : vector<8x128xf32>
    %189 = arith.mulf %183, %151 : vector<8x128xf32>
    %190 = arith.addf %189, %185 : vector<8x128xf32>
    %191 = arith.maximumf %175, %153 : vector<8x128xf32>
    %192 = vector.extract_strided_slice %52 {offsets = [24, 0], sizes = [8, 128], strides = [1, 1]} : vector<96x128xf32> to vector<8x128xf32>
    %193 = vector.extract_strided_slice %59 {offsets = [24, 0], sizes = [8, 128], strides = [1, 1]} : vector<96x128xf32> to vector<8x128xf32>
    %194 = vector.broadcast %10 : vector<1x128xf32> to vector<8x128xf32>
    %195 = arith.addf %194, %192 : vector<8x128xf32>
    %196 = arith.cmpf oge, %191, %195 : vector<8x128xf32>
    %197 = arith.subf %191, %195 : vector<8x128xf32>
    %198 = math.absf %197 : vector<8x128xf32>
    %cst_55 = arith.constant 0.000000e+00 : f32
    %199 = vector.broadcast %cst_55 : f32 to vector<8x128xf32>
    %200 = arith.subf %199, %198 : vector<8x128xf32>
    %201 = math.exp %200 : vector<8x128xf32>
    %cst_56 = arith.constant 1.000000e+00 : f32
    %202 = vector.broadcast %cst_56 : f32 to vector<8x128xf32>
    %203 = arith.select %196, %202, %201 : vector<8x128xi1>, vector<8x128xf32>
    %cst_57 = arith.constant 1.000000e+00 : f32
    %204 = vector.broadcast %cst_57 : f32 to vector<8x128xf32>
    %205 = arith.select %196, %201, %204 : vector<8x128xi1>, vector<8x128xf32>
    %206 = arith.mulf %203, %188 : vector<8x128xf32>
    %207 = arith.mulf %205, %193 : vector<8x128xf32>
    %208 = arith.addf %206, %207 : vector<8x128xf32>
    %c24 = arith.constant 24 : index
    %c0_58 = arith.constant 0 : index
    %209 = vector.load %arg15[%c24, %c0_58] : memref<96x128xf32, #tpu.memory_space<vmem>>, vector<8x128xf32>
    tpu.vector_store %arg15[%c24, %c0_58], %208 {strides = array<i32>} : memref<96x128xf32, #tpu.memory_space<vmem>>, vector<8x128xf32>,
    %210 = arith.mulf %203, %190 : vector<8x128xf32>
    %211 = arith.addf %210, %205 : vector<8x128xf32>
    %c24_59 = arith.constant 24 : index
    %c0_60 = arith.constant 0 : index
    %212 = vector.load %arg16[%c24_59, %c0_60] : memref<96x128xf32, #tpu.memory_space<vmem>>, vector<8x128xf32>
    tpu.vector_store %arg16[%c24_59, %c0_60], %211 {strides = array<i32>} : memref<96x128xf32, #tpu.memory_space<vmem>>, vector<8x128xf32>,
    %213 = vector.broadcast %9 : vector<1x128xf32> to vector<8x128xf32>
    %214 = arith.addf %213, %191 : vector<8x128xf32>
    %215 = arith.cmpf oge, %214, %192 : vector<8x128xf32>
    %216 = arith.subf %214, %192 : vector<8x128xf32>
    %217 = math.absf %216 : vector<8x128xf32>
    %cst_61 = arith.constant 0.000000e+00 : f32
    %218 = vector.broadcast %cst_61 : f32 to vector<8x128xf32>
    %219 = arith.subf %218, %217 : vector<8x128xf32>
    %220 = math.exp %219 : vector<8x128xf32>
    %cst_62 = arith.constant 1.000000e+00 : f32
    %221 = vector.broadcast %cst_62 : f32 to vector<8x128xf32>
    %222 = arith.select %215, %221, %220 : vector<8x128xi1>, vector<8x128xf32>
    %cst_63 = arith.constant 1.000000e+00 : f32
    %223 = vector.broadcast %cst_63 : f32 to vector<8x128xf32>
    %224 = arith.select %215, %220, %223 : vector<8x128xi1>, vector<8x128xf32>
    %225 = arith.mulf %222, %188 : vector<8x128xf32>
    %226 = arith.mulf %224, %193 : vector<8x128xf32>
    %227 = arith.addf %225, %226 : vector<8x128xf32>
    %228 = arith.mulf %222, %190 : vector<8x128xf32>
    %229 = arith.addf %228, %224 : vector<8x128xf32>
    %230 = arith.maximumf %214, %192 : vector<8x128xf32>
    %231 = vector.extract_strided_slice %52 {offsets = [32, 0], sizes = [8, 128], strides = [1, 1]} : vector<96x128xf32> to vector<8x128xf32>
    %232 = vector.extract_strided_slice %59 {offsets = [32, 0], sizes = [8, 128], strides = [1, 1]} : vector<96x128xf32> to vector<8x128xf32>
    %233 = vector.broadcast %10 : vector<1x128xf32> to vector<8x128xf32>
    %234 = arith.addf %233, %231 : vector<8x128xf32>
    %235 = arith.cmpf oge, %230, %234 : vector<8x128xf32>
    %236 = arith.subf %230, %234 : vector<8x128xf32>
    %237 = math.absf %236 : vector<8x128xf32>
    %cst_64 = arith.constant 0.000000e+00 : f32
    %238 = vector.broadcast %cst_64 : f32 to vector<8x128xf32>
    %239 = arith.subf %238, %237 : vector<8x128xf32>
    %240 = math.exp %239 : vector<8x128xf32>
    %cst_65 = arith.constant 1.000000e+00 : f32
    %241 = vector.broadcast %cst_65 : f32 to vector<8x128xf32>
    %242 = arith.select %235, %241, %240 : vector<8x128xi1>, vector<8x128xf32>
    %cst_66 = arith.constant 1.000000e+00 : f32
    %243 = vector.broadcast %cst_66 : f32 to vector<8x128xf32>
    %244 = arith.select %235, %240, %243 : vector<8x128xi1>, vector<8x128xf32>
    %245 = arith.mulf %242, %227 : vector<8x128xf32>
    %246 = arith.mulf %244, %232 : vector<8x128xf32>
    %247 = arith.addf %245, %246 : vector<8x128xf32>
    %c32 = arith.constant 32 : index
    %c0_67 = arith.constant 0 : index
    %248 = vector.load %arg15[%c32, %c0_67] : memref<96x128xf32, #tpu.memory_space<vmem>>, vector<8x128xf32>
    tpu.vector_store %arg15[%c32, %c0_67], %247 {strides = array<i32>} : memref<96x128xf32, #tpu.memory_space<vmem>>, vector<8x128xf32>,
    %249 = arith.mulf %242, %229 : vector<8x128xf32>
    %250 = arith.addf %249, %244 : vector<8x128xf32>
    %c32_68 = arith.constant 32 : index
    %c0_69 = arith.constant 0 : index
    %251 = vector.load %arg16[%c32_68, %c0_69] : memref<96x128xf32, #tpu.memory_space<vmem>>, vector<8x128xf32>
    tpu.vector_store %arg16[%c32_68, %c0_69], %250 {strides = array<i32>} : memref<96x128xf32, #tpu.memory_space<vmem>>, vector<8x128xf32>,
    %252 = vector.broadcast %9 : vector<1x128xf32> to vector<8x128xf32>
    %253 = arith.addf %252, %230 : vector<8x128xf32>
    %254 = arith.cmpf oge, %253, %231 : vector<8x128xf32>
    %255 = arith.subf %253, %231 : vector<8x128xf32>
    %256 = math.absf %255 : vector<8x128xf32>
    %cst_70 = arith.constant 0.000000e+00 : f32
    %257 = vector.broadcast %cst_70 : f32 to vector<8x128xf32>
    %258 = arith.subf %257, %256 : vector<8x128xf32>
    %259 = math.exp %258 : vector<8x128xf32>
    %cst_71 = arith.constant 1.000000e+00 : f32
    %260 = vector.broadcast %cst_71 : f32 to vector<8x128xf32>
    %261 = arith.select %254, %260, %259 : vector<8x128xi1>, vector<8x128xf32>
    %cst_72 = arith.constant 1.000000e+00 : f32
    %262 = vector.broadcast %cst_72 : f32 to vector<8x128xf32>
    %263 = arith.select %254, %259, %262 : vector<8x128xi1>, vector<8x128xf32>
    %264 = arith.mulf %261, %227 : vector<8x128xf32>
    %265 = arith.mulf %263, %232 : vector<8x128xf32>
    %266 = arith.addf %264, %265 : vector<8x128xf32>
    %267 = arith.mulf %261, %229 : vector<8x128xf32>
    %268 = arith.addf %267, %263 : vector<8x128xf32>
    %269 = arith.maximumf %253, %231 : vector<8x128xf32>
    %270 = vector.extract_strided_slice %52 {offsets = [40, 0], sizes = [8, 128], strides = [1, 1]} : vector<96x128xf32> to vector<8x128xf32>
    %271 = vector.extract_strided_slice %59 {offsets = [40, 0], sizes = [8, 128], strides = [1, 1]} : vector<96x128xf32> to vector<8x128xf32>
    %272 = vector.broadcast %10 : vector<1x128xf32> to vector<8x128xf32>
    %273 = arith.addf %272, %270 : vector<8x128xf32>
    %274 = arith.cmpf oge, %269, %273 : vector<8x128xf32>
    %275 = arith.subf %269, %273 : vector<8x128xf32>
    %276 = math.absf %275 : vector<8x128xf32>
    %cst_73 = arith.constant 0.000000e+00 : f32
    %277 = vector.broadcast %cst_73 : f32 to vector<8x128xf32>
    %278 = arith.subf %277, %276 : vector<8x128xf32>
    %279 = math.exp %278 : vector<8x128xf32>
    %cst_74 = arith.constant 1.000000e+00 : f32
    %280 = vector.broadcast %cst_74 : f32 to vector<8x128xf32>
    %281 = arith.select %274, %280, %279 : vector<8x128xi1>, vector<8x128xf32>
    %cst_75 = arith.constant 1.000000e+00 : f32
    %282 = vector.broadcast %cst_75 : f32 to vector<8x128xf32>
    %283 = arith.select %274, %279, %282 : vector<8x128xi1>, vector<8x128xf32>
    %284 = arith.mulf %281, %266 : vector<8x128xf32>
    %285 = arith.mulf %283, %271 : vector<8x128xf32>
    %286 = arith.addf %284, %285 : vector<8x128xf32>
    %c40 = arith.constant 40 : index
    %c0_76 = arith.constant 0 : index
    %287 = vector.load %arg15[%c40, %c0_76] : memref<96x128xf32, #tpu.memory_space<vmem>>, vector<8x128xf32>
    tpu.vector_store %arg15[%c40, %c0_76], %286 {strides = array<i32>} : memref<96x128xf32, #tpu.memory_space<vmem>>, vector<8x128xf32>,
    %288 = arith.mulf %281, %268 : vector<8x128xf32>
    %289 = arith.addf %288, %283 : vector<8x128xf32>
    %c40_77 = arith.constant 40 : index
    %c0_78 = arith.constant 0 : index
    %290 = vector.load %arg16[%c40_77, %c0_78] : memref<96x128xf32, #tpu.memory_space<vmem>>, vector<8x128xf32>
    tpu.vector_store %arg16[%c40_77, %c0_78], %289 {strides = array<i32>} : memref<96x128xf32, #tpu.memory_space<vmem>>, vector<8x128xf32>,
    %291 = vector.broadcast %9 : vector<1x128xf32> to vector<8x128xf32>
    %292 = arith.addf %291, %269 : vector<8x128xf32>
    %293 = arith.cmpf oge, %292, %270 : vector<8x128xf32>
    %294 = arith.subf %292, %270 : vector<8x128xf32>
    %295 = math.absf %294 : vector<8x128xf32>
    %cst_79 = arith.constant 0.000000e+00 : f32
    %296 = vector.broadcast %cst_79 : f32 to vector<8x128xf32>
    %297 = arith.subf %296, %295 : vector<8x128xf32>
    %298 = math.exp %297 : vector<8x128xf32>
    %cst_80 = arith.constant 1.000000e+00 : f32
    %299 = vector.broadcast %cst_80 : f32 to vector<8x128xf32>
    %300 = arith.select %293, %299, %298 : vector<8x128xi1>, vector<8x128xf32>
    %cst_81 = arith.constant 1.000000e+00 : f32
    %301 = vector.broadcast %cst_81 : f32 to vector<8x128xf32>
    %302 = arith.select %293, %298, %301 : vector<8x128xi1>, vector<8x128xf32>
    %303 = arith.mulf %300, %266 : vector<8x128xf32>
    %304 = arith.mulf %302, %271 : vector<8x128xf32>
    %305 = arith.addf %303, %304 : vector<8x128xf32>
    %306 = arith.mulf %300, %268 : vector<8x128xf32>
    %307 = arith.addf %306, %302 : vector<8x128xf32>
    %308 = arith.maximumf %292, %270 : vector<8x128xf32>
    %309 = vector.extract_strided_slice %52 {offsets = [48, 0], sizes = [8, 128], strides = [1, 1]} : vector<96x128xf32> to vector<8x128xf32>
    %310 = vector.extract_strided_slice %59 {offsets = [48, 0], sizes = [8, 128], strides = [1, 1]} : vector<96x128xf32> to vector<8x128xf32>
    %311 = vector.broadcast %10 : vector<1x128xf32> to vector<8x128xf32>
    %312 = arith.addf %311, %309 : vector<8x128xf32>
    %313 = arith.cmpf oge, %308, %312 : vector<8x128xf32>
    %314 = arith.subf %308, %312 : vector<8x128xf32>
    %315 = math.absf %314 : vector<8x128xf32>
    %cst_82 = arith.constant 0.000000e+00 : f32
    %316 = vector.broadcast %cst_82 : f32 to vector<8x128xf32>
    %317 = arith.subf %316, %315 : vector<8x128xf32>
    %318 = math.exp %317 : vector<8x128xf32>
    %cst_83 = arith.constant 1.000000e+00 : f32
    %319 = vector.broadcast %cst_83 : f32 to vector<8x128xf32>
    %320 = arith.select %313, %319, %318 : vector<8x128xi1>, vector<8x128xf32>
    %cst_84 = arith.constant 1.000000e+00 : f32
    %321 = vector.broadcast %cst_84 : f32 to vector<8x128xf32>
    %322 = arith.select %313, %318, %321 : vector<8x128xi1>, vector<8x128xf32>
    %323 = arith.mulf %320, %305 : vector<8x128xf32>
    %324 = arith.mulf %322, %310 : vector<8x128xf32>
    %325 = arith.addf %323, %324 : vector<8x128xf32>
    %c48 = arith.constant 48 : index
    %c0_85 = arith.constant 0 : index
    %326 = vector.load %arg15[%c48, %c0_85] : memref<96x128xf32, #tpu.memory_space<vmem>>, vector<8x128xf32>
    tpu.vector_store %arg15[%c48, %c0_85], %325 {strides = array<i32>} : memref<96x128xf32, #tpu.memory_space<vmem>>, vector<8x128xf32>,
    %327 = arith.mulf %320, %307 : vector<8x128xf32>
    %328 = arith.addf %327, %322 : vector<8x128xf32>
    %c48_86 = arith.constant 48 : index
    %c0_87 = arith.constant 0 : index
    %329 = vector.load %arg16[%c48_86, %c0_87] : memref<96x128xf32, #tpu.memory_space<vmem>>, vector<8x128xf32>
    tpu.vector_store %arg16[%c48_86, %c0_87], %328 {strides = array<i32>} : memref<96x128xf32, #tpu.memory_space<vmem>>, vector<8x128xf32>,
    %330 = vector.broadcast %9 : vector<1x128xf32> to vector<8x128xf32>
    %331 = arith.addf %330, %308 : vector<8x128xf32>
    %332 = arith.cmpf oge, %331, %309 : vector<8x128xf32>
    %333 = arith.subf %331, %309 : vector<8x128xf32>
    %334 = math.absf %333 : vector<8x128xf32>
    %cst_88 = arith.constant 0.000000e+00 : f32
    %335 = vector.broadcast %cst_88 : f32 to vector<8x128xf32>
    %336 = arith.subf %335, %334 : vector<8x128xf32>
    %337 = math.exp %336 : vector<8x128xf32>
    %cst_89 = arith.constant 1.000000e+00 : f32
    %338 = vector.broadcast %cst_89 : f32 to vector<8x128xf32>
    %339 = arith.select %332, %338, %337 : vector<8x128xi1>, vector<8x128xf32>
    %cst_90 = arith.constant 1.000000e+00 : f32
    %340 = vector.broadcast %cst_90 : f32 to vector<8x128xf32>
    %341 = arith.select %332, %337, %340 : vector<8x128xi1>, vector<8x128xf32>
    %342 = arith.mulf %339, %305 : vector<8x128xf32>
    %343 = arith.mulf %341, %310 : vector<8x128xf32>
    %344 = arith.addf %342, %343 : vector<8x128xf32>
    %345 = arith.mulf %339, %307 : vector<8x128xf32>
    %346 = arith.addf %345, %341 : vector<8x128xf32>
    %347 = arith.maximumf %331, %309 : vector<8x128xf32>
    %348 = vector.extract_strided_slice %52 {offsets = [56, 0], sizes = [8, 128], strides = [1, 1]} : vector<96x128xf32> to vector<8x128xf32>
    %349 = vector.extract_strided_slice %59 {offsets = [56, 0], sizes = [8, 128], strides = [1, 1]} : vector<96x128xf32> to vector<8x128xf32>
    %350 = vector.broadcast %10 : vector<1x128xf32> to vector<8x128xf32>
    %351 = arith.addf %350, %348 : vector<8x128xf32>
    %352 = arith.cmpf oge, %347, %351 : vector<8x128xf32>
    %353 = arith.subf %347, %351 : vector<8x128xf32>
    %354 = math.absf %353 : vector<8x128xf32>
    %cst_91 = arith.constant 0.000000e+00 : f32
    %355 = vector.broadcast %cst_91 : f32 to vector<8x128xf32>
    %356 = arith.subf %355, %354 : vector<8x128xf32>
    %357 = math.exp %356 : vector<8x128xf32>
    %cst_92 = arith.constant 1.000000e+00 : f32
    %358 = vector.broadcast %cst_92 : f32 to vector<8x128xf32>
    %359 = arith.select %352, %358, %357 : vector<8x128xi1>, vector<8x128xf32>
    %cst_93 = arith.constant 1.000000e+00 : f32
    %360 = vector.broadcast %cst_93 : f32 to vector<8x128xf32>
    %361 = arith.select %352, %357, %360 : vector<8x128xi1>, vector<8x128xf32>
    %362 = arith.mulf %359, %344 : vector<8x128xf32>
    %363 = arith.mulf %361, %349 : vector<8x128xf32>
    %364 = arith.addf %362, %363 : vector<8x128xf32>
    %c56 = arith.constant 56 : index
    %c0_94 = arith.constant 0 : index
    %365 = vector.load %arg15[%c56, %c0_94] : memref<96x128xf32, #tpu.memory_space<vmem>>, vector<8x128xf32>
    tpu.vector_store %arg15[%c56, %c0_94], %364 {strides = array<i32>} : memref<96x128xf32, #tpu.memory_space<vmem>>, vector<8x128xf32>,
    %366 = arith.mulf %359, %346 : vector<8x128xf32>
    %367 = arith.addf %366, %361 : vector<8x128xf32>
    %c56_95 = arith.constant 56 : index
    %c0_96 = arith.constant 0 : index
    %368 = vector.load %arg16[%c56_95, %c0_96] : memref<96x128xf32, #tpu.memory_space<vmem>>, vector<8x128xf32>
    tpu.vector_store %arg16[%c56_95, %c0_96], %367 {strides = array<i32>} : memref<96x128xf32, #tpu.memory_space<vmem>>, vector<8x128xf32>,
    %369 = vector.broadcast %9 : vector<1x128xf32> to vector<8x128xf32>
    %370 = arith.addf %369, %347 : vector<8x128xf32>
    %371 = arith.cmpf oge, %370, %348 : vector<8x128xf32>
    %372 = arith.subf %370, %348 : vector<8x128xf32>
    %373 = math.absf %372 : vector<8x128xf32>
    %cst_97 = arith.constant 0.000000e+00 : f32
    %374 = vector.broadcast %cst_97 : f32 to vector<8x128xf32>
    %375 = arith.subf %374, %373 : vector<8x128xf32>
    %376 = math.exp %375 : vector<8x128xf32>
    %cst_98 = arith.constant 1.000000e+00 : f32
    %377 = vector.broadcast %cst_98 : f32 to vector<8x128xf32>
    %378 = arith.select %371, %377, %376 : vector<8x128xi1>, vector<8x128xf32>
    %cst_99 = arith.constant 1.000000e+00 : f32
    %379 = vector.broadcast %cst_99 : f32 to vector<8x128xf32>
    %380 = arith.select %371, %376, %379 : vector<8x128xi1>, vector<8x128xf32>
    %381 = arith.mulf %378, %344 : vector<8x128xf32>
    %382 = arith.mulf %380, %349 : vector<8x128xf32>
    %383 = arith.addf %381, %382 : vector<8x128xf32>
    %384 = arith.mulf %378, %346 : vector<8x128xf32>
    %385 = arith.addf %384, %380 : vector<8x128xf32>
    %386 = arith.maximumf %370, %348 : vector<8x128xf32>
    %387 = vector.extract_strided_slice %52 {offsets = [64, 0], sizes = [8, 128], strides = [1, 1]} : vector<96x128xf32> to vector<8x128xf32>
    %388 = vector.extract_strided_slice %59 {offsets = [64, 0], sizes = [8, 128], strides = [1, 1]} : vector<96x128xf32> to vector<8x128xf32>
    %389 = vector.broadcast %10 : vector<1x128xf32> to vector<8x128xf32>
    %390 = arith.addf %389, %387 : vector<8x128xf32>
    %391 = arith.cmpf oge, %386, %390 : vector<8x128xf32>
    %392 = arith.subf %386, %390 : vector<8x128xf32>
    %393 = math.absf %392 : vector<8x128xf32>
    %cst_100 = arith.constant 0.000000e+00 : f32
    %394 = vector.broadcast %cst_100 : f32 to vector<8x128xf32>
    %395 = arith.subf %394, %393 : vector<8x128xf32>
    %396 = math.exp %395 : vector<8x128xf32>
    %cst_101 = arith.constant 1.000000e+00 : f32
    %397 = vector.broadcast %cst_101 : f32 to vector<8x128xf32>
    %398 = arith.select %391, %397, %396 : vector<8x128xi1>, vector<8x128xf32>
    %cst_102 = arith.constant 1.000000e+00 : f32
    %399 = vector.broadcast %cst_102 : f32 to vector<8x128xf32>
    %400 = arith.select %391, %396, %399 : vector<8x128xi1>, vector<8x128xf32>
    %401 = arith.mulf %398, %383 : vector<8x128xf32>
    %402 = arith.mulf %400, %388 : vector<8x128xf32>
    %403 = arith.addf %401, %402 : vector<8x128xf32>
    %c64 = arith.constant 64 : index
    %c0_103 = arith.constant 0 : index
    %404 = vector.load %arg15[%c64, %c0_103] : memref<96x128xf32, #tpu.memory_space<vmem>>, vector<8x128xf32>
    tpu.vector_store %arg15[%c64, %c0_103], %403 {strides = array<i32>} : memref<96x128xf32, #tpu.memory_space<vmem>>, vector<8x128xf32>,
    %405 = arith.mulf %398, %385 : vector<8x128xf32>
    %406 = arith.addf %405, %400 : vector<8x128xf32>
    %c64_104 = arith.constant 64 : index
    %c0_105 = arith.constant 0 : index
    %407 = vector.load %arg16[%c64_104, %c0_105] : memref<96x128xf32, #tpu.memory_space<vmem>>, vector<8x128xf32>
    tpu.vector_store %arg16[%c64_104, %c0_105], %406 {strides = array<i32>} : memref<96x128xf32, #tpu.memory_space<vmem>>, vector<8x128xf32>,
    %408 = vector.broadcast %9 : vector<1x128xf32> to vector<8x128xf32>
    %409 = arith.addf %408, %386 : vector<8x128xf32>
    %410 = arith.cmpf oge, %409, %387 : vector<8x128xf32>
    %411 = arith.subf %409, %387 : vector<8x128xf32>
    %412 = math.absf %411 : vector<8x128xf32>
    %cst_106 = arith.constant 0.000000e+00 : f32
    %413 = vector.broadcast %cst_106 : f32 to vector<8x128xf32>
    %414 = arith.subf %413, %412 : vector<8x128xf32>
    %415 = math.exp %414 : vector<8x128xf32>
    %cst_107 = arith.constant 1.000000e+00 : f32
    %416 = vector.broadcast %cst_107 : f32 to vector<8x128xf32>
    %417 = arith.select %410, %416, %415 : vector<8x128xi1>, vector<8x128xf32>
    %cst_108 = arith.constant 1.000000e+00 : f32
    %418 = vector.broadcast %cst_108 : f32 to vector<8x128xf32>
    %419 = arith.select %410, %415, %418 : vector<8x128xi1>, vector<8x128xf32>
    %420 = arith.mulf %417, %383 : vector<8x128xf32>
    %421 = arith.mulf %419, %388 : vector<8x128xf32>
    %422 = arith.addf %420, %421 : vector<8x128xf32>
    %423 = arith.mulf %417, %385 : vector<8x128xf32>
    %424 = arith.addf %423, %419 : vector<8x128xf32>
    %425 = arith.maximumf %409, %387 : vector<8x128xf32>
    %426 = vector.extract_strided_slice %52 {offsets = [72, 0], sizes = [8, 128], strides = [1, 1]} : vector<96x128xf32> to vector<8x128xf32>
    %427 = vector.extract_strided_slice %59 {offsets = [72, 0], sizes = [8, 128], strides = [1, 1]} : vector<96x128xf32> to vector<8x128xf32>
    %428 = vector.broadcast %10 : vector<1x128xf32> to vector<8x128xf32>
    %429 = arith.addf %428, %426 : vector<8x128xf32>
    %430 = arith.cmpf oge, %425, %429 : vector<8x128xf32>
    %431 = arith.subf %425, %429 : vector<8x128xf32>
    %432 = math.absf %431 : vector<8x128xf32>
    %cst_109 = arith.constant 0.000000e+00 : f32
    %433 = vector.broadcast %cst_109 : f32 to vector<8x128xf32>
    %434 = arith.subf %433, %432 : vector<8x128xf32>
    %435 = math.exp %434 : vector<8x128xf32>
    %cst_110 = arith.constant 1.000000e+00 : f32
    %436 = vector.broadcast %cst_110 : f32 to vector<8x128xf32>
    %437 = arith.select %430, %436, %435 : vector<8x128xi1>, vector<8x128xf32>
    %cst_111 = arith.constant 1.000000e+00 : f32
    %438 = vector.broadcast %cst_111 : f32 to vector<8x128xf32>
    %439 = arith.select %430, %435, %438 : vector<8x128xi1>, vector<8x128xf32>
    %440 = arith.mulf %437, %422 : vector<8x128xf32>
    %441 = arith.mulf %439, %427 : vector<8x128xf32>
    %442 = arith.addf %440, %441 : vector<8x128xf32>
    %c72 = arith.constant 72 : index
    %c0_112 = arith.constant 0 : index
    %443 = vector.load %arg15[%c72, %c0_112] : memref<96x128xf32, #tpu.memory_space<vmem>>, vector<8x128xf32>
    tpu.vector_store %arg15[%c72, %c0_112], %442 {strides = array<i32>} : memref<96x128xf32, #tpu.memory_space<vmem>>, vector<8x128xf32>,
    %444 = arith.mulf %437, %424 : vector<8x128xf32>
    %445 = arith.addf %444, %439 : vector<8x128xf32>
    %c72_113 = arith.constant 72 : index
    %c0_114 = arith.constant 0 : index
    %446 = vector.load %arg16[%c72_113, %c0_114] : memref<96x128xf32, #tpu.memory_space<vmem>>, vector<8x128xf32>
    tpu.vector_store %arg16[%c72_113, %c0_114], %445 {strides = array<i32>} : memref<96x128xf32, #tpu.memory_space<vmem>>, vector<8x128xf32>,
    %447 = vector.broadcast %9 : vector<1x128xf32> to vector<8x128xf32>
    %448 = arith.addf %447, %425 : vector<8x128xf32>
    %449 = arith.cmpf oge, %448, %426 : vector<8x128xf32>
    %450 = arith.subf %448, %426 : vector<8x128xf32>
    %451 = math.absf %450 : vector<8x128xf32>
    %cst_115 = arith.constant 0.000000e+00 : f32
    %452 = vector.broadcast %cst_115 : f32 to vector<8x128xf32>
    %453 = arith.subf %452, %451 : vector<8x128xf32>
    %454 = math.exp %453 : vector<8x128xf32>
    %cst_116 = arith.constant 1.000000e+00 : f32
    %455 = vector.broadcast %cst_116 : f32 to vector<8x128xf32>
    %456 = arith.select %449, %455, %454 : vector<8x128xi1>, vector<8x128xf32>
    %cst_117 = arith.constant 1.000000e+00 : f32
    %457 = vector.broadcast %cst_117 : f32 to vector<8x128xf32>
    %458 = arith.select %449, %454, %457 : vector<8x128xi1>, vector<8x128xf32>
    %459 = arith.mulf %456, %422 : vector<8x128xf32>
    %460 = arith.mulf %458, %427 : vector<8x128xf32>
    %461 = arith.addf %459, %460 : vector<8x128xf32>
    %462 = arith.mulf %456, %424 : vector<8x128xf32>
    %463 = arith.addf %462, %458 : vector<8x128xf32>
    %464 = arith.maximumf %448, %426 : vector<8x128xf32>
    %465 = vector.extract_strided_slice %52 {offsets = [80, 0], sizes = [8, 128], strides = [1, 1]} : vector<96x128xf32> to vector<8x128xf32>
    %466 = vector.extract_strided_slice %59 {offsets = [80, 0], sizes = [8, 128], strides = [1, 1]} : vector<96x128xf32> to vector<8x128xf32>
    %467 = vector.broadcast %10 : vector<1x128xf32> to vector<8x128xf32>
    %468 = arith.addf %467, %465 : vector<8x128xf32>
    %469 = arith.cmpf oge, %464, %468 : vector<8x128xf32>
    %470 = arith.subf %464, %468 : vector<8x128xf32>
    %471 = math.absf %470 : vector<8x128xf32>
    %cst_118 = arith.constant 0.000000e+00 : f32
    %472 = vector.broadcast %cst_118 : f32 to vector<8x128xf32>
    %473 = arith.subf %472, %471 : vector<8x128xf32>
    %474 = math.exp %473 : vector<8x128xf32>
    %cst_119 = arith.constant 1.000000e+00 : f32
    %475 = vector.broadcast %cst_119 : f32 to vector<8x128xf32>
    %476 = arith.select %469, %475, %474 : vector<8x128xi1>, vector<8x128xf32>
    %cst_120 = arith.constant 1.000000e+00 : f32
    %477 = vector.broadcast %cst_120 : f32 to vector<8x128xf32>
    %478 = arith.select %469, %474, %477 : vector<8x128xi1>, vector<8x128xf32>
    %479 = arith.mulf %476, %461 : vector<8x128xf32>
    %480 = arith.mulf %478, %466 : vector<8x128xf32>
    %481 = arith.addf %479, %480 : vector<8x128xf32>
    %c80 = arith.constant 80 : index
    %c0_121 = arith.constant 0 : index
    %482 = vector.load %arg15[%c80, %c0_121] : memref<96x128xf32, #tpu.memory_space<vmem>>, vector<8x128xf32>
    tpu.vector_store %arg15[%c80, %c0_121], %481 {strides = array<i32>} : memref<96x128xf32, #tpu.memory_space<vmem>>, vector<8x128xf32>,
    %483 = arith.mulf %476, %463 : vector<8x128xf32>
    %484 = arith.addf %483, %478 : vector<8x128xf32>
    %c80_122 = arith.constant 80 : index
    %c0_123 = arith.constant 0 : index
    %485 = vector.load %arg16[%c80_122, %c0_123] : memref<96x128xf32, #tpu.memory_space<vmem>>, vector<8x128xf32>
    tpu.vector_store %arg16[%c80_122, %c0_123], %484 {strides = array<i32>} : memref<96x128xf32, #tpu.memory_space<vmem>>, vector<8x128xf32>,
    %486 = vector.broadcast %9 : vector<1x128xf32> to vector<8x128xf32>
    %487 = arith.addf %486, %464 : vector<8x128xf32>
    %488 = arith.cmpf oge, %487, %465 : vector<8x128xf32>
    %489 = arith.subf %487, %465 : vector<8x128xf32>
    %490 = math.absf %489 : vector<8x128xf32>
    %cst_124 = arith.constant 0.000000e+00 : f32
    %491 = vector.broadcast %cst_124 : f32 to vector<8x128xf32>
    %492 = arith.subf %491, %490 : vector<8x128xf32>
    %493 = math.exp %492 : vector<8x128xf32>
    %cst_125 = arith.constant 1.000000e+00 : f32
    %494 = vector.broadcast %cst_125 : f32 to vector<8x128xf32>
    %495 = arith.select %488, %494, %493 : vector<8x128xi1>, vector<8x128xf32>
    %cst_126 = arith.constant 1.000000e+00 : f32
    %496 = vector.broadcast %cst_126 : f32 to vector<8x128xf32>
    %497 = arith.select %488, %493, %496 : vector<8x128xi1>, vector<8x128xf32>
    %498 = arith.mulf %495, %461 : vector<8x128xf32>
    %499 = arith.mulf %497, %466 : vector<8x128xf32>
    %500 = arith.addf %498, %499 : vector<8x128xf32>
    %501 = arith.mulf %495, %463 : vector<8x128xf32>
    %502 = arith.addf %501, %497 : vector<8x128xf32>
    %503 = arith.maximumf %487, %465 : vector<8x128xf32>
    %504 = vector.extract_strided_slice %52 {offsets = [88, 0], sizes = [8, 128], strides = [1, 1]} : vector<96x128xf32> to vector<8x128xf32>
    %505 = vector.extract_strided_slice %59 {offsets = [88, 0], sizes = [8, 128], strides = [1, 1]} : vector<96x128xf32> to vector<8x128xf32>
    %506 = vector.broadcast %10 : vector<1x128xf32> to vector<8x128xf32>
    %507 = arith.addf %506, %504 : vector<8x128xf32>
    %508 = arith.cmpf oge, %503, %507 : vector<8x128xf32>
    %509 = arith.subf %503, %507 : vector<8x128xf32>
    %510 = math.absf %509 : vector<8x128xf32>
    %cst_127 = arith.constant 0.000000e+00 : f32
    %511 = vector.broadcast %cst_127 : f32 to vector<8x128xf32>
    %512 = arith.subf %511, %510 : vector<8x128xf32>
    %513 = math.exp %512 : vector<8x128xf32>
    %cst_128 = arith.constant 1.000000e+00 : f32
    %514 = vector.broadcast %cst_128 : f32 to vector<8x128xf32>
    %515 = arith.select %508, %514, %513 : vector<8x128xi1>, vector<8x128xf32>
    %cst_129 = arith.constant 1.000000e+00 : f32
    %516 = vector.broadcast %cst_129 : f32 to vector<8x128xf32>
    %517 = arith.select %508, %513, %516 : vector<8x128xi1>, vector<8x128xf32>
    %518 = arith.mulf %515, %500 : vector<8x128xf32>
    %519 = arith.mulf %517, %505 : vector<8x128xf32>
    %520 = arith.addf %518, %519 : vector<8x128xf32>
    %c88 = arith.constant 88 : index
    %c0_130 = arith.constant 0 : index
    %521 = vector.load %arg15[%c88, %c0_130] : memref<96x128xf32, #tpu.memory_space<vmem>>, vector<8x128xf32>
    tpu.vector_store %arg15[%c88, %c0_130], %520 {strides = array<i32>} : memref<96x128xf32, #tpu.memory_space<vmem>>, vector<8x128xf32>,
    %522 = arith.mulf %515, %502 : vector<8x128xf32>
    %523 = arith.addf %522, %517 : vector<8x128xf32>
    %c88_131 = arith.constant 88 : index
    %c0_132 = arith.constant 0 : index
    %524 = vector.load %arg16[%c88_131, %c0_132] : memref<96x128xf32, #tpu.memory_space<vmem>>, vector<8x128xf32>
    tpu.vector_store %arg16[%c88_131, %c0_132], %523 {strides = array<i32>} : memref<96x128xf32, #tpu.memory_space<vmem>>, vector<8x128xf32>,
    %c0_133 = arith.constant 0 : index
    %c0_134 = arith.constant 0 : index
    %525 = vector.load %arg16[%c0_133, %c0_134] : memref<96x128xf32, #tpu.memory_space<vmem>>, vector<96x128xf32>
    %526 = tpu.reciprocal %525 {approx = true} : vector<96x128xf32> -> vector<96x128xf32>
    %527 = arith.mulf %525, %526 : vector<96x128xf32>
    %cst_135 = arith.constant 2.000000e+00 : f32
    %528 = vector.broadcast %cst_135 : f32 to vector<96x128xf32>
    %529 = arith.subf %528, %527 : vector<96x128xf32>
    %530 = arith.mulf %526, %529 : vector<96x128xf32>
    %c0_136 = arith.constant 0 : index
    %c0_137 = arith.constant 0 : index
    %531 = vector.load %arg15[%c0_136, %c0_137] : memref<96x128xf32, #tpu.memory_space<vmem>>, vector<96x128xf32>
    %532 = arith.mulf %531, %530 : vector<96x128xf32>
    %c0_138 = arith.constant 0 : index
    %c0_139 = arith.constant 0 : index
    %533 = vector.load %arg14[%c0_138, %c0_139] : memref<96x128xf32, #tpu.memory_space<vmem>>, vector<96x128xf32>
    %534 = arith.mulf %71, %532 : vector<96x128xf32>
    %c0_140 = arith.constant 0 : index
    %c0_141 = arith.constant 0 : index
    %c0_142 = arith.constant 0 : index
    %535 = vector.load %arg6[%c0_140, %c0_141, %c0_142] : memref<1x128x128xbf16, #tpu.memory_space<vmem>>, vector<1x128x128xbf16>
    %536 = vector.shape_cast %535 : vector<1x128x128xbf16> to vector<128x128xbf16>
    %537 = arith.truncf %534 : vector<96x128xf32> to vector<96x128xbf16>
    %cst_143 = arith.constant dense<0.000000e+00> : vector<96x128xf32>
    %538 = tpu.matmul %537, %536, %cst_143 {dimension_numbers = #tpu.dot_dimension_numbers<[1], [0], [0], [1], [0, 0, 1, 1], [], []>} : vector<96x128xbf16>, vector<128x128xbf16>, vector<96x128xf32> -> vector<96x128xf32>
    %539 = arith.addf %533, %538 : vector<96x128xf32>
    %cst_144 = arith.constant dense<0.000000e+00> : vector<96xf32>
    %540 = vector.multi_reduction <add>, %539, %cst_144 [1] : vector<96x128xf32> to vector<96xf32>
    %541 = vector.shape_cast %540 : vector<96xf32> to vector<96x1xf32>
    %cst_145 = arith.constant 1.280000e+02 : f32
    %542 = vector.broadcast %cst_145 : f32 to vector<96x1xf32>
    %543 = arith.divf %541, %542 : vector<96x1xf32>
    %544 = vector.broadcast %543 : vector<96x1xf32> to vector<96x128xf32>
    %545 = arith.subf %539, %544 : vector<96x128xf32>
    %546 = arith.mulf %545, %545 : vector<96x128xf32>
    %cst_146 = arith.constant dense<0.000000e+00> : vector<96xf32>
    %547 = vector.multi_reduction <add>, %546, %cst_146 [1] : vector<96x128xf32> to vector<96xf32>
    %548 = vector.shape_cast %547 : vector<96xf32> to vector<96x1xf32>
    %cst_147 = arith.constant 1.280000e+02 : f32
    %549 = vector.broadcast %cst_147 : f32 to vector<96x1xf32>
    %550 = arith.divf %548, %549 : vector<96x1xf32>
    %551 = vector.broadcast %543 : vector<96x1xf32> to vector<96x128xf32>
    %552 = arith.subf %539, %551 : vector<96x128xf32>
    %cst_148 = arith.constant 9.99999974E-6 : f32
    %553 = vector.broadcast %cst_148 : f32 to vector<96x1xf32>
    %554 = arith.addf %550, %553 : vector<96x1xf32>
    %555 = math.rsqrt %554 : vector<96x1xf32>
    %556 = vector.broadcast %555 : vector<96x1xf32> to vector<96x128xf32>
    %557 = arith.mulf %552, %556 : vector<96x128xf32>
    %558 = vector.broadcast %7 : vector<1x128xf32> to vector<96x128xf32>
    %559 = arith.mulf %557, %558 : vector<96x128xf32>
    %560 = vector.broadcast %8 : vector<1x128xf32> to vector<96x128xf32>
    %561 = arith.addf %559, %560 : vector<96x128xf32>
    %c8_i32_149 = arith.constant 8 : i32
    %562 = tpu.dynamic_rotate %561 by %c8_i32_149 dim 0 : vector<96x128xf32>, i32 -> vector<96x128xf32>
    %cst_150 = arith.constant 0.000000e+00 : f32
    %563 = vector.broadcast %cst_150 : f32 to vector<96x128xf32>
    %564 = arith.select %18, %563, %562 : vector<96x128xi1>, vector<96x128xf32>
    %565 = arith.subf %561, %564 : vector<96x128xf32>
    %566 = vector.broadcast %14 : vector<1x128xf32> to vector<96x128xf32>
    %567 = arith.mulf %566, %565 : vector<96x128xf32>
    %568 = arith.addf %564, %567 : vector<96x128xf32>
    %c0_151 = arith.constant 0 : index
    %c0_152 = arith.constant 0 : index
    %c0_153 = arith.constant 0 : index
    %569 = vector.load %arg7[%c0_151, %c0_152, %c0_153] : memref<1x128x512xbf16, #tpu.memory_space<vmem>>, vector<1x128x512xbf16>
    %570 = vector.shape_cast %569 : vector<1x128x512xbf16> to vector<128x512xbf16>
    %571 = arith.truncf %568 : vector<96x128xf32> to vector<96x128xbf16>
    %cst_154 = arith.constant dense<0.000000e+00> : vector<96x512xf32>
    %572 = tpu.matmul %571, %570, %cst_154 {dimension_numbers = #tpu.dot_dimension_numbers<[1], [0], [0], [1], [0, 0, 1, 1], [], []>} : vector<96x128xbf16>, vector<128x512xbf16>, vector<96x512xf32> -> vector<96x512xf32>
    %cst_155 = arith.constant 0.000000e+00 : f32
    %573 = vector.broadcast %cst_155 : f32 to vector<96x512xf32>
    %574 = arith.maximumf %572, %573 : vector<96x512xf32>
    %575 = arith.mulf %574, %574 : vector<96x512xf32>
    %c0_156 = arith.constant 0 : index
    %c0_157 = arith.constant 0 : index
    %c0_158 = arith.constant 0 : index
    %576 = vector.load %arg9[%c0_156, %c0_157, %c0_158] : memref<1x512x128xbf16, #tpu.memory_space<vmem>>, vector<1x512x128xbf16>
    %577 = vector.shape_cast %576 : vector<1x512x128xbf16> to vector<512x128xbf16>
    %578 = arith.truncf %575 : vector<96x512xf32> to vector<96x512xbf16>
    %cst_159 = arith.constant dense<0.000000e+00> : vector<96x128xf32>
    %579 = tpu.matmul %578, %577, %cst_159 {dimension_numbers = #tpu.dot_dimension_numbers<[1], [0], [0], [1], [0, 0, 1, 1], [], []>} : vector<96x512xbf16>, vector<512x128xbf16>, vector<96x128xf32> -> vector<96x128xf32>
    %580 = vector.broadcast %15 : vector<1x128xf32> to vector<96x128xf32>
    %581 = arith.mulf %580, %565 : vector<96x128xf32>
    %582 = arith.addf %564, %581 : vector<96x128xf32>
    %c0_160 = arith.constant 0 : index
    %c0_161 = arith.constant 0 : index
    %c0_162 = arith.constant 0 : index
    %583 = vector.load %arg8[%c0_160, %c0_161, %c0_162] : memref<1x128x128xbf16, #tpu.memory_space<vmem>>, vector<1x128x128xbf16>
    %584 = vector.shape_cast %583 : vector<1x128x128xbf16> to vector<128x128xbf16>
    %585 = arith.truncf %582 : vector<96x128xf32> to vector<96x128xbf16>
    %cst_163 = arith.constant dense<0.000000e+00> : vector<96x128xf32>
    %586 = tpu.matmul %585, %584, %cst_163 {dimension_numbers = #tpu.dot_dimension_numbers<[1], [0], [0], [1], [0, 0, 1, 1], [], []>} : vector<96x128xbf16>, vector<128x128xbf16>, vector<96x128xf32> -> vector<96x128xf32>
    %587 = arith.negf %586 : vector<96x128xf32>
    %588 = math.exp %587 : vector<96x128xf32>
    %cst_164 = arith.constant 1.000000e+00 : f32
    %589 = vector.broadcast %cst_164 : f32 to vector<96x128xf32>
    %590 = arith.addf %589, %588 : vector<96x128xf32>
    %591 = arith.divf %589, %590 : vector<96x128xf32>
    %592 = arith.mulf %591, %579 : vector<96x128xf32>
    %593 = arith.addf %539, %592 : vector<96x128xf32>
    %c0_165 = arith.constant 0 : index
    %c0_166 = arith.constant 0 : index
    %594 = vector.load %arg14[%c0_165, %c0_166] : memref<96x128xf32, #tpu.memory_space<vmem>>, vector<96x128xf32>
    tpu.vector_store %arg14[%c0_165, %c0_166], %593 {strides = array<i32>} : memref<96x128xf32, #tpu.memory_space<vmem>>, vector<96x128xf32>,
    %c1_i32 = arith.constant 1 : i32
    %595 = arith.cmpi eq, %arg0, %c1_i32 : i32
    %596 = arith.extui %595 : i1 to i32
    %c0_i32_167 = arith.constant 0 : i32
    %597 = arith.cmpi ne, %596, %c0_i32_167 : i32
    scf.if %597 {
      "tpu.region"() ({
        %631 = tpu.sem_alloc : memref<!tpu.dma_semaphore, #tpu.memory_space<semaphore_mem>>
        tpu.enqueue_dma source(%arg12 : memref<128x256xbf16, #tpu.memory_space<any>>) target(%arg17 : memref<128x256xbf16, #tpu.memory_space<vmem>>) target_semaphore(%631 : memref<!tpu.dma_semaphore, #tpu.memory_space<semaphore_mem>>)
        tpu.wait_dma2 semaphore(%631 : memref<!tpu.dma_semaphore, #tpu.memory_space<semaphore_mem>>) src(%arg12 : memref<128x256xbf16, #tpu.memory_space<any>>) dst(%arg17 : memref<128x256xbf16, #tpu.memory_space<vmem>>)
        tpu.yield
      }) : () -> ()
      %c8_168 = arith.constant 8 : index
      %c0_169 = arith.constant 0 : index
      %598 = vector.load %arg14[%c8_168, %c0_169] : memref<96x128xf32, #tpu.memory_space<vmem>>, vector<8x128xf32>
      %c32_170 = arith.constant 32 : index
      %c0_171 = arith.constant 0 : index
      %599 = vector.load %arg14[%c32_170, %c0_171] : memref<96x128xf32, #tpu.memory_space<vmem>>, vector<8x128xf32>
      %c56_172 = arith.constant 56 : index
      %c0_173 = arith.constant 0 : index
      %600 = vector.load %arg14[%c56_172, %c0_173] : memref<96x128xf32, #tpu.memory_space<vmem>>, vector<8x128xf32>
      %c80_174 = arith.constant 80 : index
      %c0_175 = arith.constant 0 : index
      %601 = vector.load %arg14[%c80_174, %c0_175] : memref<96x128xf32, #tpu.memory_space<vmem>>, vector<8x128xf32>
      %602 = tpu.concatenate %598, %599, %600, %601 in 0 : vector<8x128xf32>, vector<8x128xf32>, vector<8x128xf32>, vector<8x128xf32> -> vector<32x128xf32>
      %c0_176 = arith.constant 0 : index
      %c0_177 = arith.constant 0 : index
      %603 = vector.load %arg10[%c0_176, %c0_177] : memref<1x128xf32, #tpu.memory_space<vmem>>, vector<1x128xf32>
      %c0_178 = arith.constant 0 : index
      %c0_179 = arith.constant 0 : index
      %604 = vector.load %arg11[%c0_178, %c0_179] : memref<1x128xf32, #tpu.memory_space<vmem>>, vector<1x128xf32>
      %cst_180 = arith.constant dense<0.000000e+00> : vector<32xf32>
      %605 = vector.multi_reduction <add>, %602, %cst_180 [1] : vector<32x128xf32> to vector<32xf32>
      %606 = vector.shape_cast %605 : vector<32xf32> to vector<32x1xf32>
      %cst_181 = arith.constant 1.280000e+02 : f32
      %607 = vector.broadcast %cst_181 : f32 to vector<32x1xf32>
      %608 = arith.divf %606, %607 : vector<32x1xf32>
      %609 = vector.broadcast %608 : vector<32x1xf32> to vector<32x128xf32>
      %610 = arith.subf %602, %609 : vector<32x128xf32>
      %611 = arith.mulf %610, %610 : vector<32x128xf32>
      %cst_182 = arith.constant dense<0.000000e+00> : vector<32xf32>
      %612 = vector.multi_reduction <add>, %611, %cst_182 [1] : vector<32x128xf32> to vector<32xf32>
      %613 = vector.shape_cast %612 : vector<32xf32> to vector<32x1xf32>
      %cst_183 = arith.constant 1.280000e+02 : f32
      %614 = vector.broadcast %cst_183 : f32 to vector<32x1xf32>
      %615 = arith.divf %613, %614 : vector<32x1xf32>
      %616 = vector.broadcast %608 : vector<32x1xf32> to vector<32x128xf32>
      %617 = arith.subf %602, %616 : vector<32x128xf32>
      %cst_184 = arith.constant 9.99999974E-6 : f32
      %618 = vector.broadcast %cst_184 : f32 to vector<32x1xf32>
      %619 = arith.addf %615, %618 : vector<32x1xf32>
      %620 = math.rsqrt %619 : vector<32x1xf32>
      %621 = vector.broadcast %620 : vector<32x1xf32> to vector<32x128xf32>
      %622 = arith.mulf %617, %621 : vector<32x128xf32>
      %623 = vector.broadcast %603 : vector<1x128xf32> to vector<32x128xf32>
      %624 = arith.mulf %622, %623 : vector<32x128xf32>
      %625 = vector.broadcast %604 : vector<1x128xf32> to vector<32x128xf32>
      %626 = arith.addf %624, %625 : vector<32x128xf32>
      %627 = arith.truncf %626 : vector<32x128xf32> to vector<32x128xbf16>
      %c0_185 = arith.constant 0 : index
      %c0_186 = arith.constant 0 : index
      %628 = vector.load %arg17[%c0_185, %c0_186] : memref<128x256xbf16, #tpu.memory_space<vmem>>, vector<128x256xbf16>
      %cst_187 = arith.constant dense<0.000000e+00> : vector<32x256xf32>
      %629 = tpu.matmul %627, %628, %cst_187 {dimension_numbers = #tpu.dot_dimension_numbers<[1], [0], [0], [1], [0, 0, 1, 1], [], []>} : vector<32x128xbf16>, vector<128x256xbf16>, vector<32x256xf32> -> vector<32x256xf32>
      %c0_188 = arith.constant 0 : index
      %c0_189 = arith.constant 0 : index
      %630 = vector.load %arg13[%c0_188, %c0_189] : memref<32x256xf32, #tpu.memory_space<vmem>>, vector<32x256xf32>
      tpu.vector_store %arg13[%c0_188, %c0_189], %629 {strides = array<i32>} : memref<32x256xf32, #tpu.memory_space<vmem>>, vector<32x256xf32>,
    } else {
    }
    return
  }
  func.func @transform_1(%arg0: i32) -> (i32, i32, i32) {
    %c0_i32 = arith.constant 0 : i32
    %c0_i32_0 = arith.constant 0 : i32
    %c0_i32_1 = arith.constant 0 : i32
    return %arg0, %c0_i32, %c0_i32_0 : i32, i32, i32
  }
  func.func @transform_2(%arg0: i32) -> (i32, i32, i32) {
    %c0_i32 = arith.constant 0 : i32
    %c0_i32_0 = arith.constant 0 : i32
    %c0_i32_1 = arith.constant 0 : i32
    return %arg0, %c0_i32, %c0_i32_0 : i32, i32, i32
  }
  func.func @transform_3(%arg0: i32) -> (i32, i32, i32) {
    %c0_i32 = arith.constant 0 : i32
    %c0_i32_0 = arith.constant 0 : i32
    %c0_i32_1 = arith.constant 0 : i32
    return %arg0, %c0_i32, %c0_i32_0 : i32, i32, i32
  }
  func.func @transform_4(%arg0: i32) -> (i32, i32, i32) {
    %c0_i32 = arith.constant 0 : i32
    %c0_i32_0 = arith.constant 0 : i32
    %c0_i32_1 = arith.constant 0 : i32
    return %arg0, %c0_i32, %c0_i32_0 : i32, i32, i32
  }
  func.func @transform_5(%arg0: i32) -> (i32, i32, i32) {
    %c0_i32 = arith.constant 0 : i32
    %c0_i32_0 = arith.constant 0 : i32
    %c0_i32_1 = arith.constant 0 : i32
    return %arg0, %c0_i32, %c0_i32_0 : i32, i32, i32
  }
  func.func @transform_6(%arg0: i32) -> (i32, i32, i32) {
    %c0_i32 = arith.constant 0 : i32
    %c0_i32_0 = arith.constant 0 : i32
    %c0_i32_1 = arith.constant 0 : i32
    return %arg0, %c0_i32, %c0_i32_0 : i32, i32, i32
  }
  func.func @transform_7(%arg0: i32) -> (i32, i32, i32) {
    %c0_i32 = arith.constant 0 : i32
    %c0_i32_0 = arith.constant 0 : i32
    %c0_i32_1 = arith.constant 0 : i32
    return %arg0, %c0_i32, %c0_i32_0 : i32, i32, i32
  }
  func.func @transform_8(%arg0: i32) -> (i32, i32, i32) {
    %c0_i32 = arith.constant 0 : i32
    %c0_i32_0 = arith.constant 0 : i32
    %c0_i32_1 = arith.constant 0 : i32
    return %arg0, %c0_i32, %c0_i32_0 : i32, i32, i32
  }
  func.func @transform_9(%arg0: i32) -> (i32, i32) {
    %c0_i32 = arith.constant 0 : i32
    %c0_i32_0 = arith.constant 0 : i32
    %c0_i32_1 = arith.constant 0 : i32
    return %c0_i32, %c0_i32_0 : i32, i32
  }
  func.func @transform_10(%arg0: i32) -> (i32, i32) {
    %c0_i32 = arith.constant 0 : i32
    %c0_i32_0 = arith.constant 0 : i32
    %c0_i32_1 = arith.constant 0 : i32
    return %c0_i32, %c0_i32_0 : i32, i32
  }
  func.func @transform_12(%arg0: i32) -> (i32, i32) {
    %c0_i32 = arith.constant 0 : i32
    %c0_i32_0 = arith.constant 0 : i32
    %c0_i32_1 = arith.constant 0 : i32
    return %c0_i32, %c0_i32_0 : i32, i32
  }
}

</mosaic_0001>

<llo_original>
// kernel: decision_rwkv_forward.1
$region0: #{decision_rwkv_forward.1}
  #allocation0 [shape = 'u32[]', space=smem, size = 0x4, offset = 0x4, fixed_abs, tag = 'smem constant byte address 0x4 - core index']
  #allocation1 [shape = 'u32[144,128]{1,0:T(1,128)}', space=vmem, size = 0x12000, scoped, tag = 'internal scratch']
  #allocation2 [shape = 'f32[96,128]{1,0:T(8,128)}', space=vmem, size = 0xc000, scoped, tag = 'scratch operand']
  #allocation3 [shape = 'f32[96,128]{1,0:T(8,128)}', space=vmem, size = 0xc000, scoped, tag = 'scratch operand']
  #allocation4 [shape = 'f32[96,128]{1,0:T(8,128)}', space=vmem, size = 0xc000, scoped, tag = 'scratch operand']
  #allocation5 [shape = 'bf16[128,256]{1,0:T(16,128)(2,1)}', space=vmem, size = 0x10000, scoped, tag = 'scratch operand']
  #allocation18 [shape = 's32[]', space=sflag, size = 0x4, offset = 0, fixed_abs, tag = 'sflag constant byte address 0x0 - dummy sync flag']
  #allocation20 [shape = 's32[]', space=sflag, size = 0x4, offset = 0, fixed_abs, tag = 'sflag constant byte address 0x0 - dummy sync flag']
  %s0 = inlined_call_operand.vmem [shape: f32[96,128], index: 0, kind: input, shape index: {}]
  %s1 = inlined_call_operand.vmem [shape: f32[2,11,128], index: 1, kind: input, shape index: {}]
  %s2 = inlined_call_operand.hbm [shape: bf16[2,128,128], index: 2, kind: input, shape index: {}]
  %s3 = inlined_call_operand.hbm [shape: bf16[2,128,128], index: 3, kind: input, shape index: {}]
  %s4 = inlined_call_operand.hbm [shape: bf16[2,128,128], index: 4, kind: input, shape index: {}]
  %s5 = inlined_call_operand.hbm [shape: bf16[2,128,128], index: 5, kind: input, shape index: {}]
  %s6 = inlined_call_operand.vmem [shape: bf16[2,128,512], index: 6, kind: input, shape index: {}]
  %s7 = inlined_call_operand.hbm [shape: bf16[2,128,128], index: 7, kind: input, shape index: {}]
  %s8 = inlined_call_operand.hbm [shape: bf16[2,512,128], index: 8, kind: input, shape index: {}]
  %s9 = inlined_call_operand.vmem [shape: f32[1,128], index: 9, kind: input, shape index: {}]
  %s10 = inlined_call_operand.hbm [shape: f32[1,128], index: 10, kind: input, shape index: {}]
  %s11 = inlined_call_operand.hbm [shape: bf16[128,256], index: 11, kind: input, shape index: {}]
  %s12 = inlined_call_operand.vmem [shape: f32[32,256], index: 12, kind: output, shape index: {}]
  %s13 = sld [smem:[#allocation0]]
  $region145: #{decision_rwkv_forward.1} parent=0
    _
  %s15 = ssub.s32 1, %s13
  %s16 = scalar_select 0, %s15, %s13
  $region1: #{decision_rwkv_forward.1} parent=0
    #allocation6 [shape = 'u8[65536]{0}', space=vmem, size = 0x10000, scoped, tag = 'input window, operand 2']
    #allocation7 [shape = 's32[2]{0}', space=sflag, size = 0x8, scoped, tag = 'scoped memory for decision_rwkv_forward.1']
    #allocation8 [shape = 'u8[65536]{0}', space=vmem, size = 0x10000, scoped, tag = 'input window, operand 3']
    #allocation9 [shape = 's32[2]{0}', space=sflag, size = 0x8, scoped, tag = 'scoped memory for decision_rwkv_forward.1']
    #allocation10 [shape = 'u8[65536]{0}', space=vmem, size = 0x10000, scoped, tag = 'input window, operand 4']
    #allocation11 [shape = 'u8[65536]{0}', space=vmem, size = 0x10000, scoped, tag = 'input window, operand 5']
    #allocation12 [shape = 's32[2]{0}', space=sflag, size = 0x8, scoped, tag = 'scoped memory for decision_rwkv_forward.1']
    #allocation13 [shape = 'u8[65536]{0}', space=vmem, size = 0x10000, scoped, tag = 'input window, operand 7']
    #allocation14 [shape = 'u8[262144]{0}', space=vmem, size = 0x40000, scoped, tag = 'input window, operand 8']
    #allocation15 [shape = 's32[2]{0}', space=sflag, size = 0x8, scoped, tag = 'scoped memory for decision_rwkv_forward.1']
    #allocation16 [shape = 'u8[512]{0}', space=vmem, size = 0x400, scoped, tag = 'input window, operand 10, single buffered']
    %17 = vsyncpa [#allocation7], 0
    %s18 = scalar_lea.sflag [#allocation7], 1
    %19 = vsyncpa %s18, 0
    %20 = vsyncpa [#allocation9], 0
    %s21 = scalar_lea.sflag [#allocation9], 1
    %22 = vsyncpa %s21, 0
    %23 = vsyncpa [#allocation12], 0
    %s24 = scalar_lea.sflag [#allocation12], 1
    %25 = vsyncpa %s24, 0
    %26 = vsyncpa [#allocation15], 0
    %s27 = scalar_lea.sflag [#allocation15], 1
    %28 = vsyncpa %s27, 0
    loop: start=0, step=1, limit=4
    $region2: #{decision_rwkv_forward.1} parent=1 // loop_pre_header
      _
    $region3: #{decision_rwkv_forward.1} parent=1 // loop_header
      %s30 = sphi 0, %s34
      %p31 = scmp.ge.s32.totalorder %s30, 4
      %s40 = sphi 0, %s42
      %s43 = sphi 0, %s40
      %s44 = sphi 0, %s43
      %s60 = sphi 0, %s44
      %s66 = sphi 0, %s68
      %s69 = sphi 0, %s66
      %s70 = sphi 0, %s69
      %s86 = sphi 0, %s70
      %s92 = sphi 0, %s94
      %s95 = sphi 0, %s92
      %s96 = sphi 0, %s95
      %s112 = sphi 0, %s96
      %s118 = sphi 0, %s120
      %s121 = sphi 0, %s118
      %s122 = sphi 0, %s121
      %s138 = sphi 0, %s122
      %s144 = sphi 0, %s146
      %s147 = sphi 0, %s144
      %s148 = sphi 0, %s147
      %s164 = sphi 0, %s148
      %s170 = sphi 0, %s172
      %s173 = sphi 0, %s170
      %s174 = sphi 0, %s173
      %s190 = sphi 0, %s174
      %s196 = sphi 0, %s198
      %s199 = sphi 0, %s196
      %s200 = sphi 0, %s199
      %s216 = sphi 0, %s200
      %s222 = sphi 0, %s224
      %s225 = sphi 0, %s222
      %s226 = sphi 0, %s225
      %s242 = sphi 0, %s226
      %s246 = sphi 0, %s246
      %s248 = sphi 0, %s246
      %s249 = sphi 0, %s248
      %s263 = sphi 0, %s249
      %s267 = sphi 0, %s267
      %s269 = sphi 0, %s267
      %s270 = sphi 0, %s269
      %s284 = sphi 0, %s270
      %s288 = sphi 0, %s288
      %s290 = sphi 0, %s288
      %s291 = sphi 0, %s290
      %s305 = sphi 0, %s291
    $region4: #{decision_rwkv_forward.1} parent=1 // loop_header_branch
      %33 = sbr.rel (%p31) target = $region8
    $region5: #{decision_rwkv_forward.1} parent=1 // loop_body
      %s35 = ssub.s32 %s30, 1
      %s36 = ssub.s32 %s30, 2
      %s37 = sadd.s32 %s30, 1
      %s38 = ssub.s32 %s30, %s37
      %p39 = scmp.eq.s32.totalorder %s38, 0
      %s41 = sadd.s32 %s40, 1
      %s42 = scalar_select %p39, %s40, %s41
      %p45 = pneg %p39
      %p46 = scmp.eq.s32.totalorder %s30, 1
      %p47 = por %p45, %p46
      %p48 = scmp.ne.s32.totalorder %s40, %s43
      %p49 = scmp.eq.s32.totalorder %s30, 0
      %p50 = por %p48, %p49
      %p51 = scmp.ne.s32.totalorder %s40, %s43
      %p52 = scmp.eq.s32.totalorder %s35, 1
      %p53 = por %p51, %p52
      %p54 = scmp.ne.s32.totalorder %s43, %s44
      %p55 = scmp.eq.s32.totalorder %s35, 0
      %p56 = por %p54, %p55
      %p57 = scmp.ne.s32.totalorder %s43, %s44
      %p58 = scmp.eq.s32.totalorder %s36, 1
      %p59 = por %p57, %p58
      %p61 = scmp.ne.s32.totalorder %s44, %s60
      %p62 = scmp.eq.s32.totalorder %s36, 0
      %p63 = por %p61, %p62
      %s64 = ssub.s32 %s30, %s37
      %p65 = scmp.eq.s32.totalorder %s64, 0
      %s67 = sadd.s32 %s66, 1
      %s68 = scalar_select %p65, %s66, %s67
      %p71 = pneg %p65
      %p72 = scmp.eq.s32.totalorder %s30, 1
      %p73 = por %p71, %p72
      %p74 = scmp.ne.s32.totalorder %s66, %s69
      %p75 = scmp.eq.s32.totalorder %s30, 0
      %p76 = por %p74, %p75
      %p77 = scmp.ne.s32.totalorder %s66, %s69
      %p78 = scmp.eq.s32.totalorder %s35, 1
      %p79 = por %p77, %p78
      %p80 = scmp.ne.s32.totalorder %s69, %s70
      %p81 = scmp.eq.s32.totalorder %s35, 0
      %p82 = por %p80, %p81
      %p83 = scmp.ne.s32.totalorder %s69, %s70
      %p84 = scmp.eq.s32.totalorder %s36, 1
      %p85 = por %p83, %p84
      %p87 = scmp.ne.s32.totalorder %s70, %s86
      %p88 = scmp.eq.s32.totalorder %s36, 0
      %p89 = por %p87, %p88
      %s90 = ssub.s32 %s30, %s37
      %p91 = scmp.eq.s32.totalorder %s90, 0
      %s93 = sadd.s32 %s92, 1
      %s94 = scalar_select %p91, %s92, %s93
      %p97 = pneg %p91
      %p98 = scmp.eq.s32.totalorder %s30, 1
      %p99 = por %p97, %p98
      %p100 = scmp.ne.s32.totalorder %s92, %s95
      %p101 = scmp.eq.s32.totalorder %s30, 0
      %p102 = por %p100, %p101
      %p103 = scmp.ne.s32.totalorder %s92, %s95
      %p104 = scmp.eq.s32.totalorder %s35, 1
      %p105 = por %p103, %p104
      %p106 = scmp.ne.s32.totalorder %s95, %s96
      %p107 = scmp.eq.s32.totalorder %s35, 0
      %p108 = por %p106, %p107
      %p109 = scmp.ne.s32.totalorder %s95, %s96
      %p110 = scmp.eq.s32.totalorder %s36, 1
      %p111 = por %p109, %p110
      %p113 = scmp.ne.s32.totalorder %s96, %s112
      %p114 = scmp.eq.s32.totalorder %s36, 0
      %p115 = por %p113, %p114
      %s116 = ssub.s32 %s30, %s37
      %p117 = scmp.eq.s32.totalorder %s116, 0
      %s119 = sadd.s32 %s118, 1
      %s120 = scalar_select %p117, %s118, %s119
      %p123 = pneg %p117
      %p124 = scmp.eq.s32.totalorder %s30, 1
      %p125 = por %p123, %p124
      %p126 = scmp.ne.s32.totalorder %s118, %s121
      %p127 = scmp.eq.s32.totalorder %s30, 0
      %p128 = por %p126, %p127
      %p129 = scmp.ne.s32.totalorder %s118, %s121
      %p130 = scmp.eq.s32.totalorder %s35, 1
      %p131 = por %p129, %p130
      %p132 = scmp.ne.s32.totalorder %s121, %s122
      %p133 = scmp.eq.s32.totalorder %s35, 0
      %p134 = por %p132, %p133
      %p135 = scmp.ne.s32.totalorder %s121, %s122
      %p136 = scmp.eq.s32.totalorder %s36, 1
      %p137 = por %p135, %p136
      %p139 = scmp.ne.s32.totalorder %s122, %s138
      %p140 = scmp.eq.s32.totalorder %s36, 0
      %p141 = por %p139, %p140
      %s142 = ssub.s32 %s30, %s37
      %p143 = scmp.eq.s32.totalorder %s142, 0
      %s145 = sadd.s32 %s144, 1
      %s146 = scalar_select %p143, %s144, %s145
      %p149 = pneg %p143
      %p150 = scmp.eq.s32.totalorder %s30, 1
      %p151 = por %p149, %p150
      %p152 = scmp.ne.s32.totalorder %s144, %s147
      %p153 = scmp.eq.s32.totalorder %s30, 0
      %p154 = por %p152, %p153
      %p155 = scmp.ne.s32.totalorder %s144, %s147
      %p156 = scmp.eq.s32.totalorder %s35, 1
      %p157 = por %p155, %p156
      %p158 = scmp.ne.s32.totalorder %s147, %s148
      %p159 = scmp.eq.s32.totalorder %s35, 0
      %p160 = por %p158, %p159
      %p161 = scmp.ne.s32.totalorder %s147, %s148
      %p162 = scmp.eq.s32.totalorder %s36, 1
      %p163 = por %p161, %p162
      %p165 = scmp.ne.s32.totalorder %s148, %s164
      %p166 = scmp.eq.s32.totalorder %s36, 0
      %p167 = por %p165, %p166
      %s168 = ssub.s32 %s30, %s37
      %p169 = scmp.eq.s32.totalorder %s168, 0
      %s171 = sadd.s32 %s170, 1
      %s172 = scalar_select %p169, %s170, %s171
      %p175 = pneg %p169
      %p176 = scmp.eq.s32.totalorder %s30, 1
      %p177 = por %p175, %p176
      %p178 = scmp.ne.s32.totalorder %s170, %s173
      %p179 = scmp.eq.s32.totalorder %s30, 0
      %p180 = por %p178, %p179
      %p181 = scmp.ne.s32.totalorder %s170, %s173
      %p182 = scmp.eq.s32.totalorder %s35, 1
      %p183 = por %p181, %p182
      %p184 = scmp.ne.s32.totalorder %s173, %s174
      %p185 = scmp.eq.s32.totalorder %s35, 0
      %p186 = por %p184, %p185
      %p187 = scmp.ne.s32.totalorder %s173, %s174
      %p188 = scmp.eq.s32.totalorder %s36, 1
      %p189 = por %p187, %p188
      %p191 = scmp.ne.s32.totalorder %s174, %s190
      %p192 = scmp.eq.s32.totalorder %s36, 0
      %p193 = por %p191, %p192
      %s194 = ssub.s32 %s30, %s37
      %p195 = scmp.eq.s32.totalorder %s194, 0
      %s197 = sadd.s32 %s196, 1
      %s198 = scalar_select %p195, %s196, %s197
      %p201 = pneg %p195
      %p202 = scmp.eq.s32.totalorder %s30, 1
      %p203 = por %p201, %p202
      %p204 = scmp.ne.s32.totalorder %s196, %s199
      %p205 = scmp.eq.s32.totalorder %s30, 0
      %p206 = por %p204, %p205
      %p207 = scmp.ne.s32.totalorder %s196, %s199
      %p208 = scmp.eq.s32.totalorder %s35, 1
      %p209 = por %p207, %p208
      %p210 = scmp.ne.s32.totalorder %s199, %s200
      %p211 = scmp.eq.s32.totalorder %s35, 0
      %p212 = por %p210, %p211
      %p213 = scmp.ne.s32.totalorder %s199, %s200
      %p214 = scmp.eq.s32.totalorder %s36, 1
      %p215 = por %p213, %p214
      %p217 = scmp.ne.s32.totalorder %s200, %s216
      %p218 = scmp.eq.s32.totalorder %s36, 0
      %p219 = por %p217, %p218
      %s220 = ssub.s32 %s30, %s37
      %p221 = scmp.eq.s32.totalorder %s220, 0
      %s223 = sadd.s32 %s222, 1
      %s224 = scalar_select %p221, %s222, %s223
      %p227 = pneg %p221
      %p228 = scmp.eq.s32.totalorder %s30, 1
      %p229 = por %p227, %p228
      %p230 = scmp.ne.s32.totalorder %s222, %s225
      %p231 = scmp.eq.s32.totalorder %s30, 0
      %p232 = por %p230, %p231
      %p233 = scmp.ne.s32.totalorder %s222, %s225
      %p234 = scmp.eq.s32.totalorder %s35, 1
      %p235 = por %p233, %p234
      %p236 = scmp.ne.s32.totalorder %s225, %s226
      %p237 = scmp.eq.s32.totalorder %s35, 0
      %p238 = por %p236, %p237
      %p239 = scmp.ne.s32.totalorder %s225, %s226
      %p240 = scmp.eq.s32.totalorder %s36, 1
      %p241 = por %p239, %p240
      %p243 = scmp.ne.s32.totalorder %s226, %s242
      %p244 = scmp.eq.s32.totalorder %s36, 0
      %p245 = por %p243, %p244
      %s247 = sadd.s32 %s246, 1
      %p250 = scmp.eq.s32.totalorder %s30, 1
      %p251 = scmp.ne.s32.totalorder %s246, %s248
      %p252 = scmp.eq.s32.totalorder %s30, 0
      %p253 = por %p251, %p252
      %p254 = scmp.ne.s32.totalorder %s246, %s248
      %p255 = scmp.eq.s32.totalorder %s35, 1
      %p256 = por %p254, %p255
      %p257 = scmp.ne.s32.totalorder %s248, %s249
      %p258 = scmp.eq.s32.totalorder %s35, 0
      %p259 = por %p257, %p258
      %p260 = scmp.ne.s32.totalorder %s248, %s249
      %p261 = scmp.eq.s32.totalorder %s36, 1
      %p262 = por %p260, %p261
      %p264 = scmp.ne.s32.totalorder %s249, %s263
      %p265 = scmp.eq.s32.totalorder %s36, 0
      %p266 = por %p264, %p265
      %s268 = sadd.s32 %s267, 1
      %p271 = scmp.eq.s32.totalorder %s30, 1
      %p272 = scmp.ne.s32.totalorder %s267, %s269
      %p273 = scmp.eq.s32.totalorder %s30, 0
      %p274 = por %p272, %p273
      %p275 = scmp.ne.s32.totalorder %s267, %s269
      %p276 = scmp.eq.s32.totalorder %s35, 1
      %p277 = por %p275, %p276
      %p278 = scmp.ne.s32.totalorder %s269, %s270
      %p279 = scmp.eq.s32.totalorder %s35, 0
      %p280 = por %p278, %p279
      %p281 = scmp.ne.s32.totalorder %s269, %s270
      %p282 = scmp.eq.s32.totalorder %s36, 1
      %p283 = por %p281, %p282
      %p285 = scmp.ne.s32.totalorder %s270, %s284
      %p286 = scmp.eq.s32.totalorder %s36, 0
      %p287 = por %p285, %p286
      %s289 = sadd.s32 %s288, 1
      %p292 = scmp.eq.s32.totalorder %s30, 1
      %p293 = scmp.ne.s32.totalorder %s288, %s290
      %p294 = scmp.eq.s32.totalorder %s30, 0
      %p295 = por %p293, %p294
      %p296 = scmp.ne.s32.totalorder %s288, %s290
      %p297 = scmp.eq.s32.totalorder %s35, 1
      %p298 = por %p296, %p297
      %p299 = scmp.ne.s32.totalorder %s290, %s291
      %p300 = scmp.eq.s32.totalorder %s35, 0
      %p301 = por %p299, %p300
      %p302 = scmp.ne.s32.totalorder %s290, %s291
      %p303 = scmp.eq.s32.totalorder %s36, 1
      %p304 = por %p302, %p303
      %p306 = scmp.ne.s32.totalorder %s291, %s305
      %p307 = scmp.eq.s32.totalorder %s36, 0
      %p308 = por %p306, %p307
      %p309 = scmp.le.s32.totalorder 1, %s30
      %p310 = scmp.lt.s32.totalorder %s30, 3
      %p311 = pnand %p309, %p310
      %p312 = pneg %p311
      // Predicated region
      $region9: #{decision_rwkv_forward.1} parent=5 // pred_check
        _
      $region10: #{decision_rwkv_forward.1} parent=5 // pred_check_branch
        %314 = sbr.rel (%p311) target = $region12
      $region11: #{decision_rwkv_forward.1} parent=5 // pred_region
        %s315 = ssub.s32 %s30, 1
        // Predicated region
        $region13: #{decision_rwkv_forward.1} parent=11 // pred_check
          %p316 = pneg %p259
        $region14: #{decision_rwkv_forward.1} parent=11 // pred_check_branch
          %318 = sbr.rel (%p316) target = $region16
        $region15: #{decision_rwkv_forward.1} parent=11 // pred_region
          _
        $region16: #{decision_rwkv_forward.1} parent=11 // pred_fallthru
          _
        // Predicated region
        $region17: #{decision_rwkv_forward.1} parent=11 // pred_check
          %p319 = pneg %p280
        $region18: #{decision_rwkv_forward.1} parent=11 // pred_check_branch
          %321 = sbr.rel (%p319) target = $region20
        $region19: #{decision_rwkv_forward.1} parent=11 // pred_region
          %s323 = ssub.s32 16, 16
          %324 = vsyncadd [#allocation15], %s323
          %s326 = sshll.u32 [#allocation16], 4
          %s327 = int_to_ptr.vmem [resolvable:$true] %s326
          %329 = dma.hbm_to_vmem [thread:$0]  %s10, 16, %s327, [#allocation15]
        $region20: #{decision_rwkv_forward.1} parent=11 // pred_fallthru
          _
      $region12: #{decision_rwkv_forward.1} parent=5 // pred_fallthru
        _
      %p330 = scmp.lt.s32.totalorder %s30, 2
      // Predicated region
      $region21: #{decision_rwkv_forward.1} parent=5 // pred_check
        %p331 = pneg %p330
      $region22: #{decision_rwkv_forward.1} parent=5 // pred_check_branch
        %333 = sbr.rel (%p331) target = $region24
      $region23: #{decision_rwkv_forward.1} parent=5 // pred_region
        // Predicated region
        $region25: #{decision_rwkv_forward.1} parent=23 // pred_check
          %p334 = pneg %p50
        $region26: #{decision_rwkv_forward.1} parent=23 // pred_check_branch
          %336 = sbr.rel (%p334) target = $region28
        $region27: #{decision_rwkv_forward.1} parent=23 // pred_region
          %p337 = scmp.lt.s32.totalorder %s30, 1
          %s338 = scalar_select %p337, %s30, 1
          %s339 = smul.addr %s338, 2
          %s340 = smul.addr %s339, 8
          %s341 = scalar_lea.vmem %s1, %s340
        $region28: #{decision_rwkv_forward.1} parent=23 // pred_fallthru
          _
        // Predicated region
        $region29: #{decision_rwkv_forward.1} parent=23 // pred_check
          %p342 = pneg %p76
        $region30: #{decision_rwkv_forward.1} parent=23 // pred_check_branch
          %344 = sbr.rel (%p342) target = $region32
        $region31: #{decision_rwkv_forward.1} parent=23 // pred_region
          %s345 = sand.u32 %s66, 1
          %s346 = scalar_lea.sflag [#allocation7], %s345
          %s347 = sand.u32 %s66, 1
          %s348 = smul.addr %s347, 64
          %s349 = scalar_lea.vmem [#allocation6], %s348
          %s351 = ssub.s32 1024, 1024
          %352 = vsyncadd %s346, %s351
          %s353 = smul.addr %s30, 16
          %s354 = smul.addr %s353, 64
          %s355 = scalar_lea.hbm %s2, %s354
          %s356 = sshll.u32 %s349, 4
          %s357 = int_to_ptr.vmem [resolvable:$true] %s356
          %362 = dma.hbm_to_vmem [thread:$0]  %s355, 1024, %s357, %s346, 64, 64, 4
        $region32: #{decision_rwkv_forward.1} parent=23 // pred_fallthru
          _
        // Predicated region
        $region33: #{decision_rwkv_forward.1} parent=23 // pred_check
          %p363 = pneg %p102
        $region34: #{decision_rwkv_forward.1} parent=23 // pred_check_branch
          %365 = sbr.rel (%p363) target = $region36
        $region35: #{decision_rwkv_forward.1} parent=23 // pred_region
          %s366 = sand.u32 %s30, 1
          %s367 = scalar_lea.sflag [#allocation9], %s366
          %s368 = sand.u32 %s92, 1
          %s369 = smul.addr %s368, 64
          %s370 = scalar_lea.vmem [#allocation8], %s369
          %s372 = ssub.s32 1024, 1024
          %373 = vsyncadd %s367, %s372
          %s374 = smul.addr %s30, 16
          %s375 = smul.addr %s374, 64
          %s376 = scalar_lea.hbm %s3, %s375
          %s377 = sshll.u32 %s370, 4
          %s378 = int_to_ptr.vmem [resolvable:$true] %s377
          %383 = dma.hbm_to_vmem [thread:$0]  %s376, 1024, %s378, %s367, 64, 64, 4
        $region36: #{decision_rwkv_forward.1} parent=23 // pred_fallthru
          _
        // Predicated region
        $region37: #{decision_rwkv_forward.1} parent=23 // pred_check
          %p384 = pneg %p128
        $region38: #{decision_rwkv_forward.1} parent=23 // pred_check_branch
          %386 = sbr.rel (%p384) target = $region40
        $region39: #{decision_rwkv_forward.1} parent=23 // pred_region
          %s387 = sand.u32 %s30, 1
          %s388 = scalar_lea.sflag [#allocation9], %s387
          %s389 = sand.u32 %s118, 1
          %s390 = smul.addr %s389, 64
          %s391 = scalar_lea.vmem [#allocation10], %s390
          %s393 = ssub.s32 1024, 1024
          %394 = vsyncadd %s388, %s393
          %s395 = smul.addr %s30, 16
          %s396 = smul.addr %s395, 64
          %s397 = scalar_lea.hbm %s4, %s396
          %s398 = sshll.u32 %s391, 4
          %s399 = int_to_ptr.vmem [resolvable:$true] %s398
          %404 = dma.hbm_to_vmem [thread:$0]  %s397, 1024, %s399, %s388, 64, 64, 4
        $region40: #{decision_rwkv_forward.1} parent=23 // pred_fallthru
          _
        // Predicated region
        $region41: #{decision_rwkv_forward.1} parent=23 // pred_check
          %p405 = pneg %p154
        $region42: #{decision_rwkv_forward.1} parent=23 // pred_check_branch
          %407 = sbr.rel (%p405) target = $region44
        $region43: #{decision_rwkv_forward.1} parent=23 // pred_region
          %s408 = sand.u32 %s30, 1
          %s409 = scalar_lea.sflag [#allocation12], %s408
          %s410 = sand.u32 %s144, 1
          %s411 = smul.addr %s410, 64
          %s412 = scalar_lea.vmem [#allocation11], %s411
          %s414 = ssub.s32 1024, 1024
          %415 = vsyncadd %s409, %s414
          %s416 = smul.addr %s30, 16
          %s417 = smul.addr %s416, 64
          %s418 = scalar_lea.hbm %s5, %s417
          %s419 = sshll.u32 %s412, 4
          %s420 = int_to_ptr.vmem [resolvable:$true] %s419
          %425 = dma.hbm_to_vmem [thread:$0]  %s418, 1024, %s420, %s409, 64, 64, 4
        $region44: #{decision_rwkv_forward.1} parent=23 // pred_fallthru
          _
        // Predicated region
        $region45: #{decision_rwkv_forward.1} parent=23 // pred_check
          %p426 = pneg %p180
        $region46: #{decision_rwkv_forward.1} parent=23 // pred_check_branch
          %428 = sbr.rel (%p426) target = $region48
        $region47: #{decision_rwkv_forward.1} parent=23 // pred_region
          %p429 = scmp.lt.s32.totalorder %s30, 1
          %s430 = scalar_select %p429, %s30, 1
          %s431 = smul.addr %s430, 64
          %s432 = smul.addr %s431, 4
          %s433 = scalar_lea.vmem %s6, %s432
        $region48: #{decision_rwkv_forward.1} parent=23 // pred_fallthru
          _
        // Predicated region
        $region49: #{decision_rwkv_forward.1} parent=23 // pred_check
          %p434 = pneg %p206
        $region50: #{decision_rwkv_forward.1} parent=23 // pred_check_branch
          %436 = sbr.rel (%p434) target = $region52
        $region51: #{decision_rwkv_forward.1} parent=23 // pred_region
          %s437 = sand.u32 %s30, 1
          %s438 = scalar_lea.sflag [#allocation12], %s437
          %s439 = sand.u32 %s196, 1
          %s440 = smul.addr %s439, 64
          %s441 = scalar_lea.vmem [#allocation13], %s440
          %s443 = ssub.s32 1024, 1024
          %444 = vsyncadd %s438, %s443
          %s445 = smul.addr %s30, 16
          %s446 = smul.addr %s445, 64
          %s447 = scalar_lea.hbm %s7, %s446
          %s448 = sshll.u32 %s441, 4
          %s449 = int_to_ptr.vmem [resolvable:$true] %s448
          %454 = dma.hbm_to_vmem [thread:$0]  %s447, 1024, %s449, %s438, 64, 64, 4
        $region52: #{decision_rwkv_forward.1} parent=23 // pred_fallthru
          _
        // Predicated region
        $region53: #{decision_rwkv_forward.1} parent=23 // pred_check
          %p455 = pneg %p232
        $region54: #{decision_rwkv_forward.1} parent=23 // pred_check_branch
          %457 = sbr.rel (%p455) target = $region56
        $region55: #{decision_rwkv_forward.1} parent=23 // pred_region
          %s458 = sand.u32 %s30, 1
          %s459 = scalar_lea.sflag [#allocation15], %s458
          %s460 = sand.u32 %s222, 1
          %s461 = smul.addr %s460, 256
          %s462 = scalar_lea.vmem [#allocation14], %s461
          %s464 = ssub.s32 4096, 4096
          %465 = vsyncadd %s459, %s464
          %s466 = smul.addr %s30, 64
          %s467 = smul.addr %s466, 64
          %s468 = scalar_lea.hbm %s8, %s467
          %s469 = sshll.u32 %s462, 4
          %s470 = int_to_ptr.vmem [resolvable:$true] %s469
          %475 = dma.hbm_to_vmem [thread:$0]  %s468, 4096, %s470, %s459, 64, 64, 4
        $region56: #{decision_rwkv_forward.1} parent=23 // pred_fallthru
          _
      $region24: #{decision_rwkv_forward.1} parent=5 // pred_fallthru
        _
      %p476 = scmp.le.s32.totalorder 1, %s30
      %p477 = scmp.lt.s32.totalorder %s30, 3
      %p478 = pnand %p476, %p477
      %p479 = pneg %p478
      // Predicated region
      $region57: #{decision_rwkv_forward.1} parent=5 // pred_check
        _
      $region58: #{decision_rwkv_forward.1} parent=5 // pred_check_branch
        %481 = sbr.rel (%p478) target = $region60
      $region59: #{decision_rwkv_forward.1} parent=5 // pred_region
        %s482 = ssub.s32 %s30, 1
        %s483 = sand.u32 %s69, 1
        %s484 = scalar_lea.sflag [#allocation7], %s483
        %s485 = sand.u32 %s69, 1
        %s486 = smul.addr %s485, 64
        %s487 = scalar_lea.vmem [#allocation6], %s486
        // Predicated region
        $region61: #{decision_rwkv_forward.1} parent=59 // pred_check
          %p488 = pneg %p82
        $region62: #{decision_rwkv_forward.1} parent=59 // pred_check_branch
          %490 = sbr.rel (%p488) target = $region64
        $region63: #{decision_rwkv_forward.1} parent=59 // pred_region
          %491 = dma.done %s484, 1024
        $region64: #{decision_rwkv_forward.1} parent=59 // pred_fallthru
          _
        %s492 = sand.u32 %s35, 1
        %s493 = scalar_lea.sflag [#allocation9], %s492
        %s494 = sand.u32 %s95, 1
        %s495 = smul.addr %s494, 64
        %s496 = scalar_lea.vmem [#allocation8], %s495
        // Predicated region
        $region65: #{decision_rwkv_forward.1} parent=59 // pred_check
          %p497 = pneg %p108
        $region66: #{decision_rwkv_forward.1} parent=59 // pred_check_branch
          %499 = sbr.rel (%p497) target = $region68
        $region67: #{decision_rwkv_forward.1} parent=59 // pred_region
          %500 = dma.done %s493, 1024
        $region68: #{decision_rwkv_forward.1} parent=59 // pred_fallthru
          _
        %s501 = sand.u32 %s35, 1
        %s502 = scalar_lea.sflag [#allocation9], %s501
        %s503 = sand.u32 %s121, 1
        %s504 = smul.addr %s503, 64
        %s505 = scalar_lea.vmem [#allocation10], %s504
        // Predicated region
        $region69: #{decision_rwkv_forward.1} parent=59 // pred_check
          %p506 = pneg %p134
        $region70: #{decision_rwkv_forward.1} parent=59 // pred_check_branch
          %508 = sbr.rel (%p506) target = $region72
        $region71: #{decision_rwkv_forward.1} parent=59 // pred_region
          %509 = dma.done %s502, 1024
        $region72: #{decision_rwkv_forward.1} parent=59 // pred_fallthru
          _
        %s510 = sand.u32 %s35, 1
        %s511 = scalar_lea.sflag [#allocation12], %s510
        %s512 = sand.u32 %s147, 1
        %s513 = smul.addr %s512, 64
        %s514 = scalar_lea.vmem [#allocation11], %s513
        // Predicated region
        $region73: #{decision_rwkv_forward.1} parent=59 // pred_check
          %p515 = pneg %p160
        $region74: #{decision_rwkv_forward.1} parent=59 // pred_check_branch
          %517 = sbr.rel (%p515) target = $region76
        $region75: #{decision_rwkv_forward.1} parent=59 // pred_region
          %518 = dma.done %s511, 1024
        $region76: #{decision_rwkv_forward.1} parent=59 // pred_fallthru
          _
        %s519 = sand.u32 %s35, 1
        %s520 = scalar_lea.sflag [#allocation12], %s519
        %s521 = sand.u32 %s199, 1
        %s522 = smul.addr %s521, 64
        %s523 = scalar_lea.vmem [#allocation13], %s522
        // Predicated region
        $region77: #{decision_rwkv_forward.1} parent=59 // pred_check
          %p524 = pneg %p212
        $region78: #{decision_rwkv_forward.1} parent=59 // pred_check_branch
          %526 = sbr.rel (%p524) target = $region80
        $region79: #{decision_rwkv_forward.1} parent=59 // pred_region
          %527 = dma.done %s520, 1024
        $region80: #{decision_rwkv_forward.1} parent=59 // pred_fallthru
          _
        %s528 = sand.u32 %s35, 1
        %s529 = scalar_lea.sflag [#allocation15], %s528
        %s530 = sand.u32 %s225, 1
        %s531 = smul.addr %s530, 256
        %s532 = scalar_lea.vmem [#allocation14], %s531
        // Predicated region
        $region81: #{decision_rwkv_forward.1} parent=59 // pred_check
          %p533 = pneg %p238
        $region82: #{decision_rwkv_forward.1} parent=59 // pred_check_branch
          %535 = sbr.rel (%p533) target = $region84
        $region83: #{decision_rwkv_forward.1} parent=59 // pred_region
          %536 = dma.done %s529, 4096
        $region84: #{decision_rwkv_forward.1} parent=59 // pred_fallthru
          _
        // Predicated region
        $region85: #{decision_rwkv_forward.1} parent=59 // pred_check
          %p537 = pneg %p280
        $region86: #{decision_rwkv_forward.1} parent=59 // pred_check_branch
          %539 = sbr.rel (%p537) target = $region88
        $region87: #{decision_rwkv_forward.1} parent=59 // pred_region
          %540 = dma.done [#allocation15], 16
        $region88: #{decision_rwkv_forward.1} parent=59 // pred_fallthru
          _
        %p541 = scmp.lt.s32.totalorder %s35, 1
        %s542 = scalar_select %p541, %s35, 1
        %s543 = smul.addr %s542, 2
        %s544 = smul.addr %s543, 8
        %s545 = scalar_lea.vmem %s1, %s544
        %p546 = pneg %p56
        %p547 = pneg %p53
        %s548 = sand.u32 %s69, 1
        %s549 = scalar_lea.sflag [#allocation7], %s548
        %s550 = sand.u32 %s69, 1
        %s551 = smul.addr %s550, 64
        %s552 = scalar_lea.vmem [#allocation6], %s551
        %p553 = pneg %p82
        %p554 = pneg %p79
        %s555 = sand.u32 %s35, 1
        %s556 = scalar_lea.sflag [#allocation9], %s555
        %s557 = sand.u32 %s95, 1
        %s558 = smul.addr %s557, 64
        %s559 = scalar_lea.vmem [#allocation8], %s558
        %p560 = pneg %p108
        %p561 = pneg %p105
        %s562 = sand.u32 %s35, 1
        %s563 = scalar_lea.sflag [#allocation9], %s562
        %s564 = sand.u32 %s121, 1
        %s565 = smul.addr %s564, 64
        %s566 = scalar_lea.vmem [#allocation10], %s565
        %p567 = pneg %p134
        %p568 = pneg %p131
        %s569 = sand.u32 %s35, 1
        %s570 = scalar_lea.sflag [#allocation12], %s569
        %s571 = sand.u32 %s147, 1
        %s572 = smul.addr %s571, 64
        %s573 = scalar_lea.vmem [#allocation11], %s572
        %p574 = pneg %p160
        %p575 = pneg %p157
        %p576 = scmp.lt.s32.totalorder %s35, 1
        %s577 = scalar_select %p576, %s35, 1
        %s578 = smul.addr %s577, 64
        %s579 = smul.addr %s578, 4
        %s580 = scalar_lea.vmem %s6, %s579
        %p581 = pneg %p186
        %p582 = pneg %p183
        %s583 = sand.u32 %s35, 1
        %s584 = scalar_lea.sflag [#allocation12], %s583
        %s585 = sand.u32 %s199, 1
        %s586 = smul.addr %s585, 64
        %s587 = scalar_lea.vmem [#allocation13], %s586
        %p588 = pneg %p212
        %p589 = pneg %p209
        %s590 = sand.u32 %s35, 1
        %s591 = scalar_lea.sflag [#allocation15], %s590
        %s592 = sand.u32 %s225, 1
        %s593 = smul.addr %s592, 256
        %s594 = scalar_lea.vmem [#allocation14], %s593
        %p595 = pneg %p238
        %p596 = pneg %p235
        %p597 = pneg %p259
        %p598 = pneg %p256
        %p599 = pneg %p280
        %p600 = pneg %p277
        %p601 = pneg %p301
        %p602 = pneg %p298
        %p603 = scmp.lt.s32.totalorder %s35, 1
        %s604 = scalar_select %p603, %s35, 1
        %s605 = smul.addr %s604, 2
        %s606 = smul.addr %s605, 8
        %s607 = scalar_lea.vmem %s1, %s606
        %p608 = scmp.lt.s32.totalorder %s35, 1
        %s609 = scalar_select %p608, %s35, 1
        %s610 = smul.addr %s609, 64
        %s611 = smul.addr %s610, 4
        %s612 = scalar_lea.vmem %s6, %s611
        %p614 = scmp.eq.s32.totalorder %s35, 0
        // Predicated region
        $region89: #{decision_rwkv_forward.1} parent=59 // pred_check
          %p615 = pneg %p614
        $region90: #{decision_rwkv_forward.1} parent=59 // pred_check_branch
          %617 = sbr.rel (%p615) target = $region92
        $region91: #{decision_rwkv_forward.1} parent=59 // pred_region
          $region93: #{decision_rwkv_forward.1} parent=91
            #allocation17 [shape = 's32[1]{0}', space=sflag, size = 0x4, scoped, tag = 'scoped memory for decision_rwkv_forward.1']
            %p619 = scmp.lt.u32.totalorder 96, 8
            %p620 = pneg %p619
            // Predicated region
            $region94: #{decision_rwkv_forward.1} parent=93 // pred_check
              _
            $region95: #{decision_rwkv_forward.1} parent=93 // pred_check_branch
              %622 = sbr.rel (%p619) target = $region97
            $region96: #{decision_rwkv_forward.1} parent=93 // pred_region
              %s637 = sand.u32 96, 7
              %p638 = scmp.eq.s32.totalorder %s637, 0
              // Predicated region
              $region109: #{decision_rwkv_forward.1} parent=96 // pred_check
                %p639 = pneg %p638
              $region110: #{decision_rwkv_forward.1} parent=96 // pred_check_branch
                %641 = sbr.rel (%p639) target = $region112
              $region111: #{decision_rwkv_forward.1} parent=96 // pred_region
                loop: start=0, step=1, limit=1
                $region113: #{decision_rwkv_forward.1} parent=111 // loop_pre_header
                  _
                $region114: #{decision_rwkv_forward.1} parent=111 // loop_header
                  %s643 = sphi 0, %s647
                  %p644 = scmp.ge.s32.totalorder %s643, 1
                  %s648 = sphi %s0, %s0
                  %s649 = sphi [#allocation2], [#allocation2]
                $region115: #{decision_rwkv_forward.1} parent=111 // loop_header_branch
                  %646 = sbr.rel (%p644) target = $region119
                $region116: #{decision_rwkv_forward.1} parent=111 // loop_body
                  %v650 = vld [vmem:[%s648] sm:$0xff]
                  %651 = vst [vmem:[%s649] sm:$0xff] %v650
                  %v652 = vld [vmem:[%s648 + $0x8] sm:$0xff]
                  %653 = vst [vmem:[%s649 + $0x8] sm:$0xff] %v652
                  %v654 = vld [vmem:[%s648 + $0x10] sm:$0xff]
                  %655 = vst [vmem:[%s649 + $0x10] sm:$0xff] %v654
                  %v656 = vld [vmem:[%s648 + $0x18] sm:$0xff]
                  %657 = vst [vmem:[%s649 + $0x18] sm:$0xff] %v656
                  %v658 = vld [vmem:[%s648 + $0x20] sm:$0xff]
                  %659 = vst [vmem:[%s649 + $0x20] sm:$0xff] %v658
                  %v660 = vld [vmem:[%s648 + $0x28] sm:$0xff]
                  %661 = vst [vmem:[%s649 + $0x28] sm:$0xff] %v660
                  %v662 = vld [vmem:[%s648 + $0x30] sm:$0xff]
                  %663 = vst [vmem:[%s649 + $0x30] sm:$0xff] %v662
                  %v664 = vld [vmem:[%s648 + $0x38] sm:$0xff]
                  %665 = vst [vmem:[%s649 + $0x38] sm:$0xff] %v664
                  %v666 = vld [vmem:[%s648 + $0x40] sm:$0xff]
                  %667 = vst [vmem:[%s649 + $0x40] sm:$0xff] %v666
                  %v668 = vld [vmem:[%s648 + $0x48] sm:$0xff]
                  %669 = vst [vmem:[%s649 + $0x48] sm:$0xff] %v668
                  %v670 = vld [vmem:[%s648 + $0x50] sm:$0xff]
                  %671 = vst [vmem:[%s649 + $0x50] sm:$0xff] %v670
                  %v672 = vld [vmem:[%s648 + $0x58] sm:$0xff]
                  %673 = vst [vmem:[%s649 + $0x58] sm:$0xff] %v672
                $region117: #{decision_rwkv_forward.1} parent=111 // loop_footer
                  %s647 = sadd.s32 1, %s643
                $region118: #{decision_rwkv_forward.1} parent=111 // loop_footer_branch
                  %642 = sbr.rel target = $region114
                $region119: #{decision_rwkv_forward.1} parent=111 // loop_exit
                  _
              $region112: #{decision_rwkv_forward.1} parent=96 // pred_fallthru
                _
              %p674 = pneg %p638
              // Predicated region
              $region120: #{decision_rwkv_forward.1} parent=96 // pred_check
                _
              $region121: #{decision_rwkv_forward.1} parent=96 // pred_check_branch
                %676 = sbr.rel (%p638) target = $region123
              $region122: #{decision_rwkv_forward.1} parent=96 // pred_region
                %s677 = sand.u32 96, 7
              $region123: #{decision_rwkv_forward.1} parent=96 // pred_fallthru
                _
            $region97: #{decision_rwkv_forward.1} parent=93 // pred_fallthru
              _
            // Predicated region
            $region98: #{decision_rwkv_forward.1} parent=93 // pred_check
              %p623 = pneg %p619
            $region99: #{decision_rwkv_forward.1} parent=93 // pred_check_branch
              %625 = sbr.rel (%p623) target = $region101
            $region100: #{decision_rwkv_forward.1} parent=93 // pred_region
              %s626 = sshllo.u32 0, 96
              loop: start=0, step=1, limit=1
              $region102: #{decision_rwkv_forward.1} parent=100 // loop_pre_header
                _
              $region103: #{decision_rwkv_forward.1} parent=100 // loop_header
                %s628 = sphi 0, %s632
                %p629 = scmp.ge.s32.totalorder %s628, 1
                %s633 = sphi %s0, %s0
                %s634 = sphi [#allocation2], [#allocation2]
              $region104: #{decision_rwkv_forward.1} parent=100 // loop_header_branch
                %631 = sbr.rel (%p629) target = $region108
              $region105: #{decision_rwkv_forward.1} parent=100 // loop_body
                %v635 = vld [vmem:[%s633] sm:%s626]
                %636 = vst [vmem:[%s634] sm:%s626] %v635
              $region106: #{decision_rwkv_forward.1} parent=100 // loop_footer
                %s632 = sadd.s32 1, %s628
              $region107: #{decision_rwkv_forward.1} parent=100 // loop_footer_branch
                %627 = sbr.rel target = $region103
              $region108: #{decision_rwkv_forward.1} parent=100 // loop_exit
                _
            $region101: #{decision_rwkv_forward.1} parent=93 // pred_fallthru
              _
            // Predicated region
            $region124: #{decision_rwkv_forward.1} parent=93 // pred_check
              _
            $region125: #{decision_rwkv_forward.1} parent=93 // pred_check_branch
              %680 = sbr.rel (0) target = $region127
            $region126: #{decision_rwkv_forward.1} parent=93 // pred_region
              %681 = vsyncadd [#allocation17], 1536
            $region127: #{decision_rwkv_forward.1} parent=93 // pred_fallthru
              _
            %s682 = smul.u32 96, 1
            %s683 = sshll.u32 %s682, 4
            %684 = dma.done [#allocation17], %s683
        $region92: #{decision_rwkv_forward.1} parent=59 // pred_fallthru
          _
        %v685 = vld [vmem:[%s607] sm:$0xff]
        %v686 = vld [vmem:[%s607 + $0x8] sm:$0x7]
        %v687 = vlaneseq
        %v688 = vshrl.u32 %v687, 7
        %v689 = vadd.s32 %v688, 8
        %v690 = vadd.s32 %v688, 16
        %v691 = vadd.s32 %v688, 24
        %v692 = vadd.s32 %v688, 32
        %v693 = vadd.s32 %v688, 40
        %v694 = vadd.s32 %v688, 48
        %v695 = vadd.s32 %v688, 56
        %v696 = vadd.s32 %v688, 64
        %v697 = vadd.s32 %v688, 72
        %v698 = vadd.s32 %v688, 80
        %v699 = vadd.s32 %v688, 88
        %vm700 = vcmp.lt.s32.totalorder %v688, 8
        %vm701 = vcmp.lt.s32.totalorder %v689, 8
        %vm702 = vcmp.lt.s32.totalorder %v690, 8
        %vm703 = vcmp.lt.s32.totalorder %v691, 8
        %vm704 = vcmp.lt.s32.totalorder %v692, 8
        %vm705 = vcmp.lt.s32.totalorder %v693, 8
        %vm706 = vcmp.lt.s32.totalorder %v694, 8
        %vm707 = vcmp.lt.s32.totalorder %v695, 8
        %vm708 = vcmp.lt.s32.totalorder %v696, 8
        %vm709 = vcmp.lt.s32.totalorder %v697, 8
        %vm710 = vcmp.lt.s32.totalorder %v698, 8
        %vm711 = vcmp.lt.s32.totalorder %v699, 8
        %v712 = vld [vmem:[#allocation2] sm:$0xff]
        %v713 = vld [vmem:[#allocation2 + $0x8] sm:$0xff]
        %v714 = vld [vmem:[#allocation2 + $0x10] sm:$0xff]
        %v715 = vld [vmem:[#allocation2 + $0x18] sm:$0xff]
        %v716 = vld [vmem:[#allocation2 + $0x20] sm:$0xff]
        %v717 = vld [vmem:[#allocation2 + $0x28] sm:$0xff]
        %v718 = vld [vmem:[#allocation2 + $0x30] sm:$0xff]
        %v719 = vld [vmem:[#allocation2 + $0x38] sm:$0xff]
        %v720 = vld [vmem:[#allocation2 + $0x40] sm:$0xff]
        %v721 = vld [vmem:[#allocation2 + $0x48] sm:$0xff]
        %v722 = vld [vmem:[#allocation2 + $0x50] sm:$0xff]
        %v723 = vld [vmem:[#allocation2 + $0x58] sm:$0xff]
        %724 = vadd.xlane.f32.xlu0 %v712
        %v725 = vpop.xlane.xlu0 %724
        %726 = vadd.xlane.f32.xlu0 %v713
        %v727 = vpop.xlane.xlu0 %726
        %728 = vadd.xlane.f32.xlu0 %v714
        %v729 = vpop.xlane.xlu0 %728
        %730 = vadd.xlane.f32.xlu0 %v715
        %v731 = vpop.xlane.xlu0 %730
        %732 = vadd.xlane.f32.xlu0 %v716
        %v733 = vpop.xlane.xlu0 %732
        %734 = vadd.xlane.f32.xlu0 %v717
        %v735 = vpop.xlane.xlu0 %734
        %736 = vadd.xlane.f32.xlu0 %v718
        %v737 = vpop.xlane.xlu0 %736
        %738 = vadd.xlane.f32.xlu0 %v719
        %v739 = vpop.xlane.xlu0 %738
        %740 = vadd.xlane.f32.xlu0 %v720
        %v741 = vpop.xlane.xlu0 %740
        %742 = vadd.xlane.f32.xlu0 %v721
        %v743 = vpop.xlane.xlu0 %742
        %744 = vadd.xlane.f32.xlu0 %v722
        %v745 = vpop.xlane.xlu0 %744
        %746 = vadd.xlane.f32.xlu0 %v723
        %v747 = vpop.xlane.xlu0 %746
        %v748 = vrcp.pop 128.0
        %v749 = vmul.f32 %v725, %v748
        %v750 = vmul.f32 %v727, %v748
        %v751 = vmul.f32 %v729, %v748
        %v752 = vmul.f32 %v731, %v748
        %v753 = vmul.f32 %v733, %v748
        %v754 = vmul.f32 %v735, %v748
        %v755 = vmul.f32 %v737, %v748
        %v756 = vmul.f32 %v739, %v748
        %v757 = vmul.f32 %v741, %v748
        %v758 = vmul.f32 %v743, %v748
        %v759 = vmul.f32 %v745, %v748
        %v760 = vmul.f32 %v747, %v748
        %v761 = vsub.f32 %v712, %v749
        %v762 = vsub.f32 %v713, %v750
        %v763 = vsub.f32 %v714, %v751
        %v764 = vsub.f32 %v715, %v752
        %v765 = vsub.f32 %v716, %v753
        %v766 = vsub.f32 %v717, %v754
        %v767 = vsub.f32 %v718, %v755
        %v768 = vsub.f32 %v719, %v756
        %v769 = vsub.f32 %v720, %v757
        %v770 = vsub.f32 %v721, %v758
        %v771 = vsub.f32 %v722, %v759
        %v772 = vsub.f32 %v723, %v760
        %v773 = vmul.f32 %v761, %v761
        %v774 = vmul.f32 %v762, %v762
        %v775 = vmul.f32 %v763, %v763
        %v776 = vmul.f32 %v764, %v764
        %v777 = vmul.f32 %v765, %v765
        %v778 = vmul.f32 %v766, %v766
        %v779 = vmul.f32 %v767, %v767
        %v780 = vmul.f32 %v768, %v768
        %v781 = vmul.f32 %v769, %v769
        %v782 = vmul.f32 %v770, %v770
        %v783 = vmul.f32 %v771, %v771
        %v784 = vmul.f32 %v772, %v772
        %785 = vadd.xlane.f32.xlu0 %v773
        %v786 = vpop.xlane.xlu0 %785
        %787 = vadd.xlane.f32.xlu0 %v774
        %v788 = vpop.xlane.xlu0 %787
        %789 = vadd.xlane.f32.xlu0 %v775
        %v790 = vpop.xlane.xlu0 %789
        %791 = vadd.xlane.f32.xlu0 %v776
        %v792 = vpop.xlane.xlu0 %791
        %793 = vadd.xlane.f32.xlu0 %v777
        %v794 = vpop.xlane.xlu0 %793
        %795 = vadd.xlane.f32.xlu0 %v778
        %v796 = vpop.xlane.xlu0 %795
        %797 = vadd.xlane.f32.xlu0 %v779
        %v798 = vpop.xlane.xlu0 %797
        %799 = vadd.xlane.f32.xlu0 %v780
        %v800 = vpop.xlane.xlu0 %799
        %801 = vadd.xlane.f32.xlu0 %v781
        %v802 = vpop.xlane.xlu0 %801
        %803 = vadd.xlane.f32.xlu0 %v782
        %v804 = vpop.xlane.xlu0 %803
        %805 = vadd.xlane.f32.xlu0 %v783
        %v806 = vpop.xlane.xlu0 %805
        %807 = vadd.xlane.f32.xlu0 %v784
        %v808 = vpop.xlane.xlu0 %807
        %v809 = vmul.f32 %v786, %v748
        %v810 = vmul.f32 %v788, %v748
        %v811 = vmul.f32 %v790, %v748
        %v812 = vmul.f32 %v792, %v748
        %v813 = vmul.f32 %v794, %v748
        %v814 = vmul.f32 %v796, %v748
        %v815 = vmul.f32 %v798, %v748
        %v816 = vmul.f32 %v800, %v748
        %v817 = vmul.f32 %v802, %v748
        %v818 = vmul.f32 %v804, %v748
        %v819 = vmul.f32 %v806, %v748
        %v820 = vmul.f32 %v808, %v748
        %v821 = vadd.f32 %v809, 1e-05
        %v822 = vadd.f32 %v810, 1e-05
        %v823 = vadd.f32 %v811, 1e-05
        %v824 = vadd.f32 %v812, 1e-05
        %v825 = vadd.f32 %v813, 1e-05
        %v826 = vadd.f32 %v814, 1e-05
        %v827 = vadd.f32 %v815, 1e-05
        %v828 = vadd.f32 %v816, 1e-05
        %v829 = vadd.f32 %v817, 1e-05
        %v830 = vadd.f32 %v818, 1e-05
        %v831 = vadd.f32 %v819, 1e-05
        %v832 = vadd.f32 %v820, 1e-05
        %v833 = vrsqrt.pop %v821
        %v834 = vrsqrt.pop %v822
        %v835 = vrsqrt.pop %v823
        %v836 = vrsqrt.pop %v824
        %v837 = vrsqrt.pop %v825
        %v838 = vrsqrt.pop %v826
        %v839 = vrsqrt.pop %v827
        %v840 = vrsqrt.pop %v828
        %v841 = vrsqrt.pop %v829
        %v842 = vrsqrt.pop %v830
        %v843 = vrsqrt.pop %v831
        %v844 = vrsqrt.pop %v832
        %v845 = vmul.f32 %v761, %v833
        %v846 = vmul.f32 %v762, %v834
        %v847 = vmul.f32 %v763, %v835
        %v848 = vmul.f32 %v764, %v836
        %v849 = vmul.f32 %v765, %v837
        %v850 = vmul.f32 %v766, %v838
        %v851 = vmul.f32 %v767, %v839
        %v852 = vmul.f32 %v768, %v840
        %v853 = vmul.f32 %v769, %v841
        %v854 = vmul.f32 %v770, %v842
        %v855 = vmul.f32 %v771, %v843
        %v856 = vmul.f32 %v772, %v844
        %v857 = vlaneseq
        %v858 = vshrl.u32 %v857, 7
        %v859 = vsub.s32 0, %v858
        %v860 = vrot.slane %v685, %v859
        %v861 = vmul.f32 %v845, %v860
        %v862 = vmul.f32 %v846, %v860
        %v863 = vmul.f32 %v847, %v860
        %v864 = vmul.f32 %v848, %v860
        %v865 = vmul.f32 %v849, %v860
        %v866 = vmul.f32 %v850, %v860
        %v867 = vmul.f32 %v851, %v860
        %v868 = vmul.f32 %v852, %v860
        %v869 = vmul.f32 %v853, %v860
        %v870 = vmul.f32 %v854, %v860
        %v871 = vmul.f32 %v855, %v860
        %v872 = vmul.f32 %v856, %v860
        %v873 = vlaneseq
        %v874 = vshrl.u32 %v873, 7
        %v875 = vsub.s32 1, %v874
        %v876 = vrot.slane %v685, %v875
        %v877 = vadd.f32 %v861, %v876
        %v878 = vadd.f32 %v862, %v876
        %v879 = vadd.f32 %v863, %v876
        %v880 = vadd.f32 %v864, %v876
        %v881 = vadd.f32 %v865, %v876
        %v882 = vadd.f32 %v866, %v876
        %v883 = vadd.f32 %v867, %v876
        %v884 = vadd.f32 %v868, %v876
        %v885 = vadd.f32 %v869, %v876
        %v886 = vadd.f32 %v870, %v876
        %v887 = vadd.f32 %v871, %v876
        %v888 = vadd.f32 %v872, %v876
        %v889 = vsel %vm700, 0.0, %v888
        %v890 = vsel %vm701, 0.0, %v877
        %v891 = vsel %vm702, 0.0, %v878
        %v892 = vsel %vm703, 0.0, %v879
        %v893 = vsel %vm704, 0.0, %v880
        %v894 = vsel %vm705, 0.0, %v881
        %v895 = vsel %vm706, 0.0, %v882
        %v896 = vsel %vm707, 0.0, %v883
        %v897 = vsel %vm708, 0.0, %v884
        %v898 = vsel %vm709, 0.0, %v885
        %v899 = vsel %vm710, 0.0, %v886
        %v900 = vsel %vm711, 0.0, %v887
        %v901 = vsub.f32 %v877, %v889
        %v902 = vsub.f32 %v878, %v890
        %v903 = vsub.f32 %v879, %v891
        %v904 = vsub.f32 %v880, %v892
        %v905 = vsub.f32 %v881, %v893
        %v906 = vsub.f32 %v882, %v894
        %v907 = vsub.f32 %v883, %v895
        %v908 = vsub.f32 %v884, %v896
        %v909 = vsub.f32 %v885, %v897
        %v910 = vsub.f32 %v886, %v898
        %v911 = vsub.f32 %v887, %v899
        %v912 = vsub.f32 %v888, %v900
        %v913 = vlaneseq
        %v914 = vshrl.u32 %v913, 7
        %v915 = vsub.s32 6, %v914
        %v916 = vrot.slane %v685, %v915
        %v917 = vmul.f32 %v916, %v901
        %v918 = vmul.f32 %v916, %v902
        %v919 = vmul.f32 %v916, %v903
        %v920 = vmul.f32 %v916, %v904
        %v921 = vmul.f32 %v916, %v905
        %v922 = vmul.f32 %v916, %v906
        %v923 = vmul.f32 %v916, %v907
        %v924 = vmul.f32 %v916, %v908
        %v925 = vmul.f32 %v916, %v909
        %v926 = vmul.f32 %v916, %v910
        %v927 = vmul.f32 %v916, %v911
        %v928 = vmul.f32 %v916, %v912
        %v929 = vadd.f32 %v889, %v917
        %v930 = vadd.f32 %v890, %v918
        %v931 = vadd.f32 %v891, %v919
        %v932 = vadd.f32 %v892, %v920
        %v933 = vadd.f32 %v893, %v921
        %v934 = vadd.f32 %v894, %v922
        %v935 = vadd.f32 %v895, %v923
        %v936 = vadd.f32 %v896, %v924
        %v937 = vadd.f32 %v897, %v925
        %v938 = vadd.f32 %v898, %v926
        %v939 = vadd.f32 %v899, %v927
        %v940 = vadd.f32 %v900, %v928
        %v941 = vld [vmem:[%s487] sm:$0xf]
        %v942 = vld [vmem:[%s487 + $0x4] sm:$0xf]
        %v943 = vld [vmem:[%s487 + $0x8] sm:$0xf]
        %v944 = vld [vmem:[%s487 + $0xc] sm:$0xf]
        %v945 = vld [vmem:[%s487 + $0x10] sm:$0xf]
        %v946 = vld [vmem:[%s487 + $0x14] sm:$0xf]
        %v947 = vld [vmem:[%s487 + $0x18] sm:$0xf]
        %v948 = vld [vmem:[%s487 + $0x1c] sm:$0xf]
        %v949 = vld [vmem:[%s487 + $0x20] sm:$0xf]
        %v950 = vld [vmem:[%s487 + $0x24] sm:$0xf]
        %v951 = vld [vmem:[%s487 + $0x28] sm:$0xf]
        %v952 = vld [vmem:[%s487 + $0x2c] sm:$0xf]
        %v953 = vld [vmem:[%s487 + $0x30] sm:$0xf]
        %v954 = vld [vmem:[%s487 + $0x34] sm:$0xf]
        %v955 = vld [vmem:[%s487 + $0x38] sm:$0xf]
        %v956 = vld [vmem:[%s487 + $0x3c] sm:$0xf]
        %v957 = vpack.c.bf16 %v930, %v929
        %v958 = vpack.c.bf16 %v932, %v931
        %v959 = vpack.c.bf16 %v934, %v933
        %v960 = vpack.c.bf16 %v936, %v935
        %v961 = vpack.c.bf16 %v938, %v937
        %v962 = vpack.c.bf16 %v940, %v939
        %v979 = vunpack.c.l.b16 %v941
        %v980 = vunpack.c.l.b16 %v942
        %v981 = vunpack.c.l.b16 %v943
        %v982 = vunpack.c.l.b16 %v944
        %v983 = vunpack.c.l.b16 %v945
        %v984 = vunpack.c.l.b16 %v946
        %v985 = vunpack.c.l.b16 %v947
        %v986 = vunpack.c.l.b16 %v948
        %v987 = vunpack.c.l.b16 %v949
        %v988 = vunpack.c.l.b16 %v950
        %v989 = vunpack.c.l.b16 %v951
        %v990 = vunpack.c.l.b16 %v952
        %v991 = vunpack.c.l.b16 %v953
        %v992 = vunpack.c.l.b16 %v954
        %v993 = vunpack.c.l.b16 %v955
        %v994 = vunpack.c.l.b16 %v956
        %v995 = vpack.c.b16 %v980, %v979
        %v996 = vpack.c.b16 %v982, %v981
        %v997 = vpack.c.b16 %v984, %v983
        %v998 = vpack.c.b16 %v986, %v985
        %v999 = vpack.c.b16 %v988, %v987
        %v1000 = vpack.c.b16 %v990, %v989
        %v1001 = vpack.c.b16 %v992, %v991
        %v1002 = vpack.c.b16 %v994, %v993
        %1011 = vmatprep.subr.bf16.mxu0 0
        %1012 = vmatpush1.bf16.msra.mxu0 %v995
        %1013 = vmatprep.subr.bf16.mxu0 0
        %1014 = vmatpush1.bf16.msra.mxu0 %v996
        %1015 = vmatprep.subr.bf16.mxu0 0
        %1016 = vmatpush1.bf16.msra.mxu0 %v997
        %1017 = vmatprep.subr.bf16.mxu0 0
        %1018 = vmatpush1.bf16.msra.mxu0 %v998
        %1019 = vmatprep.subr.bf16.mxu0 0
        %1020 = vmatpush1.bf16.msra.mxu0 %v999
        %1021 = vmatprep.subr.bf16.mxu0 0
        %1022 = vmatpush1.bf16.msra.mxu0 %v1000
        %1023 = vmatprep.subr.bf16.mxu0 0
        %1024 = vmatpush1.bf16.msra.mxu0 %v1001
        %1025 = vmatprep.subr.bf16.mxu0 0
        %1026 = vmatpush1.bf16.msra.mxu0 %v1002
        %1027 = vmatprep.subr.bf16.mxu0 0
        %1028 = vmatpush1.bf16.msra.mxu0 0
        %1029 = vmatprep.subr.bf16.mxu0 0
        %1030 = vmatpush1.bf16.msra.mxu0 0
        %1031 = vmatprep.subr.bf16.mxu0 0
        %1032 = vmatpush1.bf16.msra.mxu0 0
        %1033 = vmatprep.subr.bf16.mxu0 0
        %1034 = vmatpush1.bf16.msra.mxu0 0
        %1035 = vmatprep.subr.bf16.mxu0 0
        %1036 = vmatpush1.bf16.msra.mxu0 0
        %1037 = vmatprep.subr.bf16.mxu0 0
        %1038 = vmatpush1.bf16.msra.mxu0 0
        %1039 = vmatprep.subr.bf16.mxu0 0
        %1040 = vmatpush1.bf16.msra.mxu0 0
        %1041 = vmatprep.subr.bf16.mxu0 0
        %1042 = vmatpush1.bf16.msra.mxu0 0
        %1043 = vmatprep.mubr.bf16.mxu0 0
        %1044 = vmatmul.mubr.bf16.gmra.mrb[0].mxu0 %v957
        %v1045 = vpop.f32.mrb[0].mxu0
        %v1046 = vadd.f32 0.0, %v1045
        %v1047 = vpop.f32.mrb[0].mxu0
        %v1048 = vpop.f32.mrb[0].mxu0
        %v1049 = vadd.f32 0.0, %v1048
        %v1050 = vpop.f32.mrb[0].mxu0
        %1051 = vmatprep.mubr.bf16.mxu0 0
        %1052 = vmatmul.mubr.bf16.gmra.mrb[0].mxu0 %v958
        %v1053 = vpop.f32.mrb[0].mxu0
        %v1054 = vadd.f32 0.0, %v1053
        %v1055 = vpop.f32.mrb[0].mxu0
        %v1056 = vpop.f32.mrb[0].mxu0
        %v1057 = vadd.f32 0.0, %v1056
        %v1058 = vpop.f32.mrb[0].mxu0
        %1059 = vmatprep.mubr.bf16.mxu0 0
        %1060 = vmatmul.mubr.bf16.gmra.mrb[0].mxu0 %v959
        %v1061 = vpop.f32.mrb[0].mxu0
        %v1062 = vadd.f32 0.0, %v1061
        %v1063 = vpop.f32.mrb[0].mxu0
        %v1064 = vpop.f32.mrb[0].mxu0
        %v1065 = vadd.f32 0.0, %v1064
        %v1066 = vpop.f32.mrb[0].mxu0
        %1067 = vmatprep.mubr.bf16.mxu0 0
        %1068 = vmatmul.mubr.bf16.gmra.mrb[0].mxu0 %v960
        %v1069 = vpop.f32.mrb[0].mxu0
        %v1070 = vadd.f32 0.0, %v1069
        %v1071 = vpop.f32.mrb[0].mxu0
        %v1072 = vpop.f32.mrb[0].mxu0
        %v1073 = vadd.f32 0.0, %v1072
        %v1074 = vpop.f32.mrb[0].mxu0
        %1075 = vmatprep.mubr.bf16.mxu0 0
        %1076 = vmatmul.mubr.bf16.gmra.mrb[0].mxu0 %v961
        %v1077 = vpop.f32.mrb[0].mxu0
        %v1078 = vadd.f32 0.0, %v1077
        %v1079 = vpop.f32.mrb[0].mxu0
        %v1080 = vpop.f32.mrb[0].mxu0
        %v1081 = vadd.f32 0.0, %v1080
        %v1082 = vpop.f32.mrb[0].mxu0
        %1083 = vmatprep.mubr.bf16.mxu0 0
        %1084 = vmatmul.mubr.bf16.gmra.mrb[0].mxu0 %v962
        %v1085 = vpop.f32.mrb[0].mxu0
        %v1086 = vadd.f32 0.0, %v1085
        %v1087 = vpop.f32.mrb[0].mxu0
        %v1088 = vpop.f32.mrb[0].mxu0
        %v1089 = vadd.f32 0.0, %v1088
        %v1090 = vpop.f32.mrb[0].mxu0
        %1091 = vdwg.mxu0
        %v1092 = vlaneseq
        %v1093 = vshrl.u32 %v1092, 7
        %v1094 = vsub.s32 7, %v1093
        %v1095 = vrot.slane %v685, %v1094
        %v1096 = vmul.f32 %v1095, %v901
        %v1097 = vmul.f32 %v1095, %v902
        %v1098 = vmul.f32 %v1095, %v903
        %v1099 = vmul.f32 %v1095, %v904
        %v1100 = vmul.f32 %v1095, %v905
        %v1101 = vmul.f32 %v1095, %v906
        %v1102 = vmul.f32 %v1095, %v907
        %v1103 = vmul.f32 %v1095, %v908
        %v1104 = vmul.f32 %v1095, %v909
        %v1105 = vmul.f32 %v1095, %v910
        %v1106 = vmul.f32 %v1095, %v911
        %v1107 = vmul.f32 %v1095, %v912
        %v1108 = vadd.f32 %v889, %v1096
        %v1109 = vadd.f32 %v890, %v1097
        %v1110 = vadd.f32 %v891, %v1098
        %v1111 = vadd.f32 %v892, %v1099
        %v1112 = vadd.f32 %v893, %v1100
        %v1113 = vadd.f32 %v894, %v1101
        %v1114 = vadd.f32 %v895, %v1102
        %v1115 = vadd.f32 %v896, %v1103
        %v1116 = vadd.f32 %v897, %v1104
        %v1117 = vadd.f32 %v898, %v1105
        %v1118 = vadd.f32 %v899, %v1106
        %v1119 = vadd.f32 %v900, %v1107
        %v1120 = vld [vmem:[%s496] sm:$0xf]
        %v1121 = vld [vmem:[%s496 + $0x4] sm:$0xf]
        %v1122 = vld [vmem:[%s496 + $0x8] sm:$0xf]
        %v1123 = vld [vmem:[%s496 + $0xc] sm:$0xf]
        %v1124 = vld [vmem:[%s496 + $0x10] sm:$0xf]
        %v1125 = vld [vmem:[%s496 + $0x14] sm:$0xf]
        %v1126 = vld [vmem:[%s496 + $0x18] sm:$0xf]
        %v1127 = vld [vmem:[%s496 + $0x1c] sm:$0xf]
        %v1128 = vld [vmem:[%s496 + $0x20] sm:$0xf]
        %v1129 = vld [vmem:[%s496 + $0x24] sm:$0xf]
        %v1130 = vld [vmem:[%s496 + $0x28] sm:$0xf]
        %v1131 = vld [vmem:[%s496 + $0x2c] sm:$0xf]
        %v1132 = vld [vmem:[%s496 + $0x30] sm:$0xf]
        %v1133 = vld [vmem:[%s496 + $0x34] sm:$0xf]
        %v1134 = vld [vmem:[%s496 + $0x38] sm:$0xf]
        %v1135 = vld [vmem:[%s496 + $0x3c] sm:$0xf]
        %v1136 = vpack.c.bf16 %v1109, %v1108
        %v1137 = vpack.c.bf16 %v1111, %v1110
        %v1138 = vpack.c.bf16 %v1113, %v1112
        %v1139 = vpack.c.bf16 %v1115, %v1114
        %v1140 = vpack.c.bf16 %v1117, %v1116
        %v1141 = vpack.c.bf16 %v1119, %v1118
        %v1158 = vunpack.c.l.b16 %v1120
        %v1159 = vunpack.c.l.b16 %v1121
        %v1160 = vunpack.c.l.b16 %v1122
        %v1161 = vunpack.c.l.b16 %v1123
        %v1162 = vunpack.c.l.b16 %v1124
        %v1163 = vunpack.c.l.b16 %v1125
        %v1164 = vunpack.c.l.b16 %v1126
        %v1165 = vunpack.c.l.b16 %v1127
        %v1166 = vunpack.c.l.b16 %v1128
        %v1167 = vunpack.c.l.b16 %v1129
        %v1168 = vunpack.c.l.b16 %v1130
        %v1169 = vunpack.c.l.b16 %v1131
        %v1170 = vunpack.c.l.b16 %v1132
        %v1171 = vunpack.c.l.b16 %v1133
        %v1172 = vunpack.c.l.b16 %v1134
        %v1173 = vunpack.c.l.b16 %v1135
        %v1174 = vpack.c.b16 %v1159, %v1158
        %v1175 = vpack.c.b16 %v1161, %v1160
        %v1176 = vpack.c.b16 %v1163, %v1162
        %v1177 = vpack.c.b16 %v1165, %v1164
        %v1178 = vpack.c.b16 %v1167, %v1166
        %v1179 = vpack.c.b16 %v1169, %v1168
        %v1180 = vpack.c.b16 %v1171, %v1170
        %v1181 = vpack.c.b16 %v1173, %v1172
        %1190 = vmatprep.subr.bf16.mxu0 0
        %1191 = vmatpush1.bf16.msra.mxu0 %v1174
        %1192 = vmatprep.subr.bf16.mxu0 0
        %1193 = vmatpush1.bf16.msra.mxu0 %v1175
        %1194 = vmatprep.subr.bf16.mxu0 0
        %1195 = vmatpush1.bf16.msra.mxu0 %v1176
        %1196 = vmatprep.subr.bf16.mxu0 0
        %1197 = vmatpush1.bf16.msra.mxu0 %v1177
        %1198 = vmatprep.subr.bf16.mxu0 0
        %1199 = vmatpush1.bf16.msra.mxu0 %v1178
        %1200 = vmatprep.subr.bf16.mxu0 0
        %1201 = vmatpush1.bf16.msra.mxu0 %v1179
        %1202 = vmatprep.subr.bf16.mxu0 0
        %1203 = vmatpush1.bf16.msra.mxu0 %v1180
        %1204 = vmatprep.subr.bf16.mxu0 0
        %1205 = vmatpush1.bf16.msra.mxu0 %v1181
        %1206 = vmatprep.subr.bf16.mxu0 0
        %1207 = vmatpush1.bf16.msra.mxu0 0
        %1208 = vmatprep.subr.bf16.mxu0 0
        %1209 = vmatpush1.bf16.msra.mxu0 0
        %1210 = vmatprep.subr.bf16.mxu0 0
        %1211 = vmatpush1.bf16.msra.mxu0 0
        %1212 = vmatprep.subr.bf16.mxu0 0
        %1213 = vmatpush1.bf16.msra.mxu0 0
        %1214 = vmatprep.subr.bf16.mxu0 0
        %1215 = vmatpush1.bf16.msra.mxu0 0
        %1216 = vmatprep.subr.bf16.mxu0 0
        %1217 = vmatpush1.bf16.msra.mxu0 0
        %1218 = vmatprep.subr.bf16.mxu0 0
        %1219 = vmatpush1.bf16.msra.mxu0 0
        %1220 = vmatprep.subr.bf16.mxu0 0
        %1221 = vmatpush1.bf16.msra.mxu0 0
        %1222 = vmatprep.mubr.bf16.mxu0 0
        %1223 = vmatmul.mubr.bf16.gmra.mrb[0].mxu0 %v1136
        %v1224 = vpop.f32.mrb[0].mxu0
        %v1225 = vadd.f32 0.0, %v1224
        %v1226 = vpop.f32.mrb[0].mxu0
        %v1227 = vpop.f32.mrb[0].mxu0
        %v1228 = vadd.f32 0.0, %v1227
        %v1229 = vpop.f32.mrb[0].mxu0
        %1230 = vmatprep.mubr.bf16.mxu0 0
        %1231 = vmatmul.mubr.bf16.gmra.mrb[0].mxu0 %v1137
        %v1232 = vpop.f32.mrb[0].mxu0
        %v1233 = vadd.f32 0.0, %v1232
        %v1234 = vpop.f32.mrb[0].mxu0
        %v1235 = vpop.f32.mrb[0].mxu0
        %v1236 = vadd.f32 0.0, %v1235
        %v1237 = vpop.f32.mrb[0].mxu0
        %1238 = vmatprep.mubr.bf16.mxu0 0
        %1239 = vmatmul.mubr.bf16.gmra.mrb[0].mxu0 %v1138
        %v1240 = vpop.f32.mrb[0].mxu0
        %v1241 = vadd.f32 0.0, %v1240
        %v1242 = vpop.f32.mrb[0].mxu0
        %v1243 = vpop.f32.mrb[0].mxu0
        %v1244 = vadd.f32 0.0, %v1243
        %v1245 = vpop.f32.mrb[0].mxu0
        %1246 = vmatprep.mubr.bf16.mxu0 0
        %1247 = vmatmul.mubr.bf16.gmra.mrb[0].mxu0 %v1139
        %v1248 = vpop.f32.mrb[0].mxu0
        %v1249 = vadd.f32 0.0, %v1248
        %v1250 = vpop.f32.mrb[0].mxu0
        %v1251 = vpop.f32.mrb[0].mxu0
        %v1252 = vadd.f32 0.0, %v1251
        %v1253 = vpop.f32.mrb[0].mxu0
        %1254 = vmatprep.mubr.bf16.mxu0 0
        %1255 = vmatmul.mubr.bf16.gmra.mrb[0].mxu0 %v1140
        %v1256 = vpop.f32.mrb[0].mxu0
        %v1257 = vadd.f32 0.0, %v1256
        %v1258 = vpop.f32.mrb[0].mxu0
        %v1259 = vpop.f32.mrb[0].mxu0
        %v1260 = vadd.f32 0.0, %v1259
        %v1261 = vpop.f32.mrb[0].mxu0
        %1262 = vmatprep.mubr.bf16.mxu0 0
        %1263 = vmatmul.mubr.bf16.gmra.mrb[0].mxu0 %v1141
        %v1264 = vpop.f32.mrb[0].mxu0
        %v1265 = vadd.f32 0.0, %v1264
        %v1266 = vpop.f32.mrb[0].mxu0
        %v1267 = vpop.f32.mrb[0].mxu0
        %v1268 = vadd.f32 0.0, %v1267
        %v1269 = vpop.f32.mrb[0].mxu0
        %1270 = vdwg.mxu0
        %v1271 = vlaneseq
        %v1272 = vshrl.u32 %v1271, 7
        %v1273 = vsub.s32 0, %v1272
        %v1274 = vrot.slane %v686, %v1273
        %v1275 = vmul.f32 %v1274, %v901
        %v1276 = vmul.f32 %v1274, %v902
        %v1277 = vmul.f32 %v1274, %v903
        %v1278 = vmul.f32 %v1274, %v904
        %v1279 = vmul.f32 %v1274, %v905
        %v1280 = vmul.f32 %v1274, %v906
        %v1281 = vmul.f32 %v1274, %v907
        %v1282 = vmul.f32 %v1274, %v908
        %v1283 = vmul.f32 %v1274, %v909
        %v1284 = vmul.f32 %v1274, %v910
        %v1285 = vmul.f32 %v1274, %v911
        %v1286 = vmul.f32 %v1274, %v912
        %v1287 = vadd.f32 %v889, %v1275
        %v1288 = vadd.f32 %v890, %v1276
        %v1289 = vadd.f32 %v891, %v1277
        %v1290 = vadd.f32 %v892, %v1278
        %v1291 = vadd.f32 %v893, %v1279
        %v1292 = vadd.f32 %v894, %v1280
        %v1293 = vadd.f32 %v895, %v1281
        %v1294 = vadd.f32 %v896, %v1282
        %v1295 = vadd.f32 %v897, %v1283
        %v1296 = vadd.f32 %v898, %v1284
        %v1297 = vadd.f32 %v899, %v1285
        %v1298 = vadd.f32 %v900, %v1286
        %v1299 = vld [vmem:[%s505] sm:$0xf]
        %v1300 = vld [vmem:[%s505 + $0x4] sm:$0xf]
        %v1301 = vld [vmem:[%s505 + $0x8] sm:$0xf]
        %v1302 = vld [vmem:[%s505 + $0xc] sm:$0xf]
        %v1303 = vld [vmem:[%s505 + $0x10] sm:$0xf]
        %v1304 = vld [vmem:[%s505 + $0x14] sm:$0xf]
        %v1305 = vld [vmem:[%s505 + $0x18] sm:$0xf]
        %v1306 = vld [vmem:[%s505 + $0x1c] sm:$0xf]
        %v1307 = vld [vmem:[%s505 + $0x20] sm:$0xf]
        %v1308 = vld [vmem:[%s505 + $0x24] sm:$0xf]
        %v1309 = vld [vmem:[%s505 + $0x28] sm:$0xf]
        %v1310 = vld [vmem:[%s505 + $0x2c] sm:$0xf]
        %v1311 = vld [vmem:[%s505 + $0x30] sm:$0xf]
        %v1312 = vld [vmem:[%s505 + $0x34] sm:$0xf]
        %v1313 = vld [vmem:[%s505 + $0x38] sm:$0xf]
        %v1314 = vld [vmem:[%s505 + $0x3c] sm:$0xf]
        %v1315 = vpack.c.bf16 %v1288, %v1287
        %v1316 = vpack.c.bf16 %v1290, %v1289
        %v1317 = vpack.c.bf16 %v1292, %v1291
        %v1318 = vpack.c.bf16 %v1294, %v1293
        %v1319 = vpack.c.bf16 %v1296, %v1295
        %v1320 = vpack.c.bf16 %v1298, %v1297
        %v1337 = vunpack.c.l.b16 %v1299
        %v1338 = vunpack.c.l.b16 %v1300
        %v1339 = vunpack.c.l.b16 %v1301
        %v1340 = vunpack.c.l.b16 %v1302
        %v1341 = vunpack.c.l.b16 %v1303
        %v1342 = vunpack.c.l.b16 %v1304
        %v1343 = vunpack.c.l.b16 %v1305
        %v1344 = vunpack.c.l.b16 %v1306
        %v1345 = vunpack.c.l.b16 %v1307
        %v1346 = vunpack.c.l.b16 %v1308
        %v1347 = vunpack.c.l.b16 %v1309
        %v1348 = vunpack.c.l.b16 %v1310
        %v1349 = vunpack.c.l.b16 %v1311
        %v1350 = vunpack.c.l.b16 %v1312
        %v1351 = vunpack.c.l.b16 %v1313
        %v1352 = vunpack.c.l.b16 %v1314
        %v1353 = vpack.c.b16 %v1338, %v1337
        %v1354 = vpack.c.b16 %v1340, %v1339
        %v1355 = vpack.c.b16 %v1342, %v1341
        %v1356 = vpack.c.b16 %v1344, %v1343
        %v1357 = vpack.c.b16 %v1346, %v1345
        %v1358 = vpack.c.b16 %v1348, %v1347
        %v1359 = vpack.c.b16 %v1350, %v1349
        %v1360 = vpack.c.b16 %v1352, %v1351
        %1369 = vmatprep.subr.bf16.mxu0 0
        %1370 = vmatpush1.bf16.msra.mxu0 %v1353
        %1371 = vmatprep.subr.bf16.mxu0 0
        %1372 = vmatpush1.bf16.msra.mxu0 %v1354
        %1373 = vmatprep.subr.bf16.mxu0 0
        %1374 = vmatpush1.bf16.msra.mxu0 %v1355
        %1375 = vmatprep.subr.bf16.mxu0 0
        %1376 = vmatpush1.bf16.msra.mxu0 %v1356
        %1377 = vmatprep.subr.bf16.mxu0 0
        %1378 = vmatpush1.bf16.msra.mxu0 %v1357
        %1379 = vmatprep.subr.bf16.mxu0 0
        %1380 = vmatpush1.bf16.msra.mxu0 %v1358
        %1381 = vmatprep.subr.bf16.mxu0 0
        %1382 = vmatpush1.bf16.msra.mxu0 %v1359
        %1383 = vmatprep.subr.bf16.mxu0 0
        %1384 = vmatpush1.bf16.msra.mxu0 %v1360
        %1385 = vmatprep.subr.bf16.mxu0 0
        %1386 = vmatpush1.bf16.msra.mxu0 0
        %1387 = vmatprep.subr.bf16.mxu0 0
        %1388 = vmatpush1.bf16.msra.mxu0 0
        %1389 = vmatprep.subr.bf16.mxu0 0
        %1390 = vmatpush1.bf16.msra.mxu0 0
        %1391 = vmatprep.subr.bf16.mxu0 0
        %1392 = vmatpush1.bf16.msra.mxu0 0
        %1393 = vmatprep.subr.bf16.mxu0 0
        %1394 = vmatpush1.bf16.msra.mxu0 0
        %1395 = vmatprep.subr.bf16.mxu0 0
        %1396 = vmatpush1.bf16.msra.mxu0 0
        %1397 = vmatprep.subr.bf16.mxu0 0
        %1398 = vmatpush1.bf16.msra.mxu0 0
        %1399 = vmatprep.subr.bf16.mxu0 0
        %1400 = vmatpush1.bf16.msra.mxu0 0
        %1401 = vmatprep.mubr.bf16.mxu0 0
        %1402 = vmatmul.mubr.bf16.gmra.mrb[0].mxu0 %v1315
        %v1403 = vpop.f32.mrb[0].mxu0
        %v1404 = vadd.f32 0.0, %v1403
        %v1405 = vpop.f32.mrb[0].mxu0
        %v1406 = vpop.f32.mrb[0].mxu0
        %v1407 = vadd.f32 0.0, %v1406
        %v1408 = vpop.f32.mrb[0].mxu0
        %1409 = vmatprep.mubr.bf16.mxu0 0
        %1410 = vmatmul.mubr.bf16.gmra.mrb[0].mxu0 %v1316
        %v1411 = vpop.f32.mrb[0].mxu0
        %v1412 = vadd.f32 0.0, %v1411
        %v1413 = vpop.f32.mrb[0].mxu0
        %v1414 = vpop.f32.mrb[0].mxu0
        %v1415 = vadd.f32 0.0, %v1414
        %v1416 = vpop.f32.mrb[0].mxu0
        %1417 = vmatprep.mubr.bf16.mxu0 0
        %1418 = vmatmul.mubr.bf16.gmra.mrb[0].mxu0 %v1317
        %v1419 = vpop.f32.mrb[0].mxu0
        %v1420 = vadd.f32 0.0, %v1419
        %v1421 = vpop.f32.mrb[0].mxu0
        %v1422 = vpop.f32.mrb[0].mxu0
        %v1423 = vadd.f32 0.0, %v1422
        %v1424 = vpop.f32.mrb[0].mxu0
        %1425 = vmatprep.mubr.bf16.mxu0 0
        %1426 = vmatmul.mubr.bf16.gmra.mrb[0].mxu0 %v1318
        %v1427 = vpop.f32.mrb[0].mxu0
        %v1428 = vadd.f32 0.0, %v1427
        %v1429 = vpop.f32.mrb[0].mxu0
        %v1430 = vpop.f32.mrb[0].mxu0
        %v1431 = vadd.f32 0.0, %v1430
        %v1432 = vpop.f32.mrb[0].mxu0
        %1433 = vmatprep.mubr.bf16.mxu0 0
        %1434 = vmatmul.mubr.bf16.gmra.mrb[0].mxu0 %v1319
        %v1435 = vpop.f32.mrb[0].mxu0
        %v1436 = vadd.f32 0.0, %v1435
        %v1437 = vpop.f32.mrb[0].mxu0
        %v1438 = vpop.f32.mrb[0].mxu0
        %v1439 = vadd.f32 0.0, %v1438
        %v1440 = vpop.f32.mrb[0].mxu0
        %1441 = vmatprep.mubr.bf16.mxu0 0
        %1442 = vmatmul.mubr.bf16.gmra.mrb[0].mxu0 %v1320
        %v1443 = vpop.f32.mrb[0].mxu0
        %v1444 = vadd.f32 0.0, %v1443
        %v1445 = vpop.f32.mrb[0].mxu0
        %v1446 = vpop.f32.mrb[0].mxu0
        %v1447 = vadd.f32 0.0, %v1446
        %v1448 = vpop.f32.mrb[0].mxu0
        %1449 = vdwg.mxu0
        %v1450 = vxor.u32 %v1404, 2147483648
        %v1451 = vxor.u32 %v1407, 2147483648
        %v1452 = vxor.u32 %v1412, 2147483648
        %v1453 = vxor.u32 %v1415, 2147483648
        %v1454 = vxor.u32 %v1420, 2147483648
        %v1455 = vxor.u32 %v1423, 2147483648
        %v1456 = vxor.u32 %v1428, 2147483648
        %v1457 = vxor.u32 %v1431, 2147483648
        %v1458 = vxor.u32 %v1436, 2147483648
        %v1459 = vxor.u32 %v1439, 2147483648
        %v1460 = vxor.u32 %v1444, 2147483648
        %v1461 = vxor.u32 %v1447, 2147483648
        %v1462 = vmul.f32 %v1450, 1.442695
        %v1463 = vpow.pop %v1462
        %v1464 = vmul.f32 %v1451, 1.442695
        %v1465 = vpow.pop %v1464
        %v1466 = vmul.f32 %v1452, 1.442695
        %v1467 = vpow.pop %v1466
        %v1468 = vmul.f32 %v1453, 1.442695
        %v1469 = vpow.pop %v1468
        %v1470 = vmul.f32 %v1454, 1.442695
        %v1471 = vpow.pop %v1470
        %v1472 = vmul.f32 %v1455, 1.442695
        %v1473 = vpow.pop %v1472
        %v1474 = vmul.f32 %v1456, 1.442695
        %v1475 = vpow.pop %v1474
        %v1476 = vmul.f32 %v1457, 1.442695
        %v1477 = vpow.pop %v1476
        %v1478 = vmul.f32 %v1458, 1.442695
        %v1479 = vpow.pop %v1478
        %v1480 = vmul.f32 %v1459, 1.442695
        %v1481 = vpow.pop %v1480
        %v1482 = vmul.f32 %v1460, 1.442695
        %v1483 = vpow.pop %v1482
        %v1484 = vmul.f32 %v1461, 1.442695
        %v1485 = vpow.pop %v1484
        %v1486 = vadd.f32 %v1463, 1.0
        %v1487 = vadd.f32 %v1465, 1.0
        %v1488 = vadd.f32 %v1467, 1.0
        %v1489 = vadd.f32 %v1469, 1.0
        %v1490 = vadd.f32 %v1471, 1.0
        %v1491 = vadd.f32 %v1473, 1.0
        %v1492 = vadd.f32 %v1475, 1.0
        %v1493 = vadd.f32 %v1477, 1.0
        %v1494 = vadd.f32 %v1479, 1.0
        %v1495 = vadd.f32 %v1481, 1.0
        %v1496 = vadd.f32 %v1483, 1.0
        %v1497 = vadd.f32 %v1485, 1.0
        %v1498 = vrcp.pop %v1486
        %v1499 = vmul.f32 1.0, %v1498
        %v1500 = vrcp.pop %v1487
        %v1501 = vmul.f32 1.0, %v1500
        %v1502 = vrcp.pop %v1488
        %v1503 = vmul.f32 1.0, %v1502
        %v1504 = vrcp.pop %v1489
        %v1505 = vmul.f32 1.0, %v1504
        %v1506 = vrcp.pop %v1490
        %v1507 = vmul.f32 1.0, %v1506
        %v1508 = vrcp.pop %v1491
        %v1509 = vmul.f32 1.0, %v1508
        %v1510 = vrcp.pop %v1492
        %v1511 = vmul.f32 1.0, %v1510
        %v1512 = vrcp.pop %v1493
        %v1513 = vmul.f32 1.0, %v1512
        %v1514 = vrcp.pop %v1494
        %v1515 = vmul.f32 1.0, %v1514
        %v1516 = vrcp.pop %v1495
        %v1517 = vmul.f32 1.0, %v1516
        %v1518 = vrcp.pop %v1496
        %v1519 = vmul.f32 1.0, %v1518
        %v1520 = vrcp.pop %v1497
        %v1521 = vmul.f32 1.0, %v1520
        %v1522 = vlaneseq
        %v1523 = vshrl.u32 %v1522, 7
        %v1524 = vsub.s32 5, %v1523
        %v1525 = vrot.slane %v685, %v1524
        %v1526 = vadd.f32 %v1525, %v1046
        %vm1527 = vcmp.ge.f32.partialorder -1e+38, %v1526
        %v1528 = vsub.f32 -1e+38, %v1526
        %v1529 = vand.u32 2147483647, %v1528
        %v1530 = vsub.f32 0.0, %v1529
        %v1531 = vmul.f32 %v1530, 1.442695
        %v1532 = vpow.pop %v1531
        %v1533 = vsel %vm1527, 1.0, %v1532
        %v1534 = vsel %vm1527, %v1532, 1.0
        %v1535 = vmul.f32 %v1533, 0.0
        %v1536 = vmul.f32 %v1534, %v1225
        %v1537 = vadd.f32 %v1535, %v1536
        %1538 = vst [vmem:[#allocation3] sm:$0xff] %v1537
        %v1539 = vadd.f32 %v1535, %v1534
        %1540 = vst [vmem:[#allocation4] sm:$0xff] %v1539
        %v1541 = vlaneseq
        %v1542 = vshrl.u32 %v1541, 7
        %v1543 = vsub.s32 4, %v1542
        %v1544 = vrot.slane %v685, %v1543
        %v1545 = vadd.f32 %v1544, -1e+38
        %vm1546 = vcmp.ge.f32.partialorder %v1545, %v1046
        %v1547 = vsub.f32 %v1545, %v1046
        %v1548 = vand.u32 2147483647, %v1547
        %v1549 = vsub.f32 0.0, %v1548
        %v1550 = vmul.f32 %v1549, 1.442695
        %v1551 = vpow.pop %v1550
        %v1552 = vsel %vm1546, 1.0, %v1551
        %v1553 = vsel %vm1546, %v1551, 1.0
        %v1554 = vmul.f32 %v1552, 0.0
        %v1555 = vmul.f32 %v1553, %v1225
        %v1556 = vadd.f32 %v1554, %v1555
        %v1557 = vadd.f32 %v1554, %v1553
        %v1558 = vmax.f32 %v1545, %v1046
        %v1559 = vadd.f32 %v1525, %v1049
        %vm1560 = vcmp.ge.f32.partialorder %v1558, %v1559
        %v1561 = vsub.f32 %v1558, %v1559
        %v1562 = vand.u32 2147483647, %v1561
        %v1563 = vsub.f32 0.0, %v1562
        %v1564 = vmul.f32 %v1563, 1.442695
        %v1565 = vpow.pop %v1564
        %v1566 = vsel %vm1560, 1.0, %v1565
        %v1567 = vsel %vm1560, %v1565, 1.0
        %v1568 = vmul.f32 %v1566, %v1556
        %v1569 = vmul.f32 %v1567, %v1228
        %v1570 = vadd.f32 %v1568, %v1569
        %1571 = vst [vmem:[#allocation3 + $0x8] sm:$0xff] %v1570
        %v1572 = vmul.f32 %v1566, %v1557
        %v1573 = vadd.f32 %v1572, %v1567
        %1574 = vst [vmem:[#allocation4 + $0x8] sm:$0xff] %v1573
        %v1575 = vadd.f32 %v1544, %v1558
        %vm1576 = vcmp.ge.f32.partialorder %v1575, %v1049
        %v1577 = vsub.f32 %v1575, %v1049
        %v1578 = vand.u32 2147483647, %v1577
        %v1579 = vsub.f32 0.0, %v1578
        %v1580 = vmul.f32 %v1579, 1.442695
        %v1581 = vpow.pop %v1580
        %v1582 = vsel %vm1576, 1.0, %v1581
        %v1583 = vsel %vm1576, %v1581, 1.0
        %v1584 = vmul.f32 %v1582, %v1556
        %v1585 = vmul.f32 %v1583, %v1228
        %v1586 = vadd.f32 %v1584, %v1585
        %v1587 = vmul.f32 %v1582, %v1557
        %v1588 = vadd.f32 %v1587, %v1583
        %v1589 = vmax.f32 %v1575, %v1049
        %v1590 = vadd.f32 %v1525, %v1054
        %vm1591 = vcmp.ge.f32.partialorder %v1589, %v1590
        %v1592 = vsub.f32 %v1589, %v1590
        %v1593 = vand.u32 2147483647, %v1592
        %v1594 = vsub.f32 0.0, %v1593
        %v1595 = vmul.f32 %v1594, 1.442695
        %v1596 = vpow.pop %v1595
        %v1597 = vsel %vm1591, 1.0, %v1596
        %v1598 = vsel %vm1591, %v1596, 1.0
        %v1599 = vmul.f32 %v1597, %v1586
        %v1600 = vmul.f32 %v1598, %v1233
        %v1601 = vadd.f32 %v1599, %v1600
        %1602 = vst [vmem:[#allocation3 + $0x10] sm:$0xff] %v1601
        %v1603 = vmul.f32 %v1597, %v1588
        %v1604 = vadd.f32 %v1603, %v1598
        %1605 = vst [vmem:[#allocation4 + $0x10] sm:$0xff] %v1604
        %v1606 = vadd.f32 %v1544, %v1589
        %vm1607 = vcmp.ge.f32.partialorder %v1606, %v1054
        %v1608 = vsub.f32 %v1606, %v1054
        %v1609 = vand.u32 2147483647, %v1608
        %v1610 = vsub.f32 0.0, %v1609
        %v1611 = vmul.f32 %v1610, 1.442695
        %v1612 = vpow.pop %v1611
        %v1613 = vsel %vm1607, 1.0, %v1612
        %v1614 = vsel %vm1607, %v1612, 1.0
        %v1615 = vmul.f32 %v1613, %v1586
        %v1616 = vmul.f32 %v1614, %v1233
        %v1617 = vadd.f32 %v1615, %v1616
        %v1618 = vmul.f32 %v1613, %v1588
        %v1619 = vadd.f32 %v1618, %v1614
        %v1620 = vmax.f32 %v1606, %v1054
        %v1621 = vadd.f32 %v1525, %v1057
        %vm1622 = vcmp.ge.f32.partialorder %v1620, %v1621
        %v1623 = vsub.f32 %v1620, %v1621
        %v1624 = vand.u32 2147483647, %v1623
        %v1625 = vsub.f32 0.0, %v1624
        %v1626 = vmul.f32 %v1625, 1.442695
        %v1627 = vpow.pop %v1626
        %v1628 = vsel %vm1622, 1.0, %v1627
        %v1629 = vsel %vm1622, %v1627, 1.0
        %v1630 = vmul.f32 %v1628, %v1617
        %v1631 = vmul.f32 %v1629, %v1236
        %v1632 = vadd.f32 %v1630, %v1631
        %1633 = vst [vmem:[#allocation3 + $0x18] sm:$0xff] %v1632
        %v1634 = vmul.f32 %v1628, %v1619
        %v1635 = vadd.f32 %v1634, %v1629
        %1636 = vst [vmem:[#allocation4 + $0x18] sm:$0xff] %v1635
        %v1637 = vadd.f32 %v1544, %v1620
        %vm1638 = vcmp.ge.f32.partialorder %v1637, %v1057
        %v1639 = vsub.f32 %v1637, %v1057
        %v1640 = vand.u32 2147483647, %v1639
        %v1641 = vsub.f32 0.0, %v1640
        %v1642 = vmul.f32 %v1641, 1.442695
        %v1643 = vpow.pop %v1642
        %v1644 = vsel %vm1638, 1.0, %v1643
        %v1645 = vsel %vm1638, %v1643, 1.0
        %v1646 = vmul.f32 %v1644, %v1617
        %v1647 = vmul.f32 %v1645, %v1236
        %v1648 = vadd.f32 %v1646, %v1647
        %v1649 = vmul.f32 %v1644, %v1619
        %v1650 = vadd.f32 %v1649, %v1645
        %v1651 = vmax.f32 %v1637, %v1057
        %v1652 = vadd.f32 %v1525, %v1062
        %vm1653 = vcmp.ge.f32.partialorder %v1651, %v1652
        %v1654 = vsub.f32 %v1651, %v1652
        %v1655 = vand.u32 2147483647, %v1654
        %v1656 = vsub.f32 0.0, %v1655
        %v1657 = vmul.f32 %v1656, 1.442695
        %v1658 = vpow.pop %v1657
        %v1659 = vsel %vm1653, 1.0, %v1658
        %v1660 = vsel %vm1653, %v1658, 1.0
        %v1661 = vmul.f32 %v1659, %v1648
        %v1662 = vmul.f32 %v1660, %v1241
        %v1663 = vadd.f32 %v1661, %v1662
        %1664 = vst [vmem:[#allocation3 + $0x20] sm:$0xff] %v1663
        %v1665 = vmul.f32 %v1659, %v1650
        %v1666 = vadd.f32 %v1665, %v1660
        %1667 = vst [vmem:[#allocation4 + $0x20] sm:$0xff] %v1666
        %v1668 = vadd.f32 %v1544, %v1651
        %vm1669 = vcmp.ge.f32.partialorder %v1668, %v1062
        %v1670 = vsub.f32 %v1668, %v1062
        %v1671 = vand.u32 2147483647, %v1670
        %v1672 = vsub.f32 0.0, %v1671
        %v1673 = vmul.f32 %v1672, 1.442695
        %v1674 = vpow.pop %v1673
        %v1675 = vsel %vm1669, 1.0, %v1674
        %v1676 = vsel %vm1669, %v1674, 1.0
        %v1677 = vmul.f32 %v1675, %v1648
        %v1678 = vmul.f32 %v1676, %v1241
        %v1679 = vadd.f32 %v1677, %v1678
        %v1680 = vmul.f32 %v1675, %v1650
        %v1681 = vadd.f32 %v1680, %v1676
        %v1682 = vmax.f32 %v1668, %v1062
        %v1683 = vadd.f32 %v1525, %v1065
        %vm1684 = vcmp.ge.f32.partialorder %v1682, %v1683
        %v1685 = vsub.f32 %v1682, %v1683
        %v1686 = vand.u32 2147483647, %v1685
        %v1687 = vsub.f32 0.0, %v1686
        %v1688 = vmul.f32 %v1687, 1.442695
        %v1689 = vpow.pop %v1688
        %v1690 = vsel %vm1684, 1.0, %v1689
        %v1691 = vsel %vm1684, %v1689, 1.0
        %v1692 = vmul.f32 %v1690, %v1679
        %v1693 = vmul.f32 %v1691, %v1244
        %v1694 = vadd.f32 %v1692, %v1693
        %1695 = vst [vmem:[#allocation3 + $0x28] sm:$0xff] %v1694
        %v1696 = vmul.f32 %v1690, %v1681
        %v1697 = vadd.f32 %v1696, %v1691
        %1698 = vst [vmem:[#allocation4 + $0x28] sm:$0xff] %v1697
        %v1699 = vadd.f32 %v1544, %v1682
        %vm1700 = vcmp.ge.f32.partialorder %v1699, %v1065
        %v1701 = vsub.f32 %v1699, %v1065
        %v1702 = vand.u32 2147483647, %v1701
        %v1703 = vsub.f32 0.0, %v1702
        %v1704 = vmul.f32 %v1703, 1.442695
        %v1705 = vpow.pop %v1704
        %v1706 = vsel %vm1700, 1.0, %v1705
        %v1707 = vsel %vm1700, %v1705, 1.0
        %v1708 = vmul.f32 %v1706, %v1679
        %v1709 = vmul.f32 %v1707, %v1244
        %v1710 = vadd.f32 %v1708, %v1709
        %v1711 = vmul.f32 %v1706, %v1681
        %v1712 = vadd.f32 %v1711, %v1707
        %v1713 = vmax.f32 %v1699, %v1065
        %v1714 = vadd.f32 %v1525, %v1070
        %vm1715 = vcmp.ge.f32.partialorder %v1713, %v1714
        %v1716 = vsub.f32 %v1713, %v1714
        %v1717 = vand.u32 2147483647, %v1716
        %v1718 = vsub.f32 0.0, %v1717
        %v1719 = vmul.f32 %v1718, 1.442695
        %v1720 = vpow.pop %v1719
        %v1721 = vsel %vm1715, 1.0, %v1720
        %v1722 = vsel %vm1715, %v1720, 1.0
        %v1723 = vmul.f32 %v1721, %v1710
        %v1724 = vmul.f32 %v1722, %v1249
        %v1725 = vadd.f32 %v1723, %v1724
        %1726 = vst [vmem:[#allocation3 + $0x30] sm:$0xff] %v1725
        %v1727 = vmul.f32 %v1721, %v1712
        %v1728 = vadd.f32 %v1727, %v1722
        %1729 = vst [vmem:[#allocation4 + $0x30] sm:$0xff] %v1728
        %v1730 = vadd.f32 %v1544, %v1713
        %vm1731 = vcmp.ge.f32.partialorder %v1730, %v1070
        %v1732 = vsub.f32 %v1730, %v1070
        %v1733 = vand.u32 2147483647, %v1732
        %v1734 = vsub.f32 0.0, %v1733
        %v1735 = vmul.f32 %v1734, 1.442695
        %v1736 = vpow.pop %v1735
        %v1737 = vsel %vm1731, 1.0, %v1736
        %v1738 = vsel %vm1731, %v1736, 1.0
        %v1739 = vmul.f32 %v1737, %v1710
        %v1740 = vmul.f32 %v1738, %v1249
        %v1741 = vadd.f32 %v1739, %v1740
        %v1742 = vmul.f32 %v1737, %v1712
        %v1743 = vadd.f32 %v1742, %v1738
        %v1744 = vmax.f32 %v1730, %v1070
        %v1745 = vadd.f32 %v1525, %v1073
        %vm1746 = vcmp.ge.f32.partialorder %v1744, %v1745
        %v1747 = vsub.f32 %v1744, %v1745
        %v1748 = vand.u32 2147483647, %v1747
        %v1749 = vsub.f32 0.0, %v1748
        %v1750 = vmul.f32 %v1749, 1.442695
        %v1751 = vpow.pop %v1750
        %v1752 = vsel %vm1746, 1.0, %v1751
        %v1753 = vsel %vm1746, %v1751, 1.0
        %v1754 = vmul.f32 %v1752, %v1741
        %v1755 = vmul.f32 %v1753, %v1252
        %v1756 = vadd.f32 %v1754, %v1755
        %1757 = vst [vmem:[#allocation3 + $0x38] sm:$0xff] %v1756
        %v1758 = vmul.f32 %v1752, %v1743
        %v1759 = vadd.f32 %v1758, %v1753
        %1760 = vst [vmem:[#allocation4 + $0x38] sm:$0xff] %v1759
        %v1761 = vadd.f32 %v1544, %v1744
        %vm1762 = vcmp.ge.f32.partialorder %v1761, %v1073
        %v1763 = vsub.f32 %v1761, %v1073
        %v1764 = vand.u32 2147483647, %v1763
        %v1765 = vsub.f32 0.0, %v1764
        %v1766 = vmul.f32 %v1765, 1.442695
        %v1767 = vpow.pop %v1766
        %v1768 = vsel %vm1762, 1.0, %v1767
        %v1769 = vsel %vm1762, %v1767, 1.0
        %v1770 = vmul.f32 %v1768, %v1741
        %v1771 = vmul.f32 %v1769, %v1252
        %v1772 = vadd.f32 %v1770, %v1771
        %v1773 = vmul.f32 %v1768, %v1743
        %v1774 = vadd.f32 %v1773, %v1769
        %v1775 = vmax.f32 %v1761, %v1073
        %v1776 = vadd.f32 %v1525, %v1078
        %vm1777 = vcmp.ge.f32.partialorder %v1775, %v1776
        %v1778 = vsub.f32 %v1775, %v1776
        %v1779 = vand.u32 2147483647, %v1778
        %v1780 = vsub.f32 0.0, %v1779
        %v1781 = vmul.f32 %v1780, 1.442695
        %v1782 = vpow.pop %v1781
        %v1783 = vsel %vm1777, 1.0, %v1782
        %v1784 = vsel %vm1777, %v1782, 1.0
        %v1785 = vmul.f32 %v1783, %v1772
        %v1786 = vmul.f32 %v1784, %v1257
        %v1787 = vadd.f32 %v1785, %v1786
        %1788 = vst [vmem:[#allocation3 + $0x40] sm:$0xff] %v1787
        %v1789 = vmul.f32 %v1783, %v1774
        %v1790 = vadd.f32 %v1789, %v1784
        %1791 = vst [vmem:[#allocation4 + $0x40] sm:$0xff] %v1790
        %v1792 = vadd.f32 %v1544, %v1775
        %vm1793 = vcmp.ge.f32.partialorder %v1792, %v1078
        %v1794 = vsub.f32 %v1792, %v1078
        %v1795 = vand.u32 2147483647, %v1794
        %v1796 = vsub.f32 0.0, %v1795
        %v1797 = vmul.f32 %v1796, 1.442695
        %v1798 = vpow.pop %v1797
        %v1799 = vsel %vm1793, 1.0, %v1798
        %v1800 = vsel %vm1793, %v1798, 1.0
        %v1801 = vmul.f32 %v1799, %v1772
        %v1802 = vmul.f32 %v1800, %v1257
        %v1803 = vadd.f32 %v1801, %v1802
        %v1804 = vmul.f32 %v1799, %v1774
        %v1805 = vadd.f32 %v1804, %v1800
        %v1806 = vmax.f32 %v1792, %v1078
        %v1807 = vadd.f32 %v1525, %v1081
        %vm1808 = vcmp.ge.f32.partialorder %v1806, %v1807
        %v1809 = vsub.f32 %v1806, %v1807
        %v1810 = vand.u32 2147483647, %v1809
        %v1811 = vsub.f32 0.0, %v1810
        %v1812 = vmul.f32 %v1811, 1.442695
        %v1813 = vpow.pop %v1812
        %v1814 = vsel %vm1808, 1.0, %v1813
        %v1815 = vsel %vm1808, %v1813, 1.0
        %v1816 = vmul.f32 %v1814, %v1803
        %v1817 = vmul.f32 %v1815, %v1260
        %v1818 = vadd.f32 %v1816, %v1817
        %1819 = vst [vmem:[#allocation3 + $0x48] sm:$0xff] %v1818
        %v1820 = vmul.f32 %v1814, %v1805
        %v1821 = vadd.f32 %v1820, %v1815
        %1822 = vst [vmem:[#allocation4 + $0x48] sm:$0xff] %v1821
        %v1823 = vadd.f32 %v1544, %v1806
        %vm1824 = vcmp.ge.f32.partialorder %v1823, %v1081
        %v1825 = vsub.f32 %v1823, %v1081
        %v1826 = vand.u32 2147483647, %v1825
        %v1827 = vsub.f32 0.0, %v1826
        %v1828 = vmul.f32 %v1827, 1.442695
        %v1829 = vpow.pop %v1828
        %v1830 = vsel %vm1824, 1.0, %v1829
        %v1831 = vsel %vm1824, %v1829, 1.0
        %v1832 = vmul.f32 %v1830, %v1803
        %v1833 = vmul.f32 %v1831, %v1260
        %v1834 = vadd.f32 %v1832, %v1833
        %v1835 = vmul.f32 %v1830, %v1805
        %v1836 = vadd.f32 %v1835, %v1831
        %v1837 = vmax.f32 %v1823, %v1081
        %v1838 = vadd.f32 %v1525, %v1086
        %vm1839 = vcmp.ge.f32.partialorder %v1837, %v1838
        %v1840 = vsub.f32 %v1837, %v1838
        %v1841 = vand.u32 2147483647, %v1840
        %v1842 = vsub.f32 0.0, %v1841
        %v1843 = vmul.f32 %v1842, 1.442695
        %v1844 = vpow.pop %v1843
        %v1845 = vsel %vm1839, 1.0, %v1844
        %v1846 = vsel %vm1839, %v1844, 1.0
        %v1847 = vmul.f32 %v1845, %v1834
        %v1848 = vmul.f32 %v1846, %v1265
        %v1849 = vadd.f32 %v1847, %v1848
        %1850 = vst [vmem:[#allocation3 + $0x50] sm:$0xff] %v1849
        %v1851 = vmul.f32 %v1845, %v1836
        %v1852 = vadd.f32 %v1851, %v1846
        %1853 = vst [vmem:[#allocation4 + $0x50] sm:$0xff] %v1852
        %v1854 = vadd.f32 %v1544, %v1837
        %vm1855 = vcmp.ge.f32.partialorder %v1854, %v1086
        %v1856 = vsub.f32 %v1854, %v1086
        %v1857 = vand.u32 2147483647, %v1856
        %v1858 = vsub.f32 0.0, %v1857
        %v1859 = vmul.f32 %v1858, 1.442695
        %v1860 = vpow.pop %v1859
        %v1861 = vsel %vm1855, 1.0, %v1860
        %v1862 = vsel %vm1855, %v1860, 1.0
        %v1863 = vmul.f32 %v1861, %v1834
        %v1864 = vmul.f32 %v1862, %v1265
        %v1865 = vadd.f32 %v1863, %v1864
        %v1866 = vmul.f32 %v1861, %v1836
        %v1867 = vadd.f32 %v1866, %v1862
        %v1868 = vmax.f32 %v1854, %v1086
        %v1869 = vadd.f32 %v1525, %v1089
        %vm1870 = vcmp.ge.f32.partialorder %v1868, %v1869
        %v1871 = vsub.f32 %v1868, %v1869
        %v1872 = vand.u32 2147483647, %v1871
        %v1873 = vsub.f32 0.0, %v1872
        %v1874 = vmul.f32 %v1873, 1.442695
        %v1875 = vpow.pop %v1874
        %v1876 = vsel %vm1870, 1.0, %v1875
        %v1877 = vsel %vm1870, %v1875, 1.0
        %v1878 = vmul.f32 %v1876, %v1865
        %v1879 = vmul.f32 %v1877, %v1268
        %v1880 = vadd.f32 %v1878, %v1879
        %1881 = vst [vmem:[#allocation3 + $0x58] sm:$0xff] %v1880
        %v1882 = vmul.f32 %v1876, %v1867
        %v1883 = vadd.f32 %v1882, %v1877
        %1884 = vst [vmem:[#allocation4 + $0x58] sm:$0xff] %v1883
        %v1885 = vld [vmem:[#allocation4] sm:$0xff]
        %v1886 = vld [vmem:[#allocation4 + $0x8] sm:$0xff]
        %v1887 = vld [vmem:[#allocation4 + $0x10] sm:$0xff]
        %v1888 = vld [vmem:[#allocation4 + $0x18] sm:$0xff]
        %v1889 = vld [vmem:[#allocation4 + $0x20] sm:$0xff]
        %v1890 = vld [vmem:[#allocation4 + $0x28] sm:$0xff]
        %v1891 = vld [vmem:[#allocation4 + $0x30] sm:$0xff]
        %v1892 = vld [vmem:[#allocation4 + $0x38] sm:$0xff]
        %v1893 = vld [vmem:[#allocation4 + $0x40] sm:$0xff]
        %v1894 = vld [vmem:[#allocation4 + $0x48] sm:$0xff]
        %v1895 = vld [vmem:[#allocation4 + $0x50] sm:$0xff]
        %v1896 = vld [vmem:[#allocation4 + $0x58] sm:$0xff]
        %v1897 = vrcp.pop %v1885
        %v1898 = vrcp.pop %v1886
        %v1899 = vrcp.pop %v1887
        %v1900 = vrcp.pop %v1888
        %v1901 = vrcp.pop %v1889
        %v1902 = vrcp.pop %v1890
        %v1903 = vrcp.pop %v1891
        %v1904 = vrcp.pop %v1892
        %v1905 = vrcp.pop %v1893
        %v1906 = vrcp.pop %v1894
        %v1907 = vrcp.pop %v1895
        %v1908 = vrcp.pop %v1896
        %v1909 = vmul.f32 %v1885, %v1897
        %v1910 = vmul.f32 %v1886, %v1898
        %v1911 = vmul.f32 %v1887, %v1899
        %v1912 = vmul.f32 %v1888, %v1900
        %v1913 = vmul.f32 %v1889, %v1901
        %v1914 = vmul.f32 %v1890, %v1902
        %v1915 = vmul.f32 %v1891, %v1903
        %v1916 = vmul.f32 %v1892, %v1904
        %v1917 = vmul.f32 %v1893, %v1905
        %v1918 = vmul.f32 %v1894, %v1906
        %v1919 = vmul.f32 %v1895, %v1907
        %v1920 = vmul.f32 %v1896, %v1908
        %v1921 = vsub.f32 2.0, %v1909
        %v1922 = vsub.f32 2.0, %v1910
        %v1923 = vsub.f32 2.0, %v1911
        %v1924 = vsub.f32 2.0, %v1912
        %v1925 = vsub.f32 2.0, %v1913
        %v1926 = vsub.f32 2.0, %v1914
        %v1927 = vsub.f32 2.0, %v1915
        %v1928 = vsub.f32 2.0, %v1916
        %v1929 = vsub.f32 2.0, %v1917
        %v1930 = vsub.f32 2.0, %v1918
        %v1931 = vsub.f32 2.0, %v1919
        %v1932 = vsub.f32 2.0, %v1920
        %v1933 = vmul.f32 %v1897, %v1921
        %v1934 = vmul.f32 %v1898, %v1922
        %v1935 = vmul.f32 %v1899, %v1923
        %v1936 = vmul.f32 %v1900, %v1924
        %v1937 = vmul.f32 %v1901, %v1925
        %v1938 = vmul.f32 %v1902, %v1926
        %v1939 = vmul.f32 %v1903, %v1927
        %v1940 = vmul.f32 %v1904, %v1928
        %v1941 = vmul.f32 %v1905, %v1929
        %v1942 = vmul.f32 %v1906, %v1930
        %v1943 = vmul.f32 %v1907, %v1931
        %v1944 = vmul.f32 %v1908, %v1932
        %v1945 = vld [vmem:[#allocation3] sm:$0xff]
        %v1946 = vld [vmem:[#allocation3 + $0x8] sm:$0xff]
        %v1947 = vld [vmem:[#allocation3 + $0x10] sm:$0xff]
        %v1948 = vld [vmem:[#allocation3 + $0x18] sm:$0xff]
        %v1949 = vld [vmem:[#allocation3 + $0x20] sm:$0xff]
        %v1950 = vld [vmem:[#allocation3 + $0x28] sm:$0xff]
        %v1951 = vld [vmem:[#allocation3 + $0x30] sm:$0xff]
        %v1952 = vld [vmem:[#allocation3 + $0x38] sm:$0xff]
        %v1953 = vld [vmem:[#allocation3 + $0x40] sm:$0xff]
        %v1954 = vld [vmem:[#allocation3 + $0x48] sm:$0xff]
        %v1955 = vld [vmem:[#allocation3 + $0x50] sm:$0xff]
        %v1956 = vld [vmem:[#allocation3 + $0x58] sm:$0xff]
        %v1957 = vmul.f32 %v1945, %v1933
        %v1958 = vmul.f32 %v1946, %v1934
        %v1959 = vmul.f32 %v1947, %v1935
        %v1960 = vmul.f32 %v1948, %v1936
        %v1961 = vmul.f32 %v1949, %v1937
        %v1962 = vmul.f32 %v1950, %v1938
        %v1963 = vmul.f32 %v1951, %v1939
        %v1964 = vmul.f32 %v1952, %v1940
        %v1965 = vmul.f32 %v1953, %v1941
        %v1966 = vmul.f32 %v1954, %v1942
        %v1967 = vmul.f32 %v1955, %v1943
        %v1968 = vmul.f32 %v1956, %v1944
        %v1969 = vld [vmem:[#allocation2] sm:$0xff]
        %v1970 = vld [vmem:[#allocation2 + $0x8] sm:$0xff]
        %v1971 = vld [vmem:[#allocation2 + $0x10] sm:$0xff]
        %v1972 = vld [vmem:[#allocation2 + $0x18] sm:$0xff]
        %v1973 = vld [vmem:[#allocation2 + $0x20] sm:$0xff]
        %v1974 = vld [vmem:[#allocation2 + $0x28] sm:$0xff]
        %v1975 = vld [vmem:[#allocation2 + $0x30] sm:$0xff]
        %v1976 = vld [vmem:[#allocation2 + $0x38] sm:$0xff]
        %v1977 = vld [vmem:[#allocation2 + $0x40] sm:$0xff]
        %v1978 = vld [vmem:[#allocation2 + $0x48] sm:$0xff]
        %v1979 = vld [vmem:[#allocation2 + $0x50] sm:$0xff]
        %v1980 = vld [vmem:[#allocation2 + $0x58] sm:$0xff]
        %v1981 = vmul.f32 %v1499, %v1957
        %v1982 = vmul.f32 %v1501, %v1958
        %v1983 = vmul.f32 %v1503, %v1959
        %v1984 = vmul.f32 %v1505, %v1960
        %v1985 = vmul.f32 %v1507, %v1961
        %v1986 = vmul.f32 %v1509, %v1962
        %v1987 = vmul.f32 %v1511, %v1963
        %v1988 = vmul.f32 %v1513, %v1964
        %v1989 = vmul.f32 %v1515, %v1965
        %v1990 = vmul.f32 %v1517, %v1966
        %v1991 = vmul.f32 %v1519, %v1967
        %v1992 = vmul.f32 %v1521, %v1968
        %v1993 = vld [vmem:[%s514] sm:$0xf]
        %v1994 = vld [vmem:[%s514 + $0x4] sm:$0xf]
        %v1995 = vld [vmem:[%s514 + $0x8] sm:$0xf]
        %v1996 = vld [vmem:[%s514 + $0xc] sm:$0xf]
        %v1997 = vld [vmem:[%s514 + $0x10] sm:$0xf]
        %v1998 = vld [vmem:[%s514 + $0x14] sm:$0xf]
        %v1999 = vld [vmem:[%s514 + $0x18] sm:$0xf]
        %v2000 = vld [vmem:[%s514 + $0x1c] sm:$0xf]
        %v2001 = vld [vmem:[%s514 + $0x20] sm:$0xf]
        %v2002 = vld [vmem:[%s514 + $0x24] sm:$0xf]
        %v2003 = vld [vmem:[%s514 + $0x28] sm:$0xf]
        %v2004 = vld [vmem:[%s514 + $0x2c] sm:$0xf]
        %v2005 = vld [vmem:[%s514 + $0x30] sm:$0xf]
        %v2006 = vld [vmem:[%s514 + $0x34] sm:$0xf]
        %v2007 = vld [vmem:[%s514 + $0x38] sm:$0xf]
        %v2008 = vld [vmem:[%s514 + $0x3c] sm:$0xf]
        %v2009 = vpack.c.bf16 %v1982, %v1981
        %v2010 = vpack.c.bf16 %v1984, %v1983
        %v2011 = vpack.c.bf16 %v1986, %v1985
        %v2012 = vpack.c.bf16 %v1988, %v1987
        %v2013 = vpack.c.bf16 %v1990, %v1989
        %v2014 = vpack.c.bf16 %v1992, %v1991
        %v2031 = vunpack.c.l.b16 %v1993
        %v2032 = vunpack.c.l.b16 %v1994
        %v2033 = vunpack.c.l.b16 %v1995
        %v2034 = vunpack.c.l.b16 %v1996
        %v2035 = vunpack.c.l.b16 %v1997
        %v2036 = vunpack.c.l.b16 %v1998
        %v2037 = vunpack.c.l.b16 %v1999
        %v2038 = vunpack.c.l.b16 %v2000
        %v2039 = vunpack.c.l.b16 %v2001
        %v2040 = vunpack.c.l.b16 %v2002
        %v2041 = vunpack.c.l.b16 %v2003
        %v2042 = vunpack.c.l.b16 %v2004
        %v2043 = vunpack.c.l.b16 %v2005
        %v2044 = vunpack.c.l.b16 %v2006
        %v2045 = vunpack.c.l.b16 %v2007
        %v2046 = vunpack.c.l.b16 %v2008
        %v2047 = vpack.c.b16 %v2032, %v2031
        %v2048 = vpack.c.b16 %v2034, %v2033
        %v2049 = vpack.c.b16 %v2036, %v2035
        %v2050 = vpack.c.b16 %v2038, %v2037
        %v2051 = vpack.c.b16 %v2040, %v2039
        %v2052 = vpack.c.b16 %v2042, %v2041
        %v2053 = vpack.c.b16 %v2044, %v2043
        %v2054 = vpack.c.b16 %v2046, %v2045
        %2063 = vmatprep.subr.bf16.mxu0 0
        %2064 = vmatpush1.bf16.msra.mxu0 %v2047
        %2065 = vmatprep.subr.bf16.mxu0 0
        %2066 = vmatpush1.bf16.msra.mxu0 %v2048
        %2067 = vmatprep.subr.bf16.mxu0 0
        %2068 = vmatpush1.bf16.msra.mxu0 %v2049
        %2069 = vmatprep.subr.bf16.mxu0 0
        %2070 = vmatpush1.bf16.msra.mxu0 %v2050
        %2071 = vmatprep.subr.bf16.mxu0 0
        %2072 = vmatpush1.bf16.msra.mxu0 %v2051
        %2073 = vmatprep.subr.bf16.mxu0 0
        %2074 = vmatpush1.bf16.msra.mxu0 %v2052
        %2075 = vmatprep.subr.bf16.mxu0 0
        %2076 = vmatpush1.bf16.msra.mxu0 %v2053
        %2077 = vmatprep.subr.bf16.mxu0 0
        %2078 = vmatpush1.bf16.msra.mxu0 %v2054
        %2079 = vmatprep.subr.bf16.mxu0 0
        %2080 = vmatpush1.bf16.msra.mxu0 0
        %2081 = vmatprep.subr.bf16.mxu0 0
        %2082 = vmatpush1.bf16.msra.mxu0 0
        %2083 = vmatprep.subr.bf16.mxu0 0
        %2084 = vmatpush1.bf16.msra.mxu0 0
        %2085 = vmatprep.subr.bf16.mxu0 0
        %2086 = vmatpush1.bf16.msra.mxu0 0
        %2087 = vmatprep.subr.bf16.mxu0 0
        %2088 = vmatpush1.bf16.msra.mxu0 0
        %2089 = vmatprep.subr.bf16.mxu0 0
        %2090 = vmatpush1.bf16.msra.mxu0 0
        %2091 = vmatprep.subr.bf16.mxu0 0
        %2092 = vmatpush1.bf16.msra.mxu0 0
        %2093 = vmatprep.subr.bf16.mxu0 0
        %2094 = vmatpush1.bf16.msra.mxu0 0
        %2095 = vmatprep.mubr.bf16.mxu0 0
        %2096 = vmatmul.mubr.bf16.gmra.mrb[0].mxu0 %v2009
        %v2097 = vpop.f32.mrb[0].mxu0
        %v2098 = vadd.f32 0.0, %v2097
        %v2099 = vpop.f32.mrb[0].mxu0
        %v2100 = vpop.f32.mrb[0].mxu0
        %v2101 = vadd.f32 0.0, %v2100
        %v2102 = vpop.f32.mrb[0].mxu0
        %2103 = vmatprep.mubr.bf16.mxu0 0
        %2104 = vmatmul.mubr.bf16.gmra.mrb[0].mxu0 %v2010
        %v2105 = vpop.f32.mrb[0].mxu0
        %v2106 = vadd.f32 0.0, %v2105
        %v2107 = vpop.f32.mrb[0].mxu0
        %v2108 = vpop.f32.mrb[0].mxu0
        %v2109 = vadd.f32 0.0, %v2108
        %v2110 = vpop.f32.mrb[0].mxu0
        %2111 = vmatprep.mubr.bf16.mxu0 0
        %2112 = vmatmul.mubr.bf16.gmra.mrb[0].mxu0 %v2011
        %v2113 = vpop.f32.mrb[0].mxu0
        %v2114 = vadd.f32 0.0, %v2113
        %v2115 = vpop.f32.mrb[0].mxu0
        %v2116 = vpop.f32.mrb[0].mxu0
        %v2117 = vadd.f32 0.0, %v2116
        %v2118 = vpop.f32.mrb[0].mxu0
        %2119 = vmatprep.mubr.bf16.mxu0 0
        %2120 = vmatmul.mubr.bf16.gmra.mrb[0].mxu0 %v2012
        %v2121 = vpop.f32.mrb[0].mxu0
        %v2122 = vadd.f32 0.0, %v2121
        %v2123 = vpop.f32.mrb[0].mxu0
        %v2124 = vpop.f32.mrb[0].mxu0
        %v2125 = vadd.f32 0.0, %v2124
        %v2126 = vpop.f32.mrb[0].mxu0
        %2127 = vmatprep.mubr.bf16.mxu0 0
        %2128 = vmatmul.mubr.bf16.gmra.mrb[0].mxu0 %v2013
        %v2129 = vpop.f32.mrb[0].mxu0
        %v2130 = vadd.f32 0.0, %v2129
        %v2131 = vpop.f32.mrb[0].mxu0
        %v2132 = vpop.f32.mrb[0].mxu0
        %v2133 = vadd.f32 0.0, %v2132
        %v2134 = vpop.f32.mrb[0].mxu0
        %2135 = vmatprep.mubr.bf16.mxu0 0
        %2136 = vmatmul.mubr.bf16.gmra.mrb[0].mxu0 %v2014
        %v2137 = vpop.f32.mrb[0].mxu0
        %v2138 = vadd.f32 0.0, %v2137
        %v2139 = vpop.f32.mrb[0].mxu0
        %v2140 = vpop.f32.mrb[0].mxu0
        %v2141 = vadd.f32 0.0, %v2140
        %v2142 = vpop.f32.mrb[0].mxu0
        %2143 = vdwg.mxu0
        %v2144 = vadd.f32 %v1969, %v2098
        %v2145 = vadd.f32 %v1970, %v2101
        %v2146 = vadd.f32 %v1971, %v2106
        %v2147 = vadd.f32 %v1972, %v2109
        %v2148 = vadd.f32 %v1973, %v2114
        %v2149 = vadd.f32 %v1974, %v2117
        %v2150 = vadd.f32 %v1975, %v2122
        %v2151 = vadd.f32 %v1976, %v2125
        %v2152 = vadd.f32 %v1977, %v2130
        %v2153 = vadd.f32 %v1978, %v2133
        %v2154 = vadd.f32 %v1979, %v2138
        %v2155 = vadd.f32 %v1980, %v2141
        %2156 = vadd.xlane.f32.xlu0 %v2144
        %v2157 = vpop.xlane.xlu0 %2156
        %2158 = vadd.xlane.f32.xlu0 %v2145
        %v2159 = vpop.xlane.xlu0 %2158
        %2160 = vadd.xlane.f32.xlu0 %v2146
        %v2161 = vpop.xlane.xlu0 %2160
        %2162 = vadd.xlane.f32.xlu0 %v2147
        %v2163 = vpop.xlane.xlu0 %2162
        %2164 = vadd.xlane.f32.xlu0 %v2148
        %v2165 = vpop.xlane.xlu0 %2164
        %2166 = vadd.xlane.f32.xlu0 %v2149
        %v2167 = vpop.xlane.xlu0 %2166
        %2168 = vadd.xlane.f32.xlu0 %v2150
        %v2169 = vpop.xlane.xlu0 %2168
        %2170 = vadd.xlane.f32.xlu0 %v2151
        %v2171 = vpop.xlane.xlu0 %2170
        %2172 = vadd.xlane.f32.xlu0 %v2152
        %v2173 = vpop.xlane.xlu0 %2172
        %2174 = vadd.xlane.f32.xlu0 %v2153
        %v2175 = vpop.xlane.xlu0 %2174
        %2176 = vadd.xlane.f32.xlu0 %v2154
        %v2177 = vpop.xlane.xlu0 %2176
        %2178 = vadd.xlane.f32.xlu0 %v2155
        %v2179 = vpop.xlane.xlu0 %2178
        %v2180 = vmul.f32 %v2157, %v748
        %v2181 = vmul.f32 %v2159, %v748
        %v2182 = vmul.f32 %v2161, %v748
        %v2183 = vmul.f32 %v2163, %v748
        %v2184 = vmul.f32 %v2165, %v748
        %v2185 = vmul.f32 %v2167, %v748
        %v2186 = vmul.f32 %v2169, %v748
        %v2187 = vmul.f32 %v2171, %v748
        %v2188 = vmul.f32 %v2173, %v748
        %v2189 = vmul.f32 %v2175, %v748
        %v2190 = vmul.f32 %v2177, %v748
        %v2191 = vmul.f32 %v2179, %v748
        %v2192 = vsub.f32 %v2144, %v2180
        %v2193 = vsub.f32 %v2145, %v2181
        %v2194 = vsub.f32 %v2146, %v2182
        %v2195 = vsub.f32 %v2147, %v2183
        %v2196 = vsub.f32 %v2148, %v2184
        %v2197 = vsub.f32 %v2149, %v2185
        %v2198 = vsub.f32 %v2150, %v2186
        %v2199 = vsub.f32 %v2151, %v2187
        %v2200 = vsub.f32 %v2152, %v2188
        %v2201 = vsub.f32 %v2153, %v2189
        %v2202 = vsub.f32 %v2154, %v2190
        %v2203 = vsub.f32 %v2155, %v2191
        %v2204 = vmul.f32 %v2192, %v2192
        %v2205 = vmul.f32 %v2193, %v2193
        %v2206 = vmul.f32 %v2194, %v2194
        %v2207 = vmul.f32 %v2195, %v2195
        %v2208 = vmul.f32 %v2196, %v2196
        %v2209 = vmul.f32 %v2197, %v2197
        %v2210 = vmul.f32 %v2198, %v2198
        %v2211 = vmul.f32 %v2199, %v2199
        %v2212 = vmul.f32 %v2200, %v2200
        %v2213 = vmul.f32 %v2201, %v2201
        %v2214 = vmul.f32 %v2202, %v2202
        %v2215 = vmul.f32 %v2203, %v2203
        %2216 = vadd.xlane.f32.xlu0 %v2204
        %v2217 = vpop.xlane.xlu0 %2216
        %2218 = vadd.xlane.f32.xlu0 %v2205
        %v2219 = vpop.xlane.xlu0 %2218
        %2220 = vadd.xlane.f32.xlu0 %v2206
        %v2221 = vpop.xlane.xlu0 %2220
        %2222 = vadd.xlane.f32.xlu0 %v2207
        %v2223 = vpop.xlane.xlu0 %2222
        %2224 = vadd.xlane.f32.xlu0 %v2208
        %v2225 = vpop.xlane.xlu0 %2224
        %2226 = vadd.xlane.f32.xlu0 %v2209
        %v2227 = vpop.xlane.xlu0 %2226
        %2228 = vadd.xlane.f32.xlu0 %v2210
        %v2229 = vpop.xlane.xlu0 %2228
        %2230 = vadd.xlane.f32.xlu0 %v2211
        %v2231 = vpop.xlane.xlu0 %2230
        %2232 = vadd.xlane.f32.xlu0 %v2212
        %v2233 = vpop.xlane.xlu0 %2232
        %2234 = vadd.xlane.f32.xlu0 %v2213
        %v2235 = vpop.xlane.xlu0 %2234
        %2236 = vadd.xlane.f32.xlu0 %v2214
        %v2237 = vpop.xlane.xlu0 %2236
        %2238 = vadd.xlane.f32.xlu0 %v2215
        %v2239 = vpop.xlane.xlu0 %2238
        %v2240 = vmul.f32 %v2217, %v748
        %v2241 = vmul.f32 %v2219, %v748
        %v2242 = vmul.f32 %v2221, %v748
        %v2243 = vmul.f32 %v2223, %v748
        %v2244 = vmul.f32 %v2225, %v748
        %v2245 = vmul.f32 %v2227, %v748
        %v2246 = vmul.f32 %v2229, %v748
        %v2247 = vmul.f32 %v2231, %v748
        %v2248 = vmul.f32 %v2233, %v748
        %v2249 = vmul.f32 %v2235, %v748
        %v2250 = vmul.f32 %v2237, %v748
        %v2251 = vmul.f32 %v2239, %v748
        %v2252 = vadd.f32 %v2240, 1e-05
        %v2253 = vadd.f32 %v2241, 1e-05
        %v2254 = vadd.f32 %v2242, 1e-05
        %v2255 = vadd.f32 %v2243, 1e-05
        %v2256 = vadd.f32 %v2244, 1e-05
        %v2257 = vadd.f32 %v2245, 1e-05
        %v2258 = vadd.f32 %v2246, 1e-05
        %v2259 = vadd.f32 %v2247, 1e-05
        %v2260 = vadd.f32 %v2248, 1e-05
        %v2261 = vadd.f32 %v2249, 1e-05
        %v2262 = vadd.f32 %v2250, 1e-05
        %v2263 = vadd.f32 %v2251, 1e-05
        %v2264 = vrsqrt.pop %v2252
        %v2265 = vrsqrt.pop %v2253
        %v2266 = vrsqrt.pop %v2254
        %v2267 = vrsqrt.pop %v2255
        %v2268 = vrsqrt.pop %v2256
        %v2269 = vrsqrt.pop %v2257
        %v2270 = vrsqrt.pop %v2258
        %v2271 = vrsqrt.pop %v2259
        %v2272 = vrsqrt.pop %v2260
        %v2273 = vrsqrt.pop %v2261
        %v2274 = vrsqrt.pop %v2262
        %v2275 = vrsqrt.pop %v2263
        %v2276 = vmul.f32 %v2192, %v2264
        %v2277 = vmul.f32 %v2193, %v2265
        %v2278 = vmul.f32 %v2194, %v2266
        %v2279 = vmul.f32 %v2195, %v2267
        %v2280 = vmul.f32 %v2196, %v2268
        %v2281 = vmul.f32 %v2197, %v2269
        %v2282 = vmul.f32 %v2198, %v2270
        %v2283 = vmul.f32 %v2199, %v2271
        %v2284 = vmul.f32 %v2200, %v2272
        %v2285 = vmul.f32 %v2201, %v2273
        %v2286 = vmul.f32 %v2202, %v2274
        %v2287 = vmul.f32 %v2203, %v2275
        %v2288 = vlaneseq
        %v2289 = vshrl.u32 %v2288, 7
        %v2290 = vsub.s32 2, %v2289
        %v2291 = vrot.slane %v685, %v2290
        %v2292 = vmul.f32 %v2276, %v2291
        %v2293 = vmul.f32 %v2277, %v2291
        %v2294 = vmul.f32 %v2278, %v2291
        %v2295 = vmul.f32 %v2279, %v2291
        %v2296 = vmul.f32 %v2280, %v2291
        %v2297 = vmul.f32 %v2281, %v2291
        %v2298 = vmul.f32 %v2282, %v2291
        %v2299 = vmul.f32 %v2283, %v2291
        %v2300 = vmul.f32 %v2284, %v2291
        %v2301 = vmul.f32 %v2285, %v2291
        %v2302 = vmul.f32 %v2286, %v2291
        %v2303 = vmul.f32 %v2287, %v2291
        %v2304 = vlaneseq
        %v2305 = vshrl.u32 %v2304, 7
        %v2306 = vsub.s32 3, %v2305
        %v2307 = vrot.slane %v685, %v2306
        %v2308 = vadd.f32 %v2292, %v2307
        %v2309 = vadd.f32 %v2293, %v2307
        %v2310 = vadd.f32 %v2294, %v2307
        %v2311 = vadd.f32 %v2295, %v2307
        %v2312 = vadd.f32 %v2296, %v2307
        %v2313 = vadd.f32 %v2297, %v2307
        %v2314 = vadd.f32 %v2298, %v2307
        %v2315 = vadd.f32 %v2299, %v2307
        %v2316 = vadd.f32 %v2300, %v2307
        %v2317 = vadd.f32 %v2301, %v2307
        %v2318 = vadd.f32 %v2302, %v2307
        %v2319 = vadd.f32 %v2303, %v2307
        %v2320 = vsel %vm700, 0.0, %v2319
        %v2321 = vsel %vm701, 0.0, %v2308
        %v2322 = vsel %vm702, 0.0, %v2309
        %v2323 = vsel %vm703, 0.0, %v2310
        %v2324 = vsel %vm704, 0.0, %v2311
        %v2325 = vsel %vm705, 0.0, %v2312
        %v2326 = vsel %vm706, 0.0, %v2313
        %v2327 = vsel %vm707, 0.0, %v2314
        %v2328 = vsel %vm708, 0.0, %v2315
        %v2329 = vsel %vm709, 0.0, %v2316
        %v2330 = vsel %vm710, 0.0, %v2317
        %v2331 = vsel %vm711, 0.0, %v2318
        %v2332 = vsub.f32 %v2308, %v2320
        %v2333 = vsub.f32 %v2309, %v2321
        %v2334 = vsub.f32 %v2310, %v2322
        %v2335 = vsub.f32 %v2311, %v2323
        %v2336 = vsub.f32 %v2312, %v2324
        %v2337 = vsub.f32 %v2313, %v2325
        %v2338 = vsub.f32 %v2314, %v2326
        %v2339 = vsub.f32 %v2315, %v2327
        %v2340 = vsub.f32 %v2316, %v2328
        %v2341 = vsub.f32 %v2317, %v2329
        %v2342 = vsub.f32 %v2318, %v2330
        %v2343 = vsub.f32 %v2319, %v2331
        %v2344 = vlaneseq
        %v2345 = vshrl.u32 %v2344, 7
        %v2346 = vsub.s32 1, %v2345
        %v2347 = vrot.slane %v686, %v2346
        %v2348 = vmul.f32 %v2347, %v2332
        %v2349 = vmul.f32 %v2347, %v2333
        %v2350 = vmul.f32 %v2347, %v2334
        %v2351 = vmul.f32 %v2347, %v2335
        %v2352 = vmul.f32 %v2347, %v2336
        %v2353 = vmul.f32 %v2347, %v2337
        %v2354 = vmul.f32 %v2347, %v2338
        %v2355 = vmul.f32 %v2347, %v2339
        %v2356 = vmul.f32 %v2347, %v2340
        %v2357 = vmul.f32 %v2347, %v2341
        %v2358 = vmul.f32 %v2347, %v2342
        %v2359 = vmul.f32 %v2347, %v2343
        %v2360 = vadd.f32 %v2320, %v2348
        %v2361 = vadd.f32 %v2321, %v2349
        %v2362 = vadd.f32 %v2322, %v2350
        %v2363 = vadd.f32 %v2323, %v2351
        %v2364 = vadd.f32 %v2324, %v2352
        %v2365 = vadd.f32 %v2325, %v2353
        %v2366 = vadd.f32 %v2326, %v2354
        %v2367 = vadd.f32 %v2327, %v2355
        %v2368 = vadd.f32 %v2328, %v2356
        %v2369 = vadd.f32 %v2329, %v2357
        %v2370 = vadd.f32 %v2330, %v2358
        %v2371 = vadd.f32 %v2331, %v2359
        %v2372 = vld [vmem:[%s612] sm:$0xff]
        %v2373 = vld [vmem:[%s612 + $0x8] sm:$0xff]
        %v2374 = vld [vmem:[%s612 + $0x10] sm:$0xff]
        %v2375 = vld [vmem:[%s612 + $0x18] sm:$0xff]
        %v2376 = vld [vmem:[%s612 + $0x20] sm:$0xff]
        %v2377 = vld [vmem:[%s612 + $0x28] sm:$0xff]
        %v2378 = vld [vmem:[%s612 + $0x30] sm:$0xff]
        %v2379 = vld [vmem:[%s612 + $0x38] sm:$0xff]
        %v2380 = vld [vmem:[%s612 + $0x40] sm:$0xff]
        %v2381 = vld [vmem:[%s612 + $0x48] sm:$0xff]
        %v2382 = vld [vmem:[%s612 + $0x50] sm:$0xff]
        %v2383 = vld [vmem:[%s612 + $0x58] sm:$0xff]
        %v2384 = vld [vmem:[%s612 + $0x60] sm:$0xff]
        %v2385 = vld [vmem:[%s612 + $0x68] sm:$0xff]
        %v2386 = vld [vmem:[%s612 + $0x70] sm:$0xff]
        %v2387 = vld [vmem:[%s612 + $0x78] sm:$0xff]
        %v2388 = vld [vmem:[%s612 + $0x80] sm:$0xff]
        %v2389 = vld [vmem:[%s612 + $0x88] sm:$0xff]
        %v2390 = vld [vmem:[%s612 + $0x90] sm:$0xff]
        %v2391 = vld [vmem:[%s612 + $0x98] sm:$0xff]
        %v2392 = vld [vmem:[%s612 + $0xa0] sm:$0xff]
        %v2393 = vld [vmem:[%s612 + $0xa8] sm:$0xff]
        %v2394 = vld [vmem:[%s612 + $0xb0] sm:$0xff]
        %v2395 = vld [vmem:[%s612 + $0xb8] sm:$0xff]
        %v2396 = vld [vmem:[%s612 + $0xc0] sm:$0xff]
        %v2397 = vld [vmem:[%s612 + $0xc8] sm:$0xff]
        %v2398 = vld [vmem:[%s612 + $0xd0] sm:$0xff]
        %v2399 = vld [vmem:[%s612 + $0xd8] sm:$0xff]
        %v2400 = vld [vmem:[%s612 + $0xe0] sm:$0xff]
        %v2401 = vld [vmem:[%s612 + $0xe8] sm:$0xff]
        %v2402 = vld [vmem:[%s612 + $0xf0] sm:$0xff]
        %v2403 = vld [vmem:[%s612 + $0xf8] sm:$0xff]
        %v2404 = vpack.c.bf16 %v2361, %v2360
        %v2405 = vpack.c.bf16 %v2363, %v2362
        %v2406 = vpack.c.bf16 %v2365, %v2364
        %v2407 = vpack.c.bf16 %v2367, %v2366
        %v2408 = vpack.c.bf16 %v2369, %v2368
        %v2409 = vpack.c.bf16 %v2371, %v2370
        %v2442 = vunpack.c.l.b16 %v2372
        %v2443 = vunpack.c.h.b16 %v2372
        %v2444 = vunpack.c.l.b16 %v2373
        %v2445 = vunpack.c.h.b16 %v2373
        %v2446 = vunpack.c.l.b16 %v2374
        %v2447 = vunpack.c.h.b16 %v2374
        %v2448 = vunpack.c.l.b16 %v2375
        %v2449 = vunpack.c.h.b16 %v2375
        %v2450 = vunpack.c.l.b16 %v2376
        %v2451 = vunpack.c.h.b16 %v2376
        %v2452 = vunpack.c.l.b16 %v2377
        %v2453 = vunpack.c.h.b16 %v2377
        %v2454 = vunpack.c.l.b16 %v2378
        %v2455 = vunpack.c.h.b16 %v2378
        %v2456 = vunpack.c.l.b16 %v2379
        %v2457 = vunpack.c.h.b16 %v2379
        %v2458 = vunpack.c.l.b16 %v2380
        %v2459 = vunpack.c.h.b16 %v2380
        %v2460 = vunpack.c.l.b16 %v2381
        %v2461 = vunpack.c.h.b16 %v2381
        %v2462 = vunpack.c.l.b16 %v2382
        %v2463 = vunpack.c.h.b16 %v2382
        %v2464 = vunpack.c.l.b16 %v2383
        %v2465 = vunpack.c.h.b16 %v2383
        %v2466 = vunpack.c.l.b16 %v2384
        %v2467 = vunpack.c.h.b16 %v2384
        %v2468 = vunpack.c.l.b16 %v2385
        %v2469 = vunpack.c.h.b16 %v2385
        %v2470 = vunpack.c.l.b16 %v2386
        %v2471 = vunpack.c.h.b16 %v2386
        %v2472 = vunpack.c.l.b16 %v2387
        %v2473 = vunpack.c.h.b16 %v2387
        %v2474 = vunpack.c.l.b16 %v2388
        %v2475 = vunpack.c.h.b16 %v2388
        %v2476 = vunpack.c.l.b16 %v2389
        %v2477 = vunpack.c.h.b16 %v2389
        %v2478 = vunpack.c.l.b16 %v2390
        %v2479 = vunpack.c.h.b16 %v2390
        %v2480 = vunpack.c.l.b16 %v2391
        %v2481 = vunpack.c.h.b16 %v2391
        %v2482 = vunpack.c.l.b16 %v2392
        %v2483 = vunpack.c.h.b16 %v2392
        %v2484 = vunpack.c.l.b16 %v2393
        %v2485 = vunpack.c.h.b16 %v2393
        %v2486 = vunpack.c.l.b16 %v2394
        %v2487 = vunpack.c.h.b16 %v2394
        %v2488 = vunpack.c.l.b16 %v2395
        %v2489 = vunpack.c.h.b16 %v2395
        %v2490 = vunpack.c.l.b16 %v2396
        %v2491 = vunpack.c.h.b16 %v2396
        %v2492 = vunpack.c.l.b16 %v2397
        %v2493 = vunpack.c.h.b16 %v2397
        %v2494 = vunpack.c.l.b16 %v2398
        %v2495 = vunpack.c.h.b16 %v2398
        %v2496 = vunpack.c.l.b16 %v2399
        %v2497 = vunpack.c.h.b16 %v2399
        %v2498 = vunpack.c.l.b16 %v2400
        %v2499 = vunpack.c.h.b16 %v2400
        %v2500 = vunpack.c.l.b16 %v2401
        %v2501 = vunpack.c.h.b16 %v2401
        %v2502 = vunpack.c.l.b16 %v2402
        %v2503 = vunpack.c.h.b16 %v2402
        %v2504 = vunpack.c.l.b16 %v2403
        %v2505 = vunpack.c.h.b16 %v2403
        %v2506 = vpack.c.b16 %v2446, %v2442
        %v2507 = vpack.c.b16 %v2447, %v2443
        %v2508 = vpack.c.b16 %v2448, %v2444
        %v2509 = vpack.c.b16 %v2449, %v2445
        %v2510 = vpack.c.b16 %v2454, %v2450
        %v2511 = vpack.c.b16 %v2455, %v2451
        %v2512 = vpack.c.b16 %v2456, %v2452
        %v2513 = vpack.c.b16 %v2457, %v2453
        %v2514 = vpack.c.b16 %v2462, %v2458
        %v2515 = vpack.c.b16 %v2463, %v2459
        %v2516 = vpack.c.b16 %v2464, %v2460
        %v2517 = vpack.c.b16 %v2465, %v2461
        %v2518 = vpack.c.b16 %v2470, %v2466
        %v2519 = vpack.c.b16 %v2471, %v2467
        %v2520 = vpack.c.b16 %v2472, %v2468
        %v2521 = vpack.c.b16 %v2473, %v2469
        %v2522 = vpack.c.b16 %v2478, %v2474
        %v2523 = vpack.c.b16 %v2479, %v2475
        %v2524 = vpack.c.b16 %v2480, %v2476
        %v2525 = vpack.c.b16 %v2481, %v2477
        %v2526 = vpack.c.b16 %v2486, %v2482
        %v2527 = vpack.c.b16 %v2487, %v2483
        %v2528 = vpack.c.b16 %v2488, %v2484
        %v2529 = vpack.c.b16 %v2489, %v2485
        %v2530 = vpack.c.b16 %v2494, %v2490
        %v2531 = vpack.c.b16 %v2495, %v2491
        %v2532 = vpack.c.b16 %v2496, %v2492
        %v2533 = vpack.c.b16 %v2497, %v2493
        %v2534 = vpack.c.b16 %v2502, %v2498
        %v2535 = vpack.c.b16 %v2503, %v2499
        %v2536 = vpack.c.b16 %v2504, %v2500
        %v2537 = vpack.c.b16 %v2505, %v2501
        %2570 = vmatprep.subr.bf16.mxu0 %v2507
        %2571 = vmatpush1.bf16.msra.mxu0 %v2506
        %2572 = vmatprep.subr.bf16.mxu0 %v2511
        %2573 = vmatpush1.bf16.msra.mxu0 %v2510
        %2574 = vmatprep.subr.bf16.mxu0 %v2515
        %2575 = vmatpush1.bf16.msra.mxu0 %v2514
        %2576 = vmatprep.subr.bf16.mxu0 %v2519
        %2577 = vmatpush1.bf16.msra.mxu0 %v2518
        %2578 = vmatprep.subr.bf16.mxu0 %v2523
        %2579 = vmatpush1.bf16.msra.mxu0 %v2522
        %2580 = vmatprep.subr.bf16.mxu0 %v2527
        %2581 = vmatpush1.bf16.msra.mxu0 %v2526
        %2582 = vmatprep.subr.bf16.mxu0 %v2531
        %2583 = vmatpush1.bf16.msra.mxu0 %v2530
        %2584 = vmatprep.subr.bf16.mxu0 %v2535
        %2585 = vmatpush1.bf16.msra.mxu0 %v2534
        %2586 = vmatprep.subr.bf16.mxu0 0
        %2587 = vmatpush1.bf16.msra.mxu0 0
        %2588 = vmatprep.subr.bf16.mxu0 0
        %2589 = vmatpush1.bf16.msra.mxu0 0
        %2590 = vmatprep.subr.bf16.mxu0 0
        %2591 = vmatpush1.bf16.msra.mxu0 0
        %2592 = vmatprep.subr.bf16.mxu0 0
        %2593 = vmatpush1.bf16.msra.mxu0 0
        %2594 = vmatprep.subr.bf16.mxu0 0
        %2595 = vmatpush1.bf16.msra.mxu0 0
        %2596 = vmatprep.subr.bf16.mxu0 0
        %2597 = vmatpush1.bf16.msra.mxu0 0
        %2598 = vmatprep.subr.bf16.mxu0 0
        %2599 = vmatpush1.bf16.msra.mxu0 0
        %2600 = vmatprep.subr.bf16.mxu0 0
        %2601 = vmatpush1.bf16.msra.mxu0 0
        %2602 = vmatprep.mubr.bf16.mxu0 0
        %2603 = vmatmul.mubr.bf16.gmra.mrb[0].mxu0 %v2404
        %v2604 = vpop.f32.mrb[0].mxu0
        %v2605 = vadd.f32 0.0, %v2604
        %v2606 = vpop.f32.mrb[0].mxu0
        %v2607 = vadd.f32 0.0, %v2606
        %v2608 = vpop.f32.mrb[0].mxu0
        %v2609 = vadd.f32 0.0, %v2608
        %v2610 = vpop.f32.mrb[0].mxu0
        %v2611 = vadd.f32 0.0, %v2610
        %2612 = vmatprep.mubr.bf16.mxu0 0
        %2613 = vmatmul.mubr.bf16.gmra.mrb[0].mxu0 %v2405
        %v2614 = vpop.f32.mrb[0].mxu0
        %v2615 = vadd.f32 0.0, %v2614
        %v2616 = vpop.f32.mrb[0].mxu0
        %v2617 = vadd.f32 0.0, %v2616
        %v2618 = vpop.f32.mrb[0].mxu0
        %v2619 = vadd.f32 0.0, %v2618
        %v2620 = vpop.f32.mrb[0].mxu0
        %v2621 = vadd.f32 0.0, %v2620
        %2622 = vmatprep.mubr.bf16.mxu0 0
        %2623 = vmatmul.mubr.bf16.gmra.mrb[0].mxu0 %v2406
        %v2624 = vpop.f32.mrb[0].mxu0
        %v2625 = vadd.f32 0.0, %v2624
        %v2626 = vpop.f32.mrb[0].mxu0
        %v2627 = vadd.f32 0.0, %v2626
        %v2628 = vpop.f32.mrb[0].mxu0
        %v2629 = vadd.f32 0.0, %v2628
        %v2630 = vpop.f32.mrb[0].mxu0
        %v2631 = vadd.f32 0.0, %v2630
        %2632 = vmatprep.mubr.bf16.mxu0 0
        %2633 = vmatmul.mubr.bf16.gmra.mrb[0].mxu0 %v2407
        %v2634 = vpop.f32.mrb[0].mxu0
        %v2635 = vadd.f32 0.0, %v2634
        %v2636 = vpop.f32.mrb[0].mxu0
        %v2637 = vadd.f32 0.0, %v2636
        %v2638 = vpop.f32.mrb[0].mxu0
        %v2639 = vadd.f32 0.0, %v2638
        %v2640 = vpop.f32.mrb[0].mxu0
        %v2641 = vadd.f32 0.0, %v2640
        %2642 = vmatprep.mubr.bf16.mxu0 0
        %2643 = vmatmul.mubr.bf16.gmra.mrb[0].mxu0 %v2408
        %v2644 = vpop.f32.mrb[0].mxu0
        %v2645 = vadd.f32 0.0, %v2644
        %v2646 = vpop.f32.mrb[0].mxu0
        %v2647 = vadd.f32 0.0, %v2646
        %v2648 = vpop.f32.mrb[0].mxu0
        %v2649 = vadd.f32 0.0, %v2648
        %v2650 = vpop.f32.mrb[0].mxu0
        %v2651 = vadd.f32 0.0, %v2650
        %2652 = vmatprep.mubr.bf16.mxu0 0
        %2653 = vmatmul.mubr.bf16.gmra.mrb[0].mxu0 %v2409
        %v2654 = vpop.f32.mrb[0].mxu0
        %v2655 = vadd.f32 0.0, %v2654
        %v2656 = vpop.f32.mrb[0].mxu0
        %v2657 = vadd.f32 0.0, %v2656
        %v2658 = vpop.f32.mrb[0].mxu0
        %v2659 = vadd.f32 0.0, %v2658
        %v2660 = vpop.f32.mrb[0].mxu0
        %v2661 = vadd.f32 0.0, %v2660
        %2662 = vdwg.mxu0
        %2663 = vmatprep.subr.bf16.mxu0 %v2509
        %2664 = vmatpush1.bf16.msra.mxu0 %v2508
        %2665 = vmatprep.subr.bf16.mxu0 %v2513
        %2666 = vmatpush1.bf16.msra.mxu0 %v2512
        %2667 = vmatprep.subr.bf16.mxu0 %v2517
        %2668 = vmatpush1.bf16.msra.mxu0 %v2516
        %2669 = vmatprep.subr.bf16.mxu0 %v2521
        %2670 = vmatpush1.bf16.msra.mxu0 %v2520
        %2671 = vmatprep.subr.bf16.mxu0 %v2525
        %2672 = vmatpush1.bf16.msra.mxu0 %v2524
        %2673 = vmatprep.subr.bf16.mxu0 %v2529
        %2674 = vmatpush1.bf16.msra.mxu0 %v2528
        %2675 = vmatprep.subr.bf16.mxu0 %v2533
        %2676 = vmatpush1.bf16.msra.mxu0 %v2532
        %2677 = vmatprep.subr.bf16.mxu0 %v2537
        %2678 = vmatpush1.bf16.msra.mxu0 %v2536
        %2679 = vmatprep.subr.bf16.mxu0 0
        %2680 = vmatpush1.bf16.msra.mxu0 0
        %2681 = vmatprep.subr.bf16.mxu0 0
        %2682 = vmatpush1.bf16.msra.mxu0 0
        %2683 = vmatprep.subr.bf16.mxu0 0
        %2684 = vmatpush1.bf16.msra.mxu0 0
        %2685 = vmatprep.subr.bf16.mxu0 0
        %2686 = vmatpush1.bf16.msra.mxu0 0
        %2687 = vmatprep.subr.bf16.mxu0 0
        %2688 = vmatpush1.bf16.msra.mxu0 0
        %2689 = vmatprep.subr.bf16.mxu0 0
        %2690 = vmatpush1.bf16.msra.mxu0 0
        %2691 = vmatprep.subr.bf16.mxu0 0
        %2692 = vmatpush1.bf16.msra.mxu0 0
        %2693 = vmatprep.subr.bf16.mxu0 0
        %2694 = vmatpush1.bf16.msra.mxu0 0
        %2695 = vmatprep.mubr.bf16.mxu0 0
        %2696 = vmatmul.mubr.bf16.gmra.mrb[0].mxu0 %v2404
        %v2697 = vpop.f32.mrb[0].mxu0
        %v2698 = vadd.f32 0.0, %v2697
        %v2699 = vpop.f32.mrb[0].mxu0
        %v2700 = vadd.f32 0.0, %v2699
        %v2701 = vpop.f32.mrb[0].mxu0
        %v2702 = vadd.f32 0.0, %v2701
        %v2703 = vpop.f32.mrb[0].mxu0
        %v2704 = vadd.f32 0.0, %v2703
        %2705 = vmatprep.mubr.bf16.mxu0 0
        %2706 = vmatmul.mubr.bf16.gmra.mrb[0].mxu0 %v2405
        %v2707 = vpop.f32.mrb[0].mxu0
        %v2708 = vadd.f32 0.0, %v2707
        %v2709 = vpop.f32.mrb[0].mxu0
        %v2710 = vadd.f32 0.0, %v2709
        %v2711 = vpop.f32.mrb[0].mxu0
        %v2712 = vadd.f32 0.0, %v2711
        %v2713 = vpop.f32.mrb[0].mxu0
        %v2714 = vadd.f32 0.0, %v2713
        %2715 = vmatprep.mubr.bf16.mxu0 0
        %2716 = vmatmul.mubr.bf16.gmra.mrb[0].mxu0 %v2406
        %v2717 = vpop.f32.mrb[0].mxu0
        %v2718 = vadd.f32 0.0, %v2717
        %v2719 = vpop.f32.mrb[0].mxu0
        %v2720 = vadd.f32 0.0, %v2719
        %v2721 = vpop.f32.mrb[0].mxu0
        %v2722 = vadd.f32 0.0, %v2721
        %v2723 = vpop.f32.mrb[0].mxu0
        %v2724 = vadd.f32 0.0, %v2723
        %2725 = vmatprep.mubr.bf16.mxu0 0
        %2726 = vmatmul.mubr.bf16.gmra.mrb[0].mxu0 %v2407
        %v2727 = vpop.f32.mrb[0].mxu0
        %v2728 = vadd.f32 0.0, %v2727
        %v2729 = vpop.f32.mrb[0].mxu0
        %v2730 = vadd.f32 0.0, %v2729
        %v2731 = vpop.f32.mrb[0].mxu0
        %v2732 = vadd.f32 0.0, %v2731
        %v2733 = vpop.f32.mrb[0].mxu0
        %v2734 = vadd.f32 0.0, %v2733
        %2735 = vmatprep.mubr.bf16.mxu0 0
        %2736 = vmatmul.mubr.bf16.gmra.mrb[0].mxu0 %v2408
        %v2737 = vpop.f32.mrb[0].mxu0
        %v2738 = vadd.f32 0.0, %v2737
        %v2739 = vpop.f32.mrb[0].mxu0
        %v2740 = vadd.f32 0.0, %v2739
        %v2741 = vpop.f32.mrb[0].mxu0
        %v2742 = vadd.f32 0.0, %v2741
        %v2743 = vpop.f32.mrb[0].mxu0
        %v2744 = vadd.f32 0.0, %v2743
        %2745 = vmatprep.mubr.bf16.mxu0 0
        %2746 = vmatmul.mubr.bf16.gmra.mrb[0].mxu0 %v2409
        %v2747 = vpop.f32.mrb[0].mxu0
        %v2748 = vadd.f32 0.0, %v2747
        %v2749 = vpop.f32.mrb[0].mxu0
        %v2750 = vadd.f32 0.0, %v2749
        %v2751 = vpop.f32.mrb[0].mxu0
        %v2752 = vadd.f32 0.0, %v2751
        %v2753 = vpop.f32.mrb[0].mxu0
        %v2754 = vadd.f32 0.0, %v2753
        %2755 = vdwg.mxu0
        %v2756 = vmax.f32 %v2605, 0.0
        %v2757 = vmax.f32 %v2607, 0.0
        %v2758 = vmax.f32 %v2698, 0.0
        %v2759 = vmax.f32 %v2700, 0.0
        %v2760 = vmax.f32 %v2609, 0.0
        %v2761 = vmax.f32 %v2611, 0.0
        %v2762 = vmax.f32 %v2702, 0.0
        %v2763 = vmax.f32 %v2704, 0.0
        %v2764 = vmax.f32 %v2615, 0.0
        %v2765 = vmax.f32 %v2617, 0.0
        %v2766 = vmax.f32 %v2708, 0.0
        %v2767 = vmax.f32 %v2710, 0.0
        %v2768 = vmax.f32 %v2619, 0.0
        %v2769 = vmax.f32 %v2621, 0.0
        %v2770 = vmax.f32 %v2712, 0.0
        %v2771 = vmax.f32 %v2714, 0.0
        %v2772 = vmax.f32 %v2625, 0.0
        %v2773 = vmax.f32 %v2627, 0.0
        %v2774 = vmax.f32 %v2718, 0.0
        %v2775 = vmax.f32 %v2720, 0.0
        %v2776 = vmax.f32 %v2629, 0.0
        %v2777 = vmax.f32 %v2631, 0.0
        %v2778 = vmax.f32 %v2722, 0.0
        %v2779 = vmax.f32 %v2724, 0.0
        %v2780 = vmax.f32 %v2635, 0.0
        %v2781 = vmax.f32 %v2637, 0.0
        %v2782 = vmax.f32 %v2728, 0.0
        %v2783 = vmax.f32 %v2730, 0.0
        %v2784 = vmax.f32 %v2639, 0.0
        %v2785 = vmax.f32 %v2641, 0.0
        %v2786 = vmax.f32 %v2732, 0.0
        %v2787 = vmax.f32 %v2734, 0.0
        %v2788 = vmax.f32 %v2645, 0.0
        %v2789 = vmax.f32 %v2647, 0.0
        %v2790 = vmax.f32 %v2738, 0.0
        %v2791 = vmax.f32 %v2740, 0.0
        %v2792 = vmax.f32 %v2649, 0.0
        %v2793 = vmax.f32 %v2651, 0.0
        %v2794 = vmax.f32 %v2742, 0.0
        %v2795 = vmax.f32 %v2744, 0.0
        %v2796 = vmax.f32 %v2655, 0.0
        %v2797 = vmax.f32 %v2657, 0.0
        %v2798 = vmax.f32 %v2748, 0.0
        %v2799 = vmax.f32 %v2750, 0.0
        %v2800 = vmax.f32 %v2659, 0.0
        %v2801 = vmax.f32 %v2661, 0.0
        %v2802 = vmax.f32 %v2752, 0.0
        %v2803 = vmax.f32 %v2754, 0.0
        %v2804 = vmul.f32 %v2756, %v2756
        %v2805 = vmul.f32 %v2757, %v2757
        %v2806 = vmul.f32 %v2758, %v2758
        %v2807 = vmul.f32 %v2759, %v2759
        %v2808 = vmul.f32 %v2760, %v2760
        %v2809 = vmul.f32 %v2761, %v2761
        %v2810 = vmul.f32 %v2762, %v2762
        %v2811 = vmul.f32 %v2763, %v2763
        %v2812 = vmul.f32 %v2764, %v2764
        %v2813 = vmul.f32 %v2765, %v2765
        %v2814 = vmul.f32 %v2766, %v2766
        %v2815 = vmul.f32 %v2767, %v2767
        %v2816 = vmul.f32 %v2768, %v2768
        %v2817 = vmul.f32 %v2769, %v2769
        %v2818 = vmul.f32 %v2770, %v2770
        %v2819 = vmul.f32 %v2771, %v2771
        %v2820 = vmul.f32 %v2772, %v2772
        %v2821 = vmul.f32 %v2773, %v2773
        %v2822 = vmul.f32 %v2774, %v2774
        %v2823 = vmul.f32 %v2775, %v2775
        %v2824 = vmul.f32 %v2776, %v2776
        %v2825 = vmul.f32 %v2777, %v2777
        %v2826 = vmul.f32 %v2778, %v2778
        %v2827 = vmul.f32 %v2779, %v2779
        %v2828 = vmul.f32 %v2780, %v2780
        %v2829 = vmul.f32 %v2781, %v2781
        %v2830 = vmul.f32 %v2782, %v2782
        %v2831 = vmul.f32 %v2783, %v2783
        %v2832 = vmul.f32 %v2784, %v2784
        %v2833 = vmul.f32 %v2785, %v2785
        %v2834 = vmul.f32 %v2786, %v2786
        %v2835 = vmul.f32 %v2787, %v2787
        %v2836 = vmul.f32 %v2788, %v2788
        %v2837 = vmul.f32 %v2789, %v2789
        %v2838 = vmul.f32 %v2790, %v2790
        %v2839 = vmul.f32 %v2791, %v2791
        %v2840 = vmul.f32 %v2792, %v2792
        %v2841 = vmul.f32 %v2793, %v2793
        %v2842 = vmul.f32 %v2794, %v2794
        %v2843 = vmul.f32 %v2795, %v2795
        %v2844 = vmul.f32 %v2796, %v2796
        %v2845 = vmul.f32 %v2797, %v2797
        %v2846 = vmul.f32 %v2798, %v2798
        %v2847 = vmul.f32 %v2799, %v2799
        %v2848 = vmul.f32 %v2800, %v2800
        %v2849 = vmul.f32 %v2801, %v2801
        %v2850 = vmul.f32 %v2802, %v2802
        %v2851 = vmul.f32 %v2803, %v2803
        %v2852 = vld [vmem:[%s532] sm:$0xf]
        %v2853 = vld [vmem:[%s532 + $0x4] sm:$0xf]
        %v2854 = vld [vmem:[%s532 + $0x8] sm:$0xf]
        %v2855 = vld [vmem:[%s532 + $0xc] sm:$0xf]
        %v2856 = vld [vmem:[%s532 + $0x10] sm:$0xf]
        %v2857 = vld [vmem:[%s532 + $0x14] sm:$0xf]
        %v2858 = vld [vmem:[%s532 + $0x18] sm:$0xf]
        %v2859 = vld [vmem:[%s532 + $0x1c] sm:$0xf]
        %v2860 = vld [vmem:[%s532 + $0x20] sm:$0xf]
        %v2861 = vld [vmem:[%s532 + $0x24] sm:$0xf]
        %v2862 = vld [vmem:[%s532 + $0x28] sm:$0xf]
        %v2863 = vld [vmem:[%s532 + $0x2c] sm:$0xf]
        %v2864 = vld [vmem:[%s532 + $0x30] sm:$0xf]
        %v2865 = vld [vmem:[%s532 + $0x34] sm:$0xf]
        %v2866 = vld [vmem:[%s532 + $0x38] sm:$0xf]
        %v2867 = vld [vmem:[%s532 + $0x3c] sm:$0xf]
        %v2868 = vld [vmem:[%s532 + $0x40] sm:$0xf]
        %v2869 = vld [vmem:[%s532 + $0x44] sm:$0xf]
        %v2870 = vld [vmem:[%s532 + $0x48] sm:$0xf]
        %v2871 = vld [vmem:[%s532 + $0x4c] sm:$0xf]
        %v2872 = vld [vmem:[%s532 + $0x50] sm:$0xf]
        %v2873 = vld [vmem:[%s532 + $0x54] sm:$0xf]
        %v2874 = vld [vmem:[%s532 + $0x58] sm:$0xf]
        %v2875 = vld [vmem:[%s532 + $0x5c] sm:$0xf]
        %v2876 = vld [vmem:[%s532 + $0x60] sm:$0xf]
        %v2877 = vld [vmem:[%s532 + $0x64] sm:$0xf]
        %v2878 = vld [vmem:[%s532 + $0x68] sm:$0xf]
        %v2879 = vld [vmem:[%s532 + $0x6c] sm:$0xf]
        %v2880 = vld [vmem:[%s532 + $0x70] sm:$0xf]
        %v2881 = vld [vmem:[%s532 + $0x74] sm:$0xf]
        %v2882 = vld [vmem:[%s532 + $0x78] sm:$0xf]
        %v2883 = vld [vmem:[%s532 + $0x7c] sm:$0xf]
        %v2884 = vld [vmem:[%s532 + $0x80] sm:$0xf]
        %v2885 = vld [vmem:[%s532 + $0x84] sm:$0xf]
        %v2886 = vld [vmem:[%s532 + $0x88] sm:$0xf]
        %v2887 = vld [vmem:[%s532 + $0x8c] sm:$0xf]
        %v2888 = vld [vmem:[%s532 + $0x90] sm:$0xf]
        %v2889 = vld [vmem:[%s532 + $0x94] sm:$0xf]
        %v2890 = vld [vmem:[%s532 + $0x98] sm:$0xf]
        %v2891 = vld [vmem:[%s532 + $0x9c] sm:$0xf]
        %v2892 = vld [vmem:[%s532 + $0xa0] sm:$0xf]
        %v2893 = vld [vmem:[%s532 + $0xa4] sm:$0xf]
        %v2894 = vld [vmem:[%s532 + $0xa8] sm:$0xf]
        %v2895 = vld [vmem:[%s532 + $0xac] sm:$0xf]
        %v2896 = vld [vmem:[%s532 + $0xb0] sm:$0xf]
        %v2897 = vld [vmem:[%s532 + $0xb4] sm:$0xf]
        %v2898 = vld [vmem:[%s532 + $0xb8] sm:$0xf]
        %v2899 = vld [vmem:[%s532 + $0xbc] sm:$0xf]
        %v2900 = vld [vmem:[%s532 + $0xc0] sm:$0xf]
        %v2901 = vld [vmem:[%s532 + $0xc4] sm:$0xf]
        %v2902 = vld [vmem:[%s532 + $0xc8] sm:$0xf]
        %v2903 = vld [vmem:[%s532 + $0xcc] sm:$0xf]
        %v2904 = vld [vmem:[%s532 + $0xd0] sm:$0xf]
        %v2905 = vld [vmem:[%s532 + $0xd4] sm:$0xf]
        %v2906 = vld [vmem:[%s532 + $0xd8] sm:$0xf]
        %v2907 = vld [vmem:[%s532 + $0xdc] sm:$0xf]
        %v2908 = vld [vmem:[%s532 + $0xe0] sm:$0xf]
        %v2909 = vld [vmem:[%s532 + $0xe4] sm:$0xf]
        %v2910 = vld [vmem:[%s532 + $0xe8] sm:$0xf]
        %v2911 = vld [vmem:[%s532 + $0xec] sm:$0xf]
        %v2912 = vld [vmem:[%s532 + $0xf0] sm:$0xf]
        %v2913 = vld [vmem:[%s532 + $0xf4] sm:$0xf]
        %v2914 = vld [vmem:[%s532 + $0xf8] sm:$0xf]
        %v2915 = vld [vmem:[%s532 + $0xfc] sm:$0xf]
        %v2916 = vpack.c.bf16 %v2808, %v2804
        %v2917 = vpack.c.bf16 %v2809, %v2805
        %v2918 = vpack.c.bf16 %v2810, %v2806
        %v2919 = vpack.c.bf16 %v2811, %v2807
        %v2920 = vpack.c.bf16 %v2816, %v2812
        %v2921 = vpack.c.bf16 %v2817, %v2813
        %v2922 = vpack.c.bf16 %v2818, %v2814
        %v2923 = vpack.c.bf16 %v2819, %v2815
        %v2924 = vpack.c.bf16 %v2824, %v2820
        %v2925 = vpack.c.bf16 %v2825, %v2821
        %v2926 = vpack.c.bf16 %v2826, %v2822
        %v2927 = vpack.c.bf16 %v2827, %v2823
        %v2928 = vpack.c.bf16 %v2832, %v2828
        %v2929 = vpack.c.bf16 %v2833, %v2829
        %v2930 = vpack.c.bf16 %v2834, %v2830
        %v2931 = vpack.c.bf16 %v2835, %v2831
        %v2932 = vpack.c.bf16 %v2840, %v2836
        %v2933 = vpack.c.bf16 %v2841, %v2837
        %v2934 = vpack.c.bf16 %v2842, %v2838
        %v2935 = vpack.c.bf16 %v2843, %v2839
        %v2936 = vpack.c.bf16 %v2848, %v2844
        %v2937 = vpack.c.bf16 %v2849, %v2845
        %v2938 = vpack.c.bf16 %v2850, %v2846
        %v2939 = vpack.c.bf16 %v2851, %v2847
        %v3004 = vunpack.c.l.b16 %v2852
        %v3005 = vunpack.c.l.b16 %v2853
        %v3006 = vunpack.c.l.b16 %v2854
        %v3007 = vunpack.c.l.b16 %v2855
        %v3008 = vunpack.c.l.b16 %v2856
        %v3009 = vunpack.c.l.b16 %v2857
        %v3010 = vunpack.c.l.b16 %v2858
        %v3011 = vunpack.c.l.b16 %v2859
        %v3012 = vunpack.c.l.b16 %v2860
        %v3013 = vunpack.c.l.b16 %v2861
        %v3014 = vunpack.c.l.b16 %v2862
        %v3015 = vunpack.c.l.b16 %v2863
        %v3016 = vunpack.c.l.b16 %v2864
        %v3017 = vunpack.c.l.b16 %v2865
        %v3018 = vunpack.c.l.b16 %v2866
        %v3019 = vunpack.c.l.b16 %v2867
        %v3020 = vunpack.c.l.b16 %v2868
        %v3021 = vunpack.c.l.b16 %v2869
        %v3022 = vunpack.c.l.b16 %v2870
        %v3023 = vunpack.c.l.b16 %v2871
        %v3024 = vunpack.c.l.b16 %v2872
        %v3025 = vunpack.c.l.b16 %v2873
        %v3026 = vunpack.c.l.b16 %v2874
        %v3027 = vunpack.c.l.b16 %v2875
        %v3028 = vunpack.c.l.b16 %v2876
        %v3029 = vunpack.c.l.b16 %v2877
        %v3030 = vunpack.c.l.b16 %v2878
        %v3031 = vunpack.c.l.b16 %v2879
        %v3032 = vunpack.c.l.b16 %v2880
        %v3033 = vunpack.c.l.b16 %v2881
        %v3034 = vunpack.c.l.b16 %v2882
        %v3035 = vunpack.c.l.b16 %v2883
        %v3036 = vunpack.c.l.b16 %v2884
        %v3037 = vunpack.c.l.b16 %v2885
        %v3038 = vunpack.c.l.b16 %v2886
        %v3039 = vunpack.c.l.b16 %v2887
        %v3040 = vunpack.c.l.b16 %v2888
        %v3041 = vunpack.c.l.b16 %v2889
        %v3042 = vunpack.c.l.b16 %v2890
        %v3043 = vunpack.c.l.b16 %v2891
        %v3044 = vunpack.c.l.b16 %v2892
        %v3045 = vunpack.c.l.b16 %v2893
        %v3046 = vunpack.c.l.b16 %v2894
        %v3047 = vunpack.c.l.b16 %v2895
        %v3048 = vunpack.c.l.b16 %v2896
        %v3049 = vunpack.c.l.b16 %v2897
        %v3050 = vunpack.c.l.b16 %v2898
        %v3051 = vunpack.c.l.b16 %v2899
        %v3052 = vunpack.c.l.b16 %v2900
        %v3053 = vunpack.c.l.b16 %v2901
        %v3054 = vunpack.c.l.b16 %v2902
        %v3055 = vunpack.c.l.b16 %v2903
        %v3056 = vunpack.c.l.b16 %v2904
        %v3057 = vunpack.c.l.b16 %v2905
        %v3058 = vunpack.c.l.b16 %v2906
        %v3059 = vunpack.c.l.b16 %v2907
        %v3060 = vunpack.c.l.b16 %v2908
        %v3061 = vunpack.c.l.b16 %v2909
        %v3062 = vunpack.c.l.b16 %v2910
        %v3063 = vunpack.c.l.b16 %v2911
        %v3064 = vunpack.c.l.b16 %v2912
        %v3065 = vunpack.c.l.b16 %v2913
        %v3066 = vunpack.c.l.b16 %v2914
        %v3067 = vunpack.c.l.b16 %v2915
        %v3068 = vpack.c.b16 %v3005, %v3004
        %v3069 = vpack.c.b16 %v3007, %v3006
        %v3070 = vpack.c.b16 %v3009, %v3008
        %v3071 = vpack.c.b16 %v3011, %v3010
        %v3072 = vpack.c.b16 %v3013, %v3012
        %v3073 = vpack.c.b16 %v3015, %v3014
        %v3074 = vpack.c.b16 %v3017, %v3016
        %v3075 = vpack.c.b16 %v3019, %v3018
        %v3076 = vpack.c.b16 %v3021, %v3020
        %v3077 = vpack.c.b16 %v3023, %v3022
        %v3078 = vpack.c.b16 %v3025, %v3024
        %v3079 = vpack.c.b16 %v3027, %v3026
        %v3080 = vpack.c.b16 %v3029, %v3028
        %v3081 = vpack.c.b16 %v3031, %v3030
        %v3082 = vpack.c.b16 %v3033, %v3032
        %v3083 = vpack.c.b16 %v3035, %v3034
        %v3084 = vpack.c.b16 %v3037, %v3036
        %v3085 = vpack.c.b16 %v3039, %v3038
        %v3086 = vpack.c.b16 %v3041, %v3040
        %v3087 = vpack.c.b16 %v3043, %v3042
        %v3088 = vpack.c.b16 %v3045, %v3044
        %v3089 = vpack.c.b16 %v3047, %v3046
        %v3090 = vpack.c.b16 %v3049, %v3048
        %v3091 = vpack.c.b16 %v3051, %v3050
        %v3092 = vpack.c.b16 %v3053, %v3052
        %v3093 = vpack.c.b16 %v3055, %v3054
        %v3094 = vpack.c.b16 %v3057, %v3056
        %v3095 = vpack.c.b16 %v3059, %v3058
        %v3096 = vpack.c.b16 %v3061, %v3060
        %v3097 = vpack.c.b16 %v3063, %v3062
        %v3098 = vpack.c.b16 %v3065, %v3064
        %v3099 = vpack.c.b16 %v3067, %v3066
        %3132 = vmatprep.subr.bf16.mxu0 0
        %3133 = vmatpush1.bf16.msra.mxu0 %v3068
        %3134 = vmatprep.subr.bf16.mxu0 0
        %3135 = vmatpush1.bf16.msra.mxu0 %v3069
        %3136 = vmatprep.subr.bf16.mxu0 0
        %3137 = vmatpush1.bf16.msra.mxu0 %v3070
        %3138 = vmatprep.subr.bf16.mxu0 0
        %3139 = vmatpush1.bf16.msra.mxu0 %v3071
        %3140 = vmatprep.subr.bf16.mxu0 0
        %3141 = vmatpush1.bf16.msra.mxu0 %v3072
        %3142 = vmatprep.subr.bf16.mxu0 0
        %3143 = vmatpush1.bf16.msra.mxu0 %v3073
        %3144 = vmatprep.subr.bf16.mxu0 0
        %3145 = vmatpush1.bf16.msra.mxu0 %v3074
        %3146 = vmatprep.subr.bf16.mxu0 0
        %3147 = vmatpush1.bf16.msra.mxu0 %v3075
        %3148 = vmatprep.subr.bf16.mxu0 0
        %3149 = vmatpush1.bf16.msra.mxu0 %v3076
        %3150 = vmatprep.subr.bf16.mxu0 0
        %3151 = vmatpush1.bf16.msra.mxu0 %v3077
        %3152 = vmatprep.subr.bf16.mxu0 0
        %3153 = vmatpush1.bf16.msra.mxu0 %v3078
        %3154 = vmatprep.subr.bf16.mxu0 0
        %3155 = vmatpush1.bf16.msra.mxu0 %v3079
        %3156 = vmatprep.subr.bf16.mxu0 0
        %3157 = vmatpush1.bf16.msra.mxu0 %v3080
        %3158 = vmatprep.subr.bf16.mxu0 0
        %3159 = vmatpush1.bf16.msra.mxu0 %v3081
        %3160 = vmatprep.subr.bf16.mxu0 0
        %3161 = vmatpush1.bf16.msra.mxu0 %v3082
        %3162 = vmatprep.subr.bf16.mxu0 0
        %3163 = vmatpush1.bf16.msra.mxu0 %v3083
        %3164 = vmatprep.mubr.bf16.mxu0 %v2917
        %3165 = vmatmul.mubr.bf16.gmra.mrb[0].mxu0 %v2916
        %v3166 = vpop.f32.mrb[0].mxu0
        %v3167 = vadd.f32 0.0, %v3166
        %v3168 = vpop.f32.mrb[0].mxu0
        %v3169 = vpop.f32.mrb[0].mxu0
        %v3170 = vadd.f32 0.0, %v3169
        %v3171 = vpop.f32.mrb[0].mxu0
        %3172 = vmatprep.mubr.bf16.mxu0 %v2921
        %3173 = vmatmul.mubr.bf16.gmra.mrb[0].mxu0 %v2920
        %v3174 = vpop.f32.mrb[0].mxu0
        %v3175 = vadd.f32 0.0, %v3174
        %v3176 = vpop.f32.mrb[0].mxu0
        %v3177 = vpop.f32.mrb[0].mxu0
        %v3178 = vadd.f32 0.0, %v3177
        %v3179 = vpop.f32.mrb[0].mxu0
        %3180 = vmatprep.mubr.bf16.mxu0 %v2925
        %3181 = vmatmul.mubr.bf16.gmra.mrb[0].mxu0 %v2924
        %v3182 = vpop.f32.mrb[0].mxu0
        %v3183 = vadd.f32 0.0, %v3182
        %v3184 = vpop.f32.mrb[0].mxu0
        %v3185 = vpop.f32.mrb[0].mxu0
        %v3186 = vadd.f32 0.0, %v3185
        %v3187 = vpop.f32.mrb[0].mxu0
        %3188 = vmatprep.mubr.bf16.mxu0 %v2929
        %3189 = vmatmul.mubr.bf16.gmra.mrb[0].mxu0 %v2928
        %v3190 = vpop.f32.mrb[0].mxu0
        %v3191 = vadd.f32 0.0, %v3190
        %v3192 = vpop.f32.mrb[0].mxu0
        %v3193 = vpop.f32.mrb[0].mxu0
        %v3194 = vadd.f32 0.0, %v3193
        %v3195 = vpop.f32.mrb[0].mxu0
        %3196 = vmatprep.mubr.bf16.mxu0 %v2933
        %3197 = vmatmul.mubr.bf16.gmra.mrb[0].mxu0 %v2932
        %v3198 = vpop.f32.mrb[0].mxu0
        %v3199 = vadd.f32 0.0, %v3198
        %v3200 = vpop.f32.mrb[0].mxu0
        %v3201 = vpop.f32.mrb[0].mxu0
        %v3202 = vadd.f32 0.0, %v3201
        %v3203 = vpop.f32.mrb[0].mxu0
        %3204 = vmatprep.mubr.bf16.mxu0 %v2937
        %3205 = vmatmul.mubr.bf16.gmra.mrb[0].mxu0 %v2936
        %v3206 = vpop.f32.mrb[0].mxu0
        %v3207 = vadd.f32 0.0, %v3206
        %v3208 = vpop.f32.mrb[0].mxu0
        %v3209 = vpop.f32.mrb[0].mxu0
        %v3210 = vadd.f32 0.0, %v3209
        %v3211 = vpop.f32.mrb[0].mxu0
        %3212 = vdwg.mxu0
        %3213 = vmatprep.subr.bf16.mxu0 0
        %3214 = vmatpush1.bf16.msra.mxu0 %v3084
        %3215 = vmatprep.subr.bf16.mxu0 0
        %3216 = vmatpush1.bf16.msra.mxu0 %v3085
        %3217 = vmatprep.subr.bf16.mxu0 0
        %3218 = vmatpush1.bf16.msra.mxu0 %v3086
        %3219 = vmatprep.subr.bf16.mxu0 0
        %3220 = vmatpush1.bf16.msra.mxu0 %v3087
        %3221 = vmatprep.subr.bf16.mxu0 0
        %3222 = vmatpush1.bf16.msra.mxu0 %v3088
        %3223 = vmatprep.subr.bf16.mxu0 0
        %3224 = vmatpush1.bf16.msra.mxu0 %v3089
        %3225 = vmatprep.subr.bf16.mxu0 0
        %3226 = vmatpush1.bf16.msra.mxu0 %v3090
        %3227 = vmatprep.subr.bf16.mxu0 0
        %3228 = vmatpush1.bf16.msra.mxu0 %v3091
        %3229 = vmatprep.subr.bf16.mxu0 0
        %3230 = vmatpush1.bf16.msra.mxu0 %v3092
        %3231 = vmatprep.subr.bf16.mxu0 0
        %3232 = vmatpush1.bf16.msra.mxu0 %v3093
        %3233 = vmatprep.subr.bf16.mxu0 0
        %3234 = vmatpush1.bf16.msra.mxu0 %v3094
        %3235 = vmatprep.subr.bf16.mxu0 0
        %3236 = vmatpush1.bf16.msra.mxu0 %v3095
        %3237 = vmatprep.subr.bf16.mxu0 0
        %3238 = vmatpush1.bf16.msra.mxu0 %v3096
        %3239 = vmatprep.subr.bf16.mxu0 0
        %3240 = vmatpush1.bf16.msra.mxu0 %v3097
        %3241 = vmatprep.subr.bf16.mxu0 0
        %3242 = vmatpush1.bf16.msra.mxu0 %v3098
        %3243 = vmatprep.subr.bf16.mxu0 0
        %3244 = vmatpush1.bf16.msra.mxu0 %v3099
        %3245 = vmatprep.mubr.bf16.mxu0 %v2919
        %3246 = vmatmul.mubr.bf16.gmra.mrb[0].mxu0 %v2918
        %v3247 = vpop.f32.mrb[0].mxu0
        %v3248 = vadd.f32 %v3167, %v3247
        %v3249 = vpop.f32.mrb[0].mxu0
        %v3250 = vpop.f32.mrb[0].mxu0
        %v3251 = vadd.f32 %v3170, %v3250
        %v3252 = vpop.f32.mrb[0].mxu0
        %3253 = vmatprep.mubr.bf16.mxu0 %v2923
        %3254 = vmatmul.mubr.bf16.gmra.mrb[0].mxu0 %v2922
        %v3255 = vpop.f32.mrb[0].mxu0
        %v3256 = vadd.f32 %v3175, %v3255
        %v3257 = vpop.f32.mrb[0].mxu0
        %v3258 = vpop.f32.mrb[0].mxu0
        %v3259 = vadd.f32 %v3178, %v3258
        %v3260 = vpop.f32.mrb[0].mxu0
        %3261 = vmatprep.mubr.bf16.mxu0 %v2927
        %3262 = vmatmul.mubr.bf16.gmra.mrb[0].mxu0 %v2926
        %v3263 = vpop.f32.mrb[0].mxu0
        %v3264 = vadd.f32 %v3183, %v3263
        %v3265 = vpop.f32.mrb[0].mxu0
        %v3266 = vpop.f32.mrb[0].mxu0
        %v3267 = vadd.f32 %v3186, %v3266
        %v3268 = vpop.f32.mrb[0].mxu0
        %3269 = vmatprep.mubr.bf16.mxu0 %v2931
        %3270 = vmatmul.mubr.bf16.gmra.mrb[0].mxu0 %v2930
        %v3271 = vpop.f32.mrb[0].mxu0
        %v3272 = vadd.f32 %v3191, %v3271
        %v3273 = vpop.f32.mrb[0].mxu0
        %v3274 = vpop.f32.mrb[0].mxu0
        %v3275 = vadd.f32 %v3194, %v3274
        %v3276 = vpop.f32.mrb[0].mxu0
        %3277 = vmatprep.mubr.bf16.mxu0 %v2935
        %3278 = vmatmul.mubr.bf16.gmra.mrb[0].mxu0 %v2934
        %v3279 = vpop.f32.mrb[0].mxu0
        %v3280 = vadd.f32 %v3199, %v3279
        %v3281 = vpop.f32.mrb[0].mxu0
        %v3282 = vpop.f32.mrb[0].mxu0
        %v3283 = vadd.f32 %v3202, %v3282
        %v3284 = vpop.f32.mrb[0].mxu0
        %3285 = vmatprep.mubr.bf16.mxu0 %v2939
        %3286 = vmatmul.mubr.bf16.gmra.mrb[0].mxu0 %v2938
        %v3287 = vpop.f32.mrb[0].mxu0
        %v3288 = vadd.f32 %v3207, %v3287
        %v3289 = vpop.f32.mrb[0].mxu0
        %v3290 = vpop.f32.mrb[0].mxu0
        %v3291 = vadd.f32 %v3210, %v3290
        %v3292 = vpop.f32.mrb[0].mxu0
        %3293 = vdwg.mxu0
        %v3294 = vlaneseq
        %v3295 = vshrl.u32 %v3294, 7
        %v3296 = vsub.s32 2, %v3295
        %v3297 = vrot.slane %v686, %v3296
        %v3298 = vmul.f32 %v3297, %v2332
        %v3299 = vmul.f32 %v3297, %v2333
        %v3300 = vmul.f32 %v3297, %v2334
        %v3301 = vmul.f32 %v3297, %v2335
        %v3302 = vmul.f32 %v3297, %v2336
        %v3303 = vmul.f32 %v3297, %v2337
        %v3304 = vmul.f32 %v3297, %v2338
        %v3305 = vmul.f32 %v3297, %v2339
        %v3306 = vmul.f32 %v3297, %v2340
        %v3307 = vmul.f32 %v3297, %v2341
        %v3308 = vmul.f32 %v3297, %v2342
        %v3309 = vmul.f32 %v3297, %v2343
        %v3310 = vadd.f32 %v2320, %v3298
        %v3311 = vadd.f32 %v2321, %v3299
        %v3312 = vadd.f32 %v2322, %v3300
        %v3313 = vadd.f32 %v2323, %v3301
        %v3314 = vadd.f32 %v2324, %v3302
        %v3315 = vadd.f32 %v2325, %v3303
        %v3316 = vadd.f32 %v2326, %v3304
        %v3317 = vadd.f32 %v2327, %v3305
        %v3318 = vadd.f32 %v2328, %v3306
        %v3319 = vadd.f32 %v2329, %v3307
        %v3320 = vadd.f32 %v2330, %v3308
        %v3321 = vadd.f32 %v2331, %v3309
        %v3322 = vld [vmem:[%s523] sm:$0xf]
        %v3323 = vld [vmem:[%s523 + $0x4] sm:$0xf]
        %v3324 = vld [vmem:[%s523 + $0x8] sm:$0xf]
        %v3325 = vld [vmem:[%s523 + $0xc] sm:$0xf]
        %v3326 = vld [vmem:[%s523 + $0x10] sm:$0xf]
        %v3327 = vld [vmem:[%s523 + $0x14] sm:$0xf]
        %v3328 = vld [vmem:[%s523 + $0x18] sm:$0xf]
        %v3329 = vld [vmem:[%s523 + $0x1c] sm:$0xf]
        %v3330 = vld [vmem:[%s523 + $0x20] sm:$0xf]
        %v3331 = vld [vmem:[%s523 + $0x24] sm:$0xf]
        %v3332 = vld [vmem:[%s523 + $0x28] sm:$0xf]
        %v3333 = vld [vmem:[%s523 + $0x2c] sm:$0xf]
        %v3334 = vld [vmem:[%s523 + $0x30] sm:$0xf]
        %v3335 = vld [vmem:[%s523 + $0x34] sm:$0xf]
        %v3336 = vld [vmem:[%s523 + $0x38] sm:$0xf]
        %v3337 = vld [vmem:[%s523 + $0x3c] sm:$0xf]
        %v3338 = vpack.c.bf16 %v3311, %v3310
        %v3339 = vpack.c.bf16 %v3313, %v3312
        %v3340 = vpack.c.bf16 %v3315, %v3314
        %v3341 = vpack.c.bf16 %v3317, %v3316
        %v3342 = vpack.c.bf16 %v3319, %v3318
        %v3343 = vpack.c.bf16 %v3321, %v3320
        %v3360 = vunpack.c.l.b16 %v3322
        %v3361 = vunpack.c.l.b16 %v3323
        %v3362 = vunpack.c.l.b16 %v3324
        %v3363 = vunpack.c.l.b16 %v3325
        %v3364 = vunpack.c.l.b16 %v3326
        %v3365 = vunpack.c.l.b16 %v3327
        %v3366 = vunpack.c.l.b16 %v3328
        %v3367 = vunpack.c.l.b16 %v3329
        %v3368 = vunpack.c.l.b16 %v3330
        %v3369 = vunpack.c.l.b16 %v3331
        %v3370 = vunpack.c.l.b16 %v3332
        %v3371 = vunpack.c.l.b16 %v3333
        %v3372 = vunpack.c.l.b16 %v3334
        %v3373 = vunpack.c.l.b16 %v3335
        %v3374 = vunpack.c.l.b16 %v3336
        %v3375 = vunpack.c.l.b16 %v3337
        %v3376 = vpack.c.b16 %v3361, %v3360
        %v3377 = vpack.c.b16 %v3363, %v3362
        %v3378 = vpack.c.b16 %v3365, %v3364
        %v3379 = vpack.c.b16 %v3367, %v3366
        %v3380 = vpack.c.b16 %v3369, %v3368
        %v3381 = vpack.c.b16 %v3371, %v3370
        %v3382 = vpack.c.b16 %v3373, %v3372
        %v3383 = vpack.c.b16 %v3375, %v3374
        %3392 = vmatprep.subr.bf16.mxu0 0
        %3393 = vmatpush1.bf16.msra.mxu0 %v3376
        %3394 = vmatprep.subr.bf16.mxu0 0
        %3395 = vmatpush1.bf16.msra.mxu0 %v3377
        %3396 = vmatprep.subr.bf16.mxu0 0
        %3397 = vmatpush1.bf16.msra.mxu0 %v3378
        %3398 = vmatprep.subr.bf16.mxu0 0
        %3399 = vmatpush1.bf16.msra.mxu0 %v3379
        %3400 = vmatprep.subr.bf16.mxu0 0
        %3401 = vmatpush1.bf16.msra.mxu0 %v3380
        %3402 = vmatprep.subr.bf16.mxu0 0
        %3403 = vmatpush1.bf16.msra.mxu0 %v3381
        %3404 = vmatprep.subr.bf16.mxu0 0
        %3405 = vmatpush1.bf16.msra.mxu0 %v3382
        %3406 = vmatprep.subr.bf16.mxu0 0
        %3407 = vmatpush1.bf16.msra.mxu0 %v3383
        %3408 = vmatprep.subr.bf16.mxu0 0
        %3409 = vmatpush1.bf16.msra.mxu0 0
        %3410 = vmatprep.subr.bf16.mxu0 0
        %3411 = vmatpush1.bf16.msra.mxu0 0
        %3412 = vmatprep.subr.bf16.mxu0 0
        %3413 = vmatpush1.bf16.msra.mxu0 0
        %3414 = vmatprep.subr.bf16.mxu0 0
        %3415 = vmatpush1.bf16.msra.mxu0 0
        %3416 = vmatprep.subr.bf16.mxu0 0
        %3417 = vmatpush1.bf16.msra.mxu0 0
        %3418 = vmatprep.subr.bf16.mxu0 0
        %3419 = vmatpush1.bf16.msra.mxu0 0
        %3420 = vmatprep.subr.bf16.mxu0 0
        %3421 = vmatpush1.bf16.msra.mxu0 0
        %3422 = vmatprep.subr.bf16.mxu0 0
        %3423 = vmatpush1.bf16.msra.mxu0 0
        %3424 = vmatprep.mubr.bf16.mxu0 0
        %3425 = vmatmul.mubr.bf16.gmra.mrb[0].mxu0 %v3338
        %v3426 = vpop.f32.mrb[0].mxu0
        %v3427 = vadd.f32 0.0, %v3426
        %v3428 = vpop.f32.mrb[0].mxu0
        %v3429 = vpop.f32.mrb[0].mxu0
        %v3430 = vadd.f32 0.0, %v3429
        %v3431 = vpop.f32.mrb[0].mxu0
        %3432 = vmatprep.mubr.bf16.mxu0 0
        %3433 = vmatmul.mubr.bf16.gmra.mrb[0].mxu0 %v3339
        %v3434 = vpop.f32.mrb[0].mxu0
        %v3435 = vadd.f32 0.0, %v3434
        %v3436 = vpop.f32.mrb[0].mxu0
        %v3437 = vpop.f32.mrb[0].mxu0
        %v3438 = vadd.f32 0.0, %v3437
        %v3439 = vpop.f32.mrb[0].mxu0
        %3440 = vmatprep.mubr.bf16.mxu0 0
        %3441 = vmatmul.mubr.bf16.gmra.mrb[0].mxu0 %v3340
        %v3442 = vpop.f32.mrb[0].mxu0
        %v3443 = vadd.f32 0.0, %v3442
        %v3444 = vpop.f32.mrb[0].mxu0
        %v3445 = vpop.f32.mrb[0].mxu0
        %v3446 = vadd.f32 0.0, %v3445
        %v3447 = vpop.f32.mrb[0].mxu0
        %3448 = vmatprep.mubr.bf16.mxu0 0
        %3449 = vmatmul.mubr.bf16.gmra.mrb[0].mxu0 %v3341
        %v3450 = vpop.f32.mrb[0].mxu0
        %v3451 = vadd.f32 0.0, %v3450
        %v3452 = vpop.f32.mrb[0].mxu0
        %v3453 = vpop.f32.mrb[0].mxu0
        %v3454 = vadd.f32 0.0, %v3453
        %v3455 = vpop.f32.mrb[0].mxu0
        %3456 = vmatprep.mubr.bf16.mxu0 0
        %3457 = vmatmul.mubr.bf16.gmra.mrb[0].mxu0 %v3342
        %v3458 = vpop.f32.mrb[0].mxu0
        %v3459 = vadd.f32 0.0, %v3458
        %v3460 = vpop.f32.mrb[0].mxu0
        %v3461 = vpop.f32.mrb[0].mxu0
        %v3462 = vadd.f32 0.0, %v3461
        %v3463 = vpop.f32.mrb[0].mxu0
        %3464 = vmatprep.mubr.bf16.mxu0 0
        %3465 = vmatmul.mubr.bf16.gmra.mrb[0].mxu0 %v3343
        %v3466 = vpop.f32.mrb[0].mxu0
        %v3467 = vadd.f32 0.0, %v3466
        %v3468 = vpop.f32.mrb[0].mxu0
        %v3469 = vpop.f32.mrb[0].mxu0
        %v3470 = vadd.f32 0.0, %v3469
        %v3471 = vpop.f32.mrb[0].mxu0
        %3472 = vdwg.mxu0
        %v3473 = vxor.u32 %v3427, 2147483648
        %v3474 = vxor.u32 %v3430, 2147483648
        %v3475 = vxor.u32 %v3435, 2147483648
        %v3476 = vxor.u32 %v3438, 2147483648
        %v3477 = vxor.u32 %v3443, 2147483648
        %v3478 = vxor.u32 %v3446, 2147483648
        %v3479 = vxor.u32 %v3451, 2147483648
        %v3480 = vxor.u32 %v3454, 2147483648
        %v3481 = vxor.u32 %v3459, 2147483648
        %v3482 = vxor.u32 %v3462, 2147483648
        %v3483 = vxor.u32 %v3467, 2147483648
        %v3484 = vxor.u32 %v3470, 2147483648
        %v3485 = vmul.f32 %v3473, 1.442695
        %v3486 = vpow.pop %v3485
        %v3487 = vmul.f32 %v3474, 1.442695
        %v3488 = vpow.pop %v3487
        %v3489 = vmul.f32 %v3475, 1.442695
        %v3490 = vpow.pop %v3489
        %v3491 = vmul.f32 %v3476, 1.442695
        %v3492 = vpow.pop %v3491
        %v3493 = vmul.f32 %v3477, 1.442695
        %v3494 = vpow.pop %v3493
        %v3495 = vmul.f32 %v3478, 1.442695
        %v3496 = vpow.pop %v3495
        %v3497 = vmul.f32 %v3479, 1.442695
        %v3498 = vpow.pop %v3497
        %v3499 = vmul.f32 %v3480, 1.442695
        %v3500 = vpow.pop %v3499
        %v3501 = vmul.f32 %v3481, 1.442695
        %v3502 = vpow.pop %v3501
        %v3503 = vmul.f32 %v3482, 1.442695
        %v3504 = vpow.pop %v3503
        %v3505 = vmul.f32 %v3483, 1.442695
        %v3506 = vpow.pop %v3505
        %v3507 = vmul.f32 %v3484, 1.442695
        %v3508 = vpow.pop %v3507
        %v3509 = vadd.f32 %v3486, 1.0
        %v3510 = vadd.f32 %v3488, 1.0
        %v3511 = vadd.f32 %v3490, 1.0
        %v3512 = vadd.f32 %v3492, 1.0
        %v3513 = vadd.f32 %v3494, 1.0
        %v3514 = vadd.f32 %v3496, 1.0
        %v3515 = vadd.f32 %v3498, 1.0
        %v3516 = vadd.f32 %v3500, 1.0
        %v3517 = vadd.f32 %v3502, 1.0
        %v3518 = vadd.f32 %v3504, 1.0
        %v3519 = vadd.f32 %v3506, 1.0
        %v3520 = vadd.f32 %v3508, 1.0
        %v3521 = vrcp.pop %v3509
        %v3522 = vmul.f32 1.0, %v3521
        %v3523 = vrcp.pop %v3510
        %v3524 = vmul.f32 1.0, %v3523
        %v3525 = vrcp.pop %v3511
        %v3526 = vmul.f32 1.0, %v3525
        %v3527 = vrcp.pop %v3512
        %v3528 = vmul.f32 1.0, %v3527
        %v3529 = vrcp.pop %v3513
        %v3530 = vmul.f32 1.0, %v3529
        %v3531 = vrcp.pop %v3514
        %v3532 = vmul.f32 1.0, %v3531
        %v3533 = vrcp.pop %v3515
        %v3534 = vmul.f32 1.0, %v3533
        %v3535 = vrcp.pop %v3516
        %v3536 = vmul.f32 1.0, %v3535
        %v3537 = vrcp.pop %v3517
        %v3538 = vmul.f32 1.0, %v3537
        %v3539 = vrcp.pop %v3518
        %v3540 = vmul.f32 1.0, %v3539
        %v3541 = vrcp.pop %v3519
        %v3542 = vmul.f32 1.0, %v3541
        %v3543 = vrcp.pop %v3520
        %v3544 = vmul.f32 1.0, %v3543
        %v3545 = vmul.f32 %v3522, %v3248
        %v3546 = vmul.f32 %v3524, %v3251
        %v3547 = vmul.f32 %v3526, %v3256
        %v3548 = vmul.f32 %v3528, %v3259
        %v3549 = vmul.f32 %v3530, %v3264
        %v3550 = vmul.f32 %v3532, %v3267
        %v3551 = vmul.f32 %v3534, %v3272
        %v3552 = vmul.f32 %v3536, %v3275
        %v3553 = vmul.f32 %v3538, %v3280
        %v3554 = vmul.f32 %v3540, %v3283
        %v3555 = vmul.f32 %v3542, %v3288
        %v3556 = vmul.f32 %v3544, %v3291
        %v3557 = vadd.f32 %v2144, %v3545
        %v3558 = vadd.f32 %v2145, %v3546
        %v3559 = vadd.f32 %v2146, %v3547
        %v3560 = vadd.f32 %v2147, %v3548
        %v3561 = vadd.f32 %v2148, %v3549
        %v3562 = vadd.f32 %v2149, %v3550
        %v3563 = vadd.f32 %v2150, %v3551
        %v3564 = vadd.f32 %v2151, %v3552
        %v3565 = vadd.f32 %v2152, %v3553
        %v3566 = vadd.f32 %v2153, %v3554
        %v3567 = vadd.f32 %v2154, %v3555
        %v3568 = vadd.f32 %v2155, %v3556
        %3569 = vst [vmem:[#allocation2] sm:$0xff] %v3557
        %3570 = vst [vmem:[#allocation2 + $0x8] sm:$0xff] %v3558
        %3571 = vst [vmem:[#allocation2 + $0x10] sm:$0xff] %v3559
        %3572 = vst [vmem:[#allocation2 + $0x18] sm:$0xff] %v3560
        %3573 = vst [vmem:[#allocation2 + $0x20] sm:$0xff] %v3561
        %3574 = vst [vmem:[#allocation2 + $0x28] sm:$0xff] %v3562
        %3575 = vst [vmem:[#allocation2 + $0x30] sm:$0xff] %v3563
        %3576 = vst [vmem:[#allocation2 + $0x38] sm:$0xff] %v3564
        %3577 = vst [vmem:[#allocation2 + $0x40] sm:$0xff] %v3565
        %3578 = vst [vmem:[#allocation2 + $0x48] sm:$0xff] %v3566
        %3579 = vst [vmem:[#allocation2 + $0x50] sm:$0xff] %v3567
        %3580 = vst [vmem:[#allocation2 + $0x58] sm:$0xff] %v3568
        %p3581 = scmp.eq.s32.totalorder %s35, 1
        // Predicated region
        $region128: #{decision_rwkv_forward.1} parent=59 // pred_check
          %p3582 = pneg %p3581
        $region129: #{decision_rwkv_forward.1} parent=59 // pred_check_branch
          %3584 = sbr.rel (%p3582) target = $region131
        $region130: #{decision_rwkv_forward.1} parent=59 // pred_region
          $region132: #{decision_rwkv_forward.1} parent=130
            #allocation19 [shape = 's32[1]{0}', space=sflag, size = 0x4, scoped, tag = 'scoped memory for decision_rwkv_forward.1']
            #allocation21 [shape = 'u32[9]{0}', space=smem, size = 0x24, scoped, tag = 'DMA stride descriptor']
            %s3586 = sshll.u32 1, 14
            %s3587 = sxor.u32 4294967295, %s3586
            %s3589 = sld [smem:[#allocation0]]
            %s3590 = sadd.s32 2, %s3589
            %s3592 = sshll.u32 7, 26
            %s3593 = sxor.u32 4294967295, %s3592
            %s3594 = sand.u32 0, %s3593
            %s3595 = sshll.u32 %s3590, 26
            %s3596 = sor.u32 %s3594, %s3595
            %s3597 = sshll.u32 [#allocation5], 4
            %s3598 = int_to_ptr.vmem [resolvable:$true] %s3597
            %3601 = sst [smem:[#allocation21]] 256
            %s3602 = scalar_lea.smem [#allocation21], 1
            %3603 = sst [smem:[%s3602]] 256
            %s3604 = scalar_lea.smem [#allocation21], 2
            %3605 = sst [smem:[%s3604]] 2
            %s3606 = scalar_lea.smem [#allocation21], 3
            %3607 = sst [smem:[%s3606]] 64
            %s3608 = scalar_lea.smem [#allocation21], 4
            %3609 = sst [smem:[%s3608]] 128
            %s3610 = scalar_lea.smem [#allocation21], 5
            %3611 = sst [smem:[%s3610]] 2
            %s3612 = scalar_lea.smem [#allocation21], 6
            %3613 = sst [smem:[%s3612]] 128
            %s3614 = scalar_lea.smem [#allocation21], 7
            %3615 = sst [smem:[%s3614]] 64
            %s3616 = scalar_lea.smem [#allocation21], 8
            %3617 = sst [smem:[%s3616]] 4
            %3619 = dma.general %s11, 2048, %s3598, [#allocation19], [#allocation20], [#allocation21], %s3596, 0
            %s3620 = smul.u32 4, 16
            %s3621 = smul.u32 %s3620, 2
            %s3622 = sshll.u32 %s3621, 4
            %3623 = dma.done [#allocation19], %s3622
          %v3624 = vld [vmem:[#allocation2 + $0x8] sm:$0xff]
          %v3625 = vld [vmem:[#allocation2 + $0x20] sm:$0xff]
          %v3626 = vld [vmem:[#allocation2 + $0x38] sm:$0xff]
          %v3627 = vld [vmem:[#allocation2 + $0x50] sm:$0xff]
          %v3628 = vld [vmem:[%s9] sm:$0x1]
          %v3629 = vld [vmem:[#allocation16] sm:$0x1]
          %3630 = vadd.xlane.f32.xlu0 %v3624
          %v3631 = vpop.xlane.xlu0 %3630
          %3632 = vadd.xlane.f32.xlu0 %v3625
          %v3633 = vpop.xlane.xlu0 %3632
          %3634 = vadd.xlane.f32.xlu0 %v3626
          %v3635 = vpop.xlane.xlu0 %3634
          %3636 = vadd.xlane.f32.xlu0 %v3627
          %v3637 = vpop.xlane.xlu0 %3636
          %v3638 = vmul.f32 %v3631, %v748
          %v3639 = vmul.f32 %v3633, %v748
          %v3640 = vmul.f32 %v3635, %v748
          %v3641 = vmul.f32 %v3637, %v748
          %v3642 = vsub.f32 %v3624, %v3638
          %v3643 = vsub.f32 %v3625, %v3639
          %v3644 = vsub.f32 %v3626, %v3640
          %v3645 = vsub.f32 %v3627, %v3641
          %v3646 = vmul.f32 %v3642, %v3642
          %v3647 = vmul.f32 %v3643, %v3643
          %v3648 = vmul.f32 %v3644, %v3644
          %v3649 = vmul.f32 %v3645, %v3645
          %3650 = vadd.xlane.f32.xlu0 %v3646
          %v3651 = vpop.xlane.xlu0 %3650
          %3652 = vadd.xlane.f32.xlu0 %v3647
          %v3653 = vpop.xlane.xlu0 %3652
          %3654 = vadd.xlane.f32.xlu0 %v3648
          %v3655 = vpop.xlane.xlu0 %3654
          %3656 = vadd.xlane.f32.xlu0 %v3649
          %v3657 = vpop.xlane.xlu0 %3656
          %v3658 = vmul.f32 %v3651, %v748
          %v3659 = vmul.f32 %v3653, %v748
          %v3660 = vmul.f32 %v3655, %v748
          %v3661 = vmul.f32 %v3657, %v748
          %v3662 = vadd.f32 %v3658, 1e-05
          %v3663 = vadd.f32 %v3659, 1e-05
          %v3664 = vadd.f32 %v3660, 1e-05
          %v3665 = vadd.f32 %v3661, 1e-05
          %v3666 = vrsqrt.pop %v3662
          %v3667 = vrsqrt.pop %v3663
          %v3668 = vrsqrt.pop %v3664
          %v3669 = vrsqrt.pop %v3665
          %v3670 = vmul.f32 %v3642, %v3666
          %v3671 = vmul.f32 %v3643, %v3667
          %v3672 = vmul.f32 %v3644, %v3668
          %v3673 = vmul.f32 %v3645, %v3669
          %v3675 = vlaneseq
          %v3676 = vshrl.u32 %v3675, 7
          %v3677 = vsub.s32 0, %v3676
          %v3678 = vrot.slane %v3628, %v3677
          %v3680 = vmul.f32 %v3670, %v3678
          %v3681 = vmul.f32 %v3671, %v3678
          %v3682 = vmul.f32 %v3672, %v3678
          %v3683 = vmul.f32 %v3673, %v3678
          %v3685 = vlaneseq
          %v3686 = vshrl.u32 %v3685, 7
          %v3687 = vsub.s32 0, %v3686
          %v3688 = vrot.slane %v3629, %v3687
          %v3690 = vadd.f32 %v3680, %v3688
          %v3691 = vadd.f32 %v3681, %v3688
          %v3692 = vadd.f32 %v3682, %v3688
          %v3693 = vadd.f32 %v3683, %v3688
          %v3694 = vpack.c.bf16 %v3691, %v3690
          %v3695 = vpack.c.bf16 %v3693, %v3692
          %v3696 = vld [vmem:[#allocation5] sm:$0xff]
          %v3697 = vld [vmem:[#allocation5 + $0x8] sm:$0xff]
          %v3698 = vld [vmem:[#allocation5 + $0x10] sm:$0xff]
          %v3699 = vld [vmem:[#allocation5 + $0x18] sm:$0xff]
          %v3700 = vld [vmem:[#allocation5 + $0x20] sm:$0xff]
          %v3701 = vld [vmem:[#allocation5 + $0x28] sm:$0xff]
          %v3702 = vld [vmem:[#allocation5 + $0x30] sm:$0xff]
          %v3703 = vld [vmem:[#allocation5 + $0x38] sm:$0xff]
          %v3704 = vld [vmem:[#allocation5 + $0x40] sm:$0xff]
          %v3705 = vld [vmem:[#allocation5 + $0x48] sm:$0xff]
          %v3706 = vld [vmem:[#allocation5 + $0x50] sm:$0xff]
          %v3707 = vld [vmem:[#allocation5 + $0x58] sm:$0xff]
          %v3708 = vld [vmem:[#allocation5 + $0x60] sm:$0xff]
          %v3709 = vld [vmem:[#allocation5 + $0x68] sm:$0xff]
          %v3710 = vld [vmem:[#allocation5 + $0x70] sm:$0xff]
          %v3711 = vld [vmem:[#allocation5 + $0x78] sm:$0xff]
          %3712 = vmatprep.subr.bf16.mxu0 %v3697
          %3713 = vmatpush1.bf16.msra.mxu0 %v3696
          %3714 = vmatprep.subr.bf16.mxu0 %v3699
          %3715 = vmatpush1.bf16.msra.mxu0 %v3698
          %3716 = vmatprep.subr.bf16.mxu0 %v3701
          %3717 = vmatpush1.bf16.msra.mxu0 %v3700
          %3718 = vmatprep.subr.bf16.mxu0 %v3703
          %3719 = vmatpush1.bf16.msra.mxu0 %v3702
          %3720 = vmatprep.subr.bf16.mxu0 %v3705
          %3721 = vmatpush1.bf16.msra.mxu0 %v3704
          %3722 = vmatprep.subr.bf16.mxu0 %v3707
          %3723 = vmatpush1.bf16.msra.mxu0 %v3706
          %3724 = vmatprep.subr.bf16.mxu0 %v3709
          %3725 = vmatpush1.bf16.msra.mxu0 %v3708
          %3726 = vmatprep.subr.bf16.mxu0 %v3711
          %3727 = vmatpush1.bf16.msra.mxu0 %v3710
          %3728 = vmatprep.subr.bf16.mxu0 0
          %3729 = vmatpush1.bf16.msra.mxu0 0
          %3730 = vmatprep.subr.bf16.mxu0 0
          %3731 = vmatpush1.bf16.msra.mxu0 0
          %3732 = vmatprep.subr.bf16.mxu0 0
          %3733 = vmatpush1.bf16.msra.mxu0 0
          %3734 = vmatprep.subr.bf16.mxu0 0
          %3735 = vmatpush1.bf16.msra.mxu0 0
          %3736 = vmatprep.subr.bf16.mxu0 0
          %3737 = vmatpush1.bf16.msra.mxu0 0
          %3738 = vmatprep.subr.bf16.mxu0 0
          %3739 = vmatpush1.bf16.msra.mxu0 0
          %3740 = vmatprep.subr.bf16.mxu0 0
          %3741 = vmatpush1.bf16.msra.mxu0 0
          %3742 = vmatprep.subr.bf16.mxu0 0
          %3743 = vmatpush1.bf16.msra.mxu0 0
          %3744 = vmatprep.mubr.bf16.mxu0 0
          %3745 = vmatmul.mubr.bf16.gmra.mrb[0].mxu0 %v3694
          %v3746 = vpop.f32.mrb[0].mxu0
          %v3747 = vadd.f32 0.0, %v3746
          %v3748 = vpop.f32.mrb[0].mxu0
          %v3749 = vadd.f32 0.0, %v3748
          %v3750 = vpop.f32.mrb[0].mxu0
          %v3751 = vadd.f32 0.0, %v3750
          %v3752 = vpop.f32.mrb[0].mxu0
          %v3753 = vadd.f32 0.0, %v3752
          %3754 = vmatprep.mubr.bf16.mxu0 0
          %3755 = vmatmul.mubr.bf16.gmra.mrb[0].mxu0 %v3695
          %v3756 = vpop.f32.mrb[0].mxu0
          %v3757 = vadd.f32 0.0, %v3756
          %v3758 = vpop.f32.mrb[0].mxu0
          %v3759 = vadd.f32 0.0, %v3758
          %v3760 = vpop.f32.mrb[0].mxu0
          %v3761 = vadd.f32 0.0, %v3760
          %v3762 = vpop.f32.mrb[0].mxu0
          %v3763 = vadd.f32 0.0, %v3762
          %3764 = vdwg.mxu0
          %3765 = vst [vmem:[%s12] sm:$0xff] %v3747
          %3766 = vst [vmem:[%s12 + $0x8] sm:$0xff] %v3749
          %3767 = vst [vmem:[%s12 + $0x10] sm:$0xff] %v3751
          %3768 = vst [vmem:[%s12 + $0x18] sm:$0xff] %v3753
          %3769 = vst [vmem:[%s12 + $0x20] sm:$0xff] %v3757
          %3770 = vst [vmem:[%s12 + $0x28] sm:$0xff] %v3759
          %3771 = vst [vmem:[%s12 + $0x30] sm:$0xff] %v3761
          %3772 = vst [vmem:[%s12 + $0x38] sm:$0xff] %v3763
        $region131: #{decision_rwkv_forward.1} parent=59 // pred_fallthru
          _
        // Predicated region
        $region133: #{decision_rwkv_forward.1} parent=59 // pred_check
          %p3773 = pneg %p298
        $region134: #{decision_rwkv_forward.1} parent=59 // pred_check_branch
          %3775 = sbr.rel (%p3773) target = $region136
        $region135: #{decision_rwkv_forward.1} parent=59 // pred_region
          _
        $region136: #{decision_rwkv_forward.1} parent=59 // pred_fallthru
          _
        // Predicated region
        $region137: #{decision_rwkv_forward.1} parent=59 // pred_check
          %p3776 = pneg %p298
        $region138: #{decision_rwkv_forward.1} parent=59 // pred_check_branch
          %3778 = sbr.rel (%p3776) target = $region140
        $region139: #{decision_rwkv_forward.1} parent=59 // pred_region
          _
        $region140: #{decision_rwkv_forward.1} parent=59 // pred_fallthru
          _
      $region60: #{decision_rwkv_forward.1} parent=5 // pred_fallthru
        _
      %p3779 = scmp.le.s32.totalorder 2, %s30
      // Predicated region
      $region141: #{decision_rwkv_forward.1} parent=5 // pred_check
        %p3780 = pneg %p3779
      $region142: #{decision_rwkv_forward.1} parent=5 // pred_check_branch
        %3782 = sbr.rel (%p3780) target = $region144
      $region143: #{decision_rwkv_forward.1} parent=5 // pred_region
        %s3783 = ssub.s32 %s30, 2
      $region144: #{decision_rwkv_forward.1} parent=5 // pred_fallthru
        _
    $region6: #{decision_rwkv_forward.1} parent=1 // loop_footer
      %s34 = sadd.s32 1, %s30
    $region7: #{decision_rwkv_forward.1} parent=1 // loop_footer_branch
      %29 = sbr.rel target = $region3
    $region8: #{decision_rwkv_forward.1} parent=1 // loop_exit
      _
    %3784 = vsyncpa [#allocation7], 1
    %s3785 = scalar_lea.sflag [#allocation7], 1
    %3786 = vsyncpa %s3785, 1
    %3787 = vsyncpa [#allocation9], 1
    %s3788 = scalar_lea.sflag [#allocation9], 1
    %3789 = vsyncpa %s3788, 1
    %3790 = vsyncpa [#allocation12], 1
    %s3791 = scalar_lea.sflag [#allocation12], 1
    %3792 = vsyncpa %s3791, 1
    %3793 = vsyncpa [#allocation15], 1
    %s3794 = scalar_lea.sflag [#allocation15], 1
    %3795 = vsyncpa %s3794, 1

</llo_original>
